<compile_context>
chip_gen: v5e
topology: v5e:2x2
jax: 0.10.0
libtpu: 0.0.40
codegen_flags: <defaults>
</compile_context>

<pallas_src>
import functools

import jax
import jax.numpy as jnp
from jax import lax
from jax.experimental import pallas as pl
from jax.experimental.pallas import tpu as pltpu

N_CLASSES = 20
POOL = 7
SPATIAL_SCALE = 1.0 / 16.0
BN_EPS = 1e-5                        # nn.BatchNorm2d default eps
QUANTIZE_FC_WEIGHTS = True           # int8 streaming for fc6/fc7 (bf16 in VMEM)


def _tpu_flags():
    """(is_tpu, is_v7x, vmem_limit_bytes) with safe fall-backs off-TPU."""
    is_tpu, is_v7x = False, False
    vmem = 48 * 1024 * 1024                       # conservative (v7x: 64 MiB phys)
    try:
        dev = jax.devices()[0]
        is_tpu = dev.platform == "tpu"
        kind = dev.device_kind.lower()
        is_v7x = is_tpu and ("v7" in kind or "tpu7" in kind)
        if is_tpu and not is_v7x:
            vmem = 100 * 1024 * 1024              # v4/v5e/v6e: 128 MiB physical
    except Exception:
        pass
    try:                                          # prefer the real number if available
        cap = int(pltpu.get_tpu_info().vmem_capacity_bytes)
        if cap > 0:
            vmem = cap * 3 // 4
    except Exception:
        pass
    return is_tpu, is_v7x, vmem


_IS_TPU, _IS_V7X, VMEM_LIMIT = _tpu_flags()


def _largest_divisor(n, cap):
    """Largest divisor of n that is <= cap, preferring multiples of 128."""
    if n <= cap:
        return n
    best = 0
    for t in range(128, cap + 1, 128):
        if n % t == 0:
            best = t
    if best:
        return best
    for t in range(cap, 0, -1):
        if n % t == 0:
            return t
    return 1


# ----------------------------------------------------------------------------
# Conv3x3 (same padding) + folded BatchNorm(eval) + ReLU (+ optional fused
# 2x2/stride-2 max pool).  "Same" zero padding is realized with per-tap
# boundary masks; taps come from pltpu.roll on the flattened (H*W, Cin) map.
# For the Cin=3 first layer the wrapper supplies im2col patches (n_taps == 1).
# ----------------------------------------------------------------------------
def _conv_kernel(x_ref, w_ref, scale_ref, shift_ref, o_ref, *, pool, n_taps):
    # x_ref: (1, H, W, Cin) bf16; w_ref: (n_taps, Cin, Ct) bf16, taps (dy,dx)
    # row-major; scale/shift: (1, Ct) f32 (conv bias + eval BN folded);
    # o_ref: (1, H', W', Ct) bf16.
    _, H, W, Cin = x_ref.shape
    Ct = o_ref.shape[-1]
    HW = H * W

    if n_taps == 1:
        # im2col path: one big matmul (K = 9 * 3 = 27 for conv1_1).
        x16 = x_ref[0].reshape(HW, Cin)
        acc = jnp.dot(x16, w_ref[0], preferred_element_type=jnp.float32)
    else:
        x16 = x_ref[0].reshape(HW, Cin)                    # bf16, contiguous flatten
        x = x16.astype(jnp.float32)                        # roll/mask in f32
        flat = lax.broadcasted_iota(jnp.int32, (HW, 1), 0)
        row = flat // W
        col = flat % W
        acc = jnp.zeros((HW, Ct), jnp.float32)
        for dy in range(3):
            for dx in range(3):
                tap = w_ref[dy * 3 + dx]                   # (Cin, Ct) bf16
                if dy == 1 and dx == 1:
                    xm16 = x16
                else:
                    # output o = h*W + w reads input flat index
                    # o + (dy-1)*W + (dx-1); pltpu.roll needs shift >= 0, and a
                    # circular roll by (shift mod HW) is identical -- all
                    # wrapped rows land in the masked boundary region.
                    shift = ((1 - dy) * W + (1 - dx)) % HW
                    xs = pltpu.roll(x, shift=shift, axis=0)
                    conds = []
                    if dy == 0:
                        conds.append(row >= 1)
                    elif dy == 2:
                        conds.append(row <= H - 2)
                    if dx == 0:
                        conds.append(col >= 1)
                    elif dx == 2:
                        conds.append(col <= W - 2)
                    valid = conds[0]
                    for c in conds[1:]:
                        valid = jnp.logical_and(valid, c)
                    xm16 = jnp.where(valid, xs, 0.0).astype(jnp.bfloat16)
                acc = acc + jnp.dot(xm16, tap, preferred_element_type=jnp.float32)

    y = acc * scale_ref[...] + shift_ref[...]
    y = jnp.maximum(y, 0.0)                                # ReLU (f32 epilogue)
    if pool:                                               # fused MaxPool2d(2, 2)
        Ho, Wo = H // 2, W // 2                            # floor, like PyTorch
        y = y.reshape(H, W, Ct)[:Ho * 2, :Wo * 2, :]
        y = jnp.max(y.reshape(Ho * 2, Wo, 2, Ct), axis=2)
        y = jnp.max(y.reshape(Ho, 2, Wo, Ct), axis=1)
        o_ref[...] = y.reshape(1, Ho, Wo, Ct).astype(o_ref.dtype)
    else:
        o_ref[...] = y.reshape(1, H, W, Ct).astype(o_ref.dtype)


@functools.lru_cache(maxsize=None)
def _conv_call(N, H, W, Cin, Cout, pool, n_taps):
    # Single-TC chips (v5e/v6e): tc = Cout so the roll/mask work is not
    # duplicated.  v7x: keep 2 Cout tiles on the "parallel" axis so both
    # TensorCores stay busy at B = 1.
    if _IS_V7X and Cout >= 256:
        tc = Cout // 2
    else:
        tc = Cout
    Ho, Wo = (H // 2, W // 2) if pool else (H, W)
    kern = functools.partial(_conv_kernel, pool=pool, n_taps=n_taps)
    fn = pl.pallas_call(
        kern,
        out_shape=jax.ShapeDtypeStruct((N, Ho, Wo, Cout), jnp.bfloat16),
        grid_spec=pltpu.PrefetchScalarGridSpec(
            num_scalar_prefetch=0,
            grid=(N, Cout // tc),
            in_specs=[
                pl.BlockSpec((1, H, W, Cin), lambda n, c: (n, 0, 0, 0)),
                pl.BlockSpec((n_taps, Cin, tc), lambda n, c: (0, 0, c)),
                pl.BlockSpec((1, tc), lambda n, c: (0, c)),
                pl.BlockSpec((1, tc), lambda n, c: (0, c)),
            ],
            out_specs=pl.BlockSpec((1, Ho, Wo, tc), lambda n, c: (n, 0, 0, c)),
        ),
        compiler_params=pltpu.CompilerParams(
            dimension_semantics=("parallel", "parallel"),
            vmem_limit_bytes=VMEM_LIMIT),
    )
    return jax.jit(fn)


def conv3x3_bn_relu(x_nhwc, w, conv_b, gamma, beta, mean, var,
                    pool=False, im2col=False):
    # Fold conv bias + eval-mode BatchNorm into per-channel scale/shift (f32).
    scale = gamma / jnp.sqrt(var + BN_EPS)
    shift = (conv_b - mean) * scale + beta
    N, H, W, Cin = x_nhwc.shape
    Cout = w.shape[-1]
    if im2col:
        # First layer: build (N, H, W, 9*Cin) patches in the wrapper (layout
        # plumbing in XLA) so the kernel is one dense K=27 matmul.
        xp = jnp.pad(x_nhwc, ((0, 0), (1, 1), (1, 1), (0, 0)))
        x_in = jnp.concatenate(
            [xp[:, dy:dy + H, dx:dx + W, :] for dy in range(3) for dx in range(3)],
            axis=-1)
        w_in = w.reshape(1, 9 * Cin, Cout).astype(jnp.bfloat16)
        cin_eff, n_taps = 9 * Cin, 1
    else:
        x_in = x_nhwc
        w_in = w.reshape(9, Cin, Cout).astype(jnp.bfloat16)    # taps (dy*3+dx, .)
        cin_eff, n_taps = Cin, 9
    return _conv_call(N, H, W, cin_eff, Cout, pool, n_taps)(
        x_in.astype(jnp.bfloat16), w_in,
        scale.reshape(1, Cout).astype(jnp.float32),
        shift.reshape(1, Cout).astype(jnp.float32))


# ----------------------------------------------------------------------------
# RoIPool(7, 7, 1/16): scalar-prefetched integer roi params, per-bin masked max
# over a small dynamic window (static size cap), single lane-dense writeback.
# ----------------------------------------------------------------------------
def _roi_pool_kernel(roi_ref, feat_ref, o_ref, out_sc):
    # roi_ref (SMEM int32, (R, 5)): [batch_idx, start_w, start_h, width, height]
    # feat_ref: (1, H, W, C) bf16 feature block of the roi's batch image
    # o_ref:    (1, 49, C) bf16;  out_sc: VMEM (49, C) f32 staging buffer
    r = pl.program_id(0)
    _, H, W, C = feat_ref.shape
    # Static cap on a single bin's extent (valid for rois inside the image,
    # i.e. feature-space height/width <= H+1 / W+1 after rounding).
    BH = min(H, -(-(H + 1) // POOL) + 2)
    BW = min(W, -(-(W + 1) // POOL) + 2)

    start_w = roi_ref[r, 1]
    start_h = roi_ref[r, 2]
    bin_w = roi_ref[r, 3].astype(jnp.float32) / POOL
    bin_h = roi_ref[r, 4].astype(jnp.float32) / POOL
    neg = jnp.float32(-3.0e38)

    for ph in range(POOL):
        hs = jnp.clip(jnp.floor(ph * bin_h).astype(jnp.int32) + start_h, 0, H)
        he = jnp.clip(jnp.ceil((ph + 1) * bin_h).astype(jnp.int32) + start_h, 0, H)
        hs_c = jnp.clip(hs, 0, H - BH)                     # window covers [hs, he)
        for pw in range(POOL):
            ws = jnp.clip(jnp.floor(pw * bin_w).astype(jnp.int32) + start_w, 0, W)
            we = jnp.clip(jnp.ceil((pw + 1) * bin_w).astype(jnp.int32) + start_w, 0, W)
            ws_c = jnp.clip(ws, 0, W - BW)
            win = feat_ref[0, pl.ds(hs_c, BH), pl.ds(ws_c, BW), :].astype(jnp.float32)
            rid = hs_c + lax.broadcasted_iota(jnp.int32, (BH, BW, 1), 0)
            cid = ws_c + lax.broadcasted_iota(jnp.int32, (BH, BW, 1), 1)
            mask = (rid >= hs) & (rid < he) & (cid >= ws) & (cid < we)
            masked = jnp.where(mask, win, neg)
            val = jnp.max(jnp.max(masked, axis=1), axis=0, keepdims=True)   # (1, C)
            is_empty = jnp.logical_or(he <= hs, we <= ws)
            idx = ph * POOL + pw
            out_sc[idx:idx + 1, :] = jnp.where(is_empty, jnp.float32(0.0), val)
    o_ref[0] = out_sc[...].astype(o_ref.dtype)             # one lane-dense store


@functools.lru_cache(maxsize=None)
def _roi_pool_call(R, N, H, W, C):
    fn = pl.pallas_call(
        _roi_pool_kernel,
        out_shape=jax.ShapeDtypeStruct((R, POOL * POOL, C), jnp.bfloat16),
        grid_spec=pltpu.PrefetchScalarGridSpec(
            num_scalar_prefetch=1,
            grid=(R,),
            in_specs=[pl.BlockSpec((1, H, W, C),
                                   lambda r, roi: (roi[r, 0], 0, 0, 0))],
            out_specs=pl.BlockSpec((1, POOL * POOL, C),
                                   lambda r, roi: (r, 0, 0)),
            scratch_shapes=[pltpu.VMEM((POOL * POOL, C), jnp.float32)],
        ),
        compiler_params=pltpu.CompilerParams(
            dimension_semantics=("parallel",),
            vmem_limit_bytes=VMEM_LIMIT),
    )
    return jax.jit(fn)


def roi_pool(feat_nhwc, rois):
    # rois: (R, 5) float32 [batch_idx, x1, y1, x2, y2] in image coordinates.
    N, H, W, C = feat_nhwc.shape
    R = rois.shape[0]
    batch = rois[:, 0].astype(jnp.int32)
    start_w = jnp.floor(rois[:, 1] * SPATIAL_SCALE + 0.5).astype(jnp.int32)
    start_h = jnp.floor(rois[:, 2] * SPATIAL_SCALE + 0.5).astype(jnp.int32)
    end_w = jnp.floor(rois[:, 3] * SPATIAL_SCALE + 0.5).astype(jnp.int32)
    end_h = jnp.floor(rois[:, 4] * SPATIAL_SCALE + 0.5).astype(jnp.int32)
    width = jnp.maximum(end_w - start_w + 1, 1)
    height = jnp.maximum(end_h - start_h + 1, 1)
    roi_params = jnp.stack([batch, start_w, start_h, width, height], axis=1)
    return _roi_pool_call(R, N, H, W, C)(roi_params, feat_nhwc)   # (R, 49, C)


# ----------------------------------------------------------------------------
# FC layer: int8/bf16-weight tiled matmul (dequant to bf16 in VMEM), f32
# accumulation, epilogue = per-column scale + bias, optional ReLU, optional
# fused softmax on the first `n_softmax` columns.
# ----------------------------------------------------------------------------
def _fc_kernel(x_ref, w_ref, scale_ref, b_ref, o_ref, acc_ref, *, relu, n_softmax):
    k = pl.program_id(1)

    @pl.when(k == 0)
    def _():
        acc_ref[...] = jnp.zeros_like(acc_ref)

    # int8 or bf16 weights promoted to bf16 in VMEM -> MXU always runs bf16.
    w16 = w_ref[...].astype(jnp.bfloat16)
    acc_ref[...] += jnp.dot(x_ref[...], w16, preferred_element_type=jnp.float32)

    @pl.when(k == pl.num_programs(1) - 1)
    def _():
        y = acc_ref[...] * scale_ref[...] + b_ref[...]
        if relu:
            y = jnp.maximum(y, 0.0)
        if n_softmax:                    # softmax over the first n_softmax cols
            col = lax.broadcasted_iota(jnp.int32, y.shape, 1)
            is_cls = col < n_softmax
            ymask = jnp.where(is_cls, y, jnp.float32(-1e30))
            m = jnp.max(ymask, axis=1, keepdims=True)
            e = jnp.where(is_cls, jnp.exp(ymask - m), 0.0)
            y = jnp.where(is_cls, e / jnp.sum(e, axis=1, keepdims=True), y)
        o_ref[...] = y.astype(o_ref.dtype)


@functools.lru_cache(maxsize=None)
def _fc_call(M, K, N, w_bytes, relu, n_softmax, out_dtype):
    # j (output) tile: keep >=2 tiles on the "parallel" axis for wide layers so
    # v7x megacore shards the weight streaming.  k tile: largest divisor of K
    # whose streamed (tk, tn) weight block stays within the per-buffer budget
    # (double-buffered by the pipeline), sized from the generation's VMEM.
    tn = 2048 if (n_softmax == 0 and N % 2048 == 0 and N >= 4096) else N
    budget = (8 if VMEM_LIMIT < 64 * 1024 * 1024 else 16) * 1024 * 1024
    tk = _largest_divisor(K, max(128, budget // (tn * w_bytes)))
    kern = functools.partial(_fc_kernel, relu=relu, n_softmax=n_softmax)
    fn = pl.pallas_call(
        kern,
        out_shape=jax.ShapeDtypeStruct((M, N), out_dtype),
        grid_spec=pltpu.PrefetchScalarGridSpec(
            num_scalar_prefetch=0,
            grid=(N // tn, K // tk),
            in_specs=[
                pl.BlockSpec((M, tk), lambda j, k: (0, k)),
                pl.BlockSpec((tk, tn), lambda j, k: (k, j)),
                pl.BlockSpec((1, tn), lambda j, k: (0, j)),
                pl.BlockSpec((1, tn), lambda j, k: (0, j)),
            ],
            out_specs=pl.BlockSpec((M, tn), lambda j, k: (0, j)),
            scratch_shapes=[pltpu.VMEM((M, tn), jnp.float32)],
        ),
        compiler_params=pltpu.CompilerParams(
            dimension_semantics=("parallel", "arbitrary"),
            vmem_limit_bytes=VMEM_LIMIT),
    )
    return jax.jit(fn)


def fc(x, layer, relu=True, n_softmax=0, out_dtype=jnp.float32):
    w, b, scale = layer["w"], layer["b"], layer["scale"]
    M, K = x.shape
    N = w.shape[1]
    return _fc_call(M, K, N, jnp.dtype(w.dtype).itemsize, relu, n_softmax,
                    out_dtype)(
        x.astype(jnp.bfloat16), w, scale.astype(jnp.float32),
        b.reshape(1, N).astype(jnp.float32))


# ----------------------------------------------------------------------------
# VGG16(bn=True) feature extractor + RGBD branch + full Network forward
# ----------------------------------------------------------------------------
VGG_CFG = [
    [(3, 64), (64, 64)],                       # conv1 (+ fused pool)
    [(64, 128), (128, 128)],                   # conv2 (+ fused pool)
    [(128, 256), (256, 256), (256, 256)],      # conv3 (+ fused pool)
    [(256, 512), (512, 512), (512, 512)],      # conv4 (+ fused pool)
    [(512, 512), (512, 512), (512, 512)],      # conv5 (no pool) -> /16
]


def init_vgg_params(key):
    params = []
    for block in VGG_CFG:
        bparams = []
        for cin, cout in block:
            key, k1, k2, k3, k4, k5 = jax.random.split(key, 6)
            w = (jax.random.normal(k1, (3, 3, cin, cout), jnp.float32)
                 * 0.05).astype(jnp.bfloat16)
            b = jax.random.normal(k2, (cout,), jnp.float32) * 0.05
            gamma = 1.0 + 0.1 * jax.random.normal(k3, (cout,), jnp.float32)
            beta = 0.1 * jax.random.normal(k4, (cout,), jnp.float32)
            mean = 0.1 * jax.random.normal(k5, (cout,), jnp.float32)
            var = jnp.ones((cout,), jnp.float32)
            bparams.append((w, b, gamma, beta, mean, var))
        params.append(bparams)
    return params


def vgg16_features(x_nchw, vgg_params):
    x = jnp.transpose(x_nchw, (0, 2, 3, 1)).astype(jnp.bfloat16)   # NCHW -> NHWC
    for bi, block in enumerate(vgg_params):
        n_layers = len(block)
        for li, (w, b, g, be, m, v) in enumerate(block):
            pool = (bi < 4) and (li == n_layers - 1)
            im2col = (bi == 0) and (li == 0)
            x = conv3x3_bn_relu(x, w, b, g, be, m, v, pool=pool, im2col=im2col)
    return x                                    # (N, H/16, W/16, 512) bf16


def rgbd_network(im_nchw, rois, vgg_params):
    feat = vgg16_features(im_nchw, vgg_params)
    pooled = roi_pool(feat, rois)               # (R, 49, 512), hw-major bins
    R, HW, C = pooled.shape
    # match torch's NCHW .view(R, -1): order (c, h, w)
    return jnp.transpose(pooled, (0, 2, 1)).reshape(R, C * HW)


def network_forward(rgb_data, depth_data, rois, params):
    rgb_feature = rgbd_network(rgb_data, rois, params["rgb_vgg"])
    depth_feature = rgbd_network(depth_data, rois, params["depth_vgg"])
    x = jnp.concatenate([rgb_feature, depth_feature], axis=1)      # (R, 50176)
    x = fc(x, params["fc6"], relu=True, out_dtype=jnp.bfloat16)
    # F.dropout(training=False) -> identity
    x = fc(x, params["fc7"], relu=True, out_dtype=jnp.bfloat16)
    # merged score_fc + bbox_fc head; softmax fused on the first 20 columns
    heads = fc(x, params["heads"], relu=False, n_softmax=N_CLASSES,
               out_dtype=jnp.float32)
    cls_prob = heads[:, :N_CLASSES]
    bbox_pred = heads[:, N_CLASSES:]
    return cls_prob, bbox_pred, rois


def init_fc(key, d_in, d_out, std=0.01, quantize=False):
    kw, kb = jax.random.split(key)
    # Stored as (d_in, d_out) (nn.Linear weight transposed).
    w = jax.random.normal(kw, (d_in, d_out), jnp.float32) * std
    b = jax.random.normal(kb, (d_out,), jnp.float32) * 0.01
    if quantize:
        # Per-output-column symmetric int8; dequant scale applied in epilogue.
        s = jnp.maximum(jnp.max(jnp.abs(w), axis=0, keepdims=True), 1e-12) / 127.0
        wq = jnp.clip(jnp.round(w / s), -127, 127).astype(jnp.int8)
        return {"w": wq, "b": b, "scale": s}
    return {"w": w.astype(jnp.bfloat16), "b": b,
            "scale": jnp.ones((1, d_out), jnp.float32)}


if __name__ == "__main__":
    key = jax.random.PRNGKey(0)
    key, k_rgb, k_depth, k_roi1, k_roi2 = jax.random.split(key, 5)

    B, H, W = 1, 64, 64          # small image; features are (1, 4, 4, 512)
    R = 8                        # number of RoIs

    rgb_data = jax.random.normal(k_rgb, (B, 3, H, W), jnp.float32)
    depth_data = jax.random.normal(k_depth, (B, 3, H, W), jnp.float32)

    # rois: (R, 5) = [batch_idx, x1, y1, x2, y2] in image coordinates
    xy1 = jax.random.uniform(k_roi1, (R, 2), minval=0.0, maxval=H / 2.0)
    wh = jax.random.uniform(k_roi2, (R, 2), minval=8.0, maxval=H / 2.0)
    rois = jnp.concatenate(
        [jnp.zeros((R, 1), jnp.float32), xy1,
         jnp.minimum(xy1 + wh, float(H - 1))], axis=1).astype(jnp.float32)

    key, kv1, kv2, kf6, kf7, ks, kb = jax.random.split(key, 7)
    fc6_in = 512 * POOL * POOL * 2               # 50176
    params = {
        "rgb_vgg": init_vgg_params(kv1),
        "depth_vgg": init_vgg_params(kv2),
        "fc6": init_fc(kf6, fc6_in, 4096, quantize=QUANTIZE_FC_WEIGHTS),
        "fc7": init_fc(kf7, 4096, 4096, quantize=QUANTIZE_FC_WEIGHTS),
    }
    score = init_fc(ks, 4096, N_CLASSES, quantize=False)
    bbox = init_fc(kb, 4096, N_CLASSES * 7, quantize=False)
    params["heads"] = {
        "w": jnp.concatenate([score["w"], bbox["w"]], axis=1),       # (4096, 160)
        "b": jnp.concatenate([score["b"], bbox["b"]]),
        "scale": jnp.concatenate([score["scale"], bbox["scale"]], axis=1),
    }

    forward = jax.jit(network_forward)
    cls_prob, bbox_pred, rois_out = forward(rgb_data, depth_data, rois, params)
    jax.block_until_ready((cls_prob, bbox_pred, rois_out))

    assert cls_prob.shape == (R, N_CLASSES)
    assert bbox_pred.shape == (R, N_CLASSES * 7)
    assert rois_out.shape == (R, 5)
    assert bool(jnp.all(jnp.isfinite(cls_prob)))
    assert bool(jnp.all(jnp.isfinite(bbox_pred)))
    # softmax rows sum to 1
    assert bool(jnp.all(jnp.abs(jnp.sum(cls_prob, axis=1) - 1.0) < 1e-4))

    print("KERNEL_OK")
</pallas_src>

<mosaic_0001>
module attributes {stable_mosaic.version = 11 : i64} {
  func.func @_conv_kernel(%arg0: i32, %arg1: i32, %arg2: memref<1x64x64x27xbf16, #tpu.memory_space<vmem>>, %arg3: memref<1x27x64xbf16, #tpu.memory_space<vmem>>, %arg4: memref<1x64xf32, #tpu.memory_space<vmem>>, %arg5: memref<1x64xf32, #tpu.memory_space<vmem>>, %arg6: memref<1x64x64x64xbf16, #tpu.memory_space<vmem>>) attributes {dimension_semantics = [#tpu.dimension_semantics<parallel>, #tpu.dimension_semantics<parallel>], iteration_bounds = array<i64: 1, 1>, scalar_prefetch = 0 : i64, scratch_operands = 0 : i64, tpu.core_type = #tpu.core_type<tc>, window_params = [{transform_indices = @transform_0, window_bounds = array<i64: 1, 64, 64, 27>}, {transform_indices = @transform_1, window_bounds = array<i64: 1, 27, 64>}, {transform_indices = @transform_2, window_bounds = array<i64: 1, 64>}, {transform_indices = @transform_3, window_bounds = array<i64: 1, 64>}, {transform_indices = @transform_4, window_bounds = array<i64: 1, 64, 64, 64>}]} {
    %c0 = arith.constant 0 : index
    %c0_0 = arith.constant 0 : index
    %c0_1 = arith.constant 0 : index
    %c0_2 = arith.constant 0 : index
    %0 = vector.load %arg2[%c0, %c0_0, %c0_1, %c0_2] : memref<1x64x64x27xbf16, #tpu.memory_space<vmem>>, vector<1x64x64x27xbf16>
    %1 = vector.shape_cast %0 : vector<1x64x64x27xbf16> to vector<64x64x27xbf16>
    %2 = vector.shape_cast %1 : vector<64x64x27xbf16> to vector<4096x27xbf16>
    %c0_3 = arith.constant 0 : index
    %c0_4 = arith.constant 0 : index
    %c0_5 = arith.constant 0 : index
    %3 = vector.load %arg3[%c0_3, %c0_4, %c0_5] : memref<1x27x64xbf16, #tpu.memory_space<vmem>>, vector<1x27x64xbf16>
    %4 = vector.shape_cast %3 : vector<1x27x64xbf16> to vector<27x64xbf16>
    %cst = arith.constant dense<0.000000e+00> : vector<4096x64xf32>
    %5 = tpu.matmul %2, %4, %cst {dimension_numbers = #tpu.dot_dimension_numbers<[1], [0], [0], [1], [0, 0, 1, 1], [], []>} : vector<4096x27xbf16>, vector<27x64xbf16>, vector<4096x64xf32> -> vector<4096x64xf32>
    %c0_6 = arith.constant 0 : index
    %c0_7 = arith.constant 0 : index
    %6 = vector.load %arg4[%c0_6, %c0_7] : memref<1x64xf32, #tpu.memory_space<vmem>>, vector<1x64xf32>
    %7 = vector.broadcast %6 : vector<1x64xf32> to vector<4096x64xf32>
    %8 = arith.mulf %5, %7 : vector<4096x64xf32>
    %c0_8 = arith.constant 0 : index
    %c0_9 = arith.constant 0 : index
    %9 = vector.load %arg5[%c0_8, %c0_9] : memref<1x64xf32, #tpu.memory_space<vmem>>, vector<1x64xf32>
    %10 = vector.broadcast %9 : vector<1x64xf32> to vector<4096x64xf32>
    %11 = arith.addf %8, %10 : vector<4096x64xf32>
    %cst_10 = arith.constant 0.000000e+00 : f32
    %12 = vector.broadcast %cst_10 : f32 to vector<4096x64xf32>
    %13 = arith.maximumf %11, %12 : vector<4096x64xf32>
    %14 = vector.shape_cast %13 : vector<4096x64xf32> to vector<1x64x64x64xf32>
    %15 = arith.truncf %14 : vector<1x64x64x64xf32> to vector<1x64x64x64xbf16>
    %c0_11 = arith.constant 0 : index
    %c0_12 = arith.constant 0 : index
    %c0_13 = arith.constant 0 : index
    %c0_14 = arith.constant 0 : index
    %16 = vector.load %arg6[%c0_11, %c0_12, %c0_13, %c0_14] : memref<1x64x64x64xbf16, #tpu.memory_space<vmem>>, vector<1x64x64x64xbf16>
    tpu.vector_store %arg6[%c0_11, %c0_12, %c0_13, %c0_14], %15 {strides = array<i32>} : memref<1x64x64x64xbf16, #tpu.memory_space<vmem>>, vector<1x64x64x64xbf16>,
    return
  }
  func.func @transform_0(%arg0: i32, %arg1: i32) -> (i32, i32, i32, i32) {
    %c0_i32 = arith.constant 0 : i32
    %c0_i32_0 = arith.constant 0 : i32
    %c0_i32_1 = arith.constant 0 : i32
    %c0_i32_2 = arith.constant 0 : i32
    return %arg0, %c0_i32, %c0_i32_0, %c0_i32_1 : i32, i32, i32, i32
  }
  func.func @transform_1(%arg0: i32, %arg1: i32) -> (i32, i32, i32) {
    %c0_i32 = arith.constant 0 : i32
    %c0_i32_0 = arith.constant 0 : i32
    %c0_i32_1 = arith.constant 0 : i32
    return %c0_i32, %c0_i32_0, %arg1 : i32, i32, i32
  }
  func.func @transform_2(%arg0: i32, %arg1: i32) -> (i32, i32) {
    %c0_i32 = arith.constant 0 : i32
    %c0_i32_0 = arith.constant 0 : i32
    return %c0_i32, %arg1 : i32, i32
  }
  func.func @transform_3(%arg0: i32, %arg1: i32) -> (i32, i32) {
    %c0_i32 = arith.constant 0 : i32
    %c0_i32_0 = arith.constant 0 : i32
    return %c0_i32, %arg1 : i32, i32
  }
  func.func @transform_4(%arg0: i32, %arg1: i32) -> (i32, i32, i32, i32) {
    %c0_i32 = arith.constant 0 : i32
    %c0_i32_0 = arith.constant 0 : i32
    %c0_i32_1 = arith.constant 0 : i32
    return %arg0, %c0_i32, %c0_i32_0, %arg1 : i32, i32, i32, i32
  }
}

</mosaic_0001>

<llo_original>
// kernel: tpu_custom_call.1
$region0: #{tpu_custom_call.1}
  #allocation0 [shape = 'u32[]', space=smem, size = 0x4, offset = 0x4, fixed_abs, tag = 'smem constant byte address 0x4 - core index']
  #allocation1 [shape = 'u32[72,128]{1,0:T(1,128)}', space=vmem, size = 0x9000, scoped, tag = 'internal scratch']
  %s0 = inlined_call_operand.vmem [shape: bf16[1,64,64,27], index: 0, kind: input, shape index: {}]
  %s1 = inlined_call_operand.vmem [shape: bf16[1,27,64], index: 1, kind: input, shape index: {}]
  %s2 = inlined_call_operand.vmem [shape: f32[1,64], index: 2, kind: input, shape index: {}]
  %s3 = inlined_call_operand.vmem [shape: f32[1,64], index: 3, kind: input, shape index: {}]
  %s4 = inlined_call_operand.hbm [shape: bf16[1,64,64,64], index: 4, kind: output, shape index: {}]
  %s5 = sld [smem:[#allocation0]]
  $region26: #{tpu_custom_call.1} parent=0
    _
  %s7 = ssub.s32 1, %s5
  %s8 = scalar_select 0, %s7, %s5
  $region1: #{tpu_custom_call.1} parent=0
    #allocation2 [shape = 'u8[1048576]{0}', space=vmem, size = 0x100000, scoped, tag = 'output window, operand 0, single buffered']
    #allocation3 [shape = 's32[1]{0}', space=sflag, size = 0x4, scoped, tag = 'scoped memory for tpu_custom_call.1']
    %9 = vsyncpa [#allocation3], 0
    // Predicated region
    $region2: #{tpu_custom_call.1} parent=1 // pred_check
      _
    $region3: #{tpu_custom_call.1} parent=1 // pred_check_branch
      %11 = sbr.rel (0) target = $region5
    $region4: #{tpu_custom_call.1} parent=1 // pred_region
      _
    $region5: #{tpu_custom_call.1} parent=1 // pred_fallthru
      _
    // Predicated region
    $region6: #{tpu_custom_call.1} parent=1 // pred_check
      _
    $region7: #{tpu_custom_call.1} parent=1 // pred_check_branch
      %13 = sbr.rel (0) target = $region9
    $region8: #{tpu_custom_call.1} parent=1 // pred_region
      _
    $region9: #{tpu_custom_call.1} parent=1 // pred_fallthru
      _
    // Predicated region
    $region10: #{tpu_custom_call.1} parent=1 // pred_check
      _
    $region11: #{tpu_custom_call.1} parent=1 // pred_check_branch
      %15 = sbr.rel (0) target = $region13
    $region12: #{tpu_custom_call.1} parent=1 // pred_region
      _
    $region13: #{tpu_custom_call.1} parent=1 // pred_fallthru
      _
    // Predicated region
    $region14: #{tpu_custom_call.1} parent=1 // pred_check
      _
    $region15: #{tpu_custom_call.1} parent=1 // pred_check_branch
      %17 = sbr.rel (0) target = $region17
    $region16: #{tpu_custom_call.1} parent=1 // pred_region
      _
    $region17: #{tpu_custom_call.1} parent=1 // pred_fallthru
      _
    %v19 = vld [vmem:[%s0] sm:$0xf]
    %v20 = vld [vmem:[%s0 + $0x4] sm:$0xf]
    %v21 = vld [vmem:[%s0 + $0x8] sm:$0xf]
    %v22 = vld [vmem:[%s0 + $0xc] sm:$0xf]
    %v23 = vld [vmem:[%s0 + $0x10] sm:$0xf]
    %v24 = vld [vmem:[%s0 + $0x14] sm:$0xf]
    %v25 = vld [vmem:[%s0 + $0x18] sm:$0xf]
    %v26 = vld [vmem:[%s0 + $0x1c] sm:$0xf]
    %v27 = vld [vmem:[%s0 + $0x20] sm:$0xf]
    %v28 = vld [vmem:[%s0 + $0x24] sm:$0xf]
    %v29 = vld [vmem:[%s0 + $0x28] sm:$0xf]
    %v30 = vld [vmem:[%s0 + $0x2c] sm:$0xf]
    %v31 = vld [vmem:[%s0 + $0x30] sm:$0xf]
    %v32 = vld [vmem:[%s0 + $0x34] sm:$0xf]
    %v33 = vld [vmem:[%s0 + $0x38] sm:$0xf]
    %v34 = vld [vmem:[%s0 + $0x3c] sm:$0xf]
    %v35 = vld [vmem:[%s0 + $0x40] sm:$0xf]
    %v36 = vld [vmem:[%s0 + $0x44] sm:$0xf]
    %v37 = vld [vmem:[%s0 + $0x48] sm:$0xf]
    %v38 = vld [vmem:[%s0 + $0x4c] sm:$0xf]
    %v39 = vld [vmem:[%s0 + $0x50] sm:$0xf]
    %v40 = vld [vmem:[%s0 + $0x54] sm:$0xf]
    %v41 = vld [vmem:[%s0 + $0x58] sm:$0xf]
    %v42 = vld [vmem:[%s0 + $0x5c] sm:$0xf]
    %v43 = vld [vmem:[%s0 + $0x60] sm:$0xf]
    %v44 = vld [vmem:[%s0 + $0x64] sm:$0xf]
    %v45 = vld [vmem:[%s0 + $0x68] sm:$0xf]
    %v46 = vld [vmem:[%s0 + $0x6c] sm:$0xf]
    %v47 = vld [vmem:[%s0 + $0x70] sm:$0xf]
    %v48 = vld [vmem:[%s0 + $0x74] sm:$0xf]
    %v49 = vld [vmem:[%s0 + $0x78] sm:$0xf]
    %v50 = vld [vmem:[%s0 + $0x7c] sm:$0xf]
    %v51 = vld [vmem:[%s0 + $0x80] sm:$0xf]
    %v52 = vld [vmem:[%s0 + $0x84] sm:$0xf]
    %v53 = vld [vmem:[%s0 + $0x88] sm:$0xf]
    %v54 = vld [vmem:[%s0 + $0x8c] sm:$0xf]
    %v55 = vld [vmem:[%s0 + $0x90] sm:$0xf]
    %v56 = vld [vmem:[%s0 + $0x94] sm:$0xf]
    %v57 = vld [vmem:[%s0 + $0x98] sm:$0xf]
    %v58 = vld [vmem:[%s0 + $0x9c] sm:$0xf]
    %v59 = vld [vmem:[%s0 + $0xa0] sm:$0xf]
    %v60 = vld [vmem:[%s0 + $0xa4] sm:$0xf]
    %v61 = vld [vmem:[%s0 + $0xa8] sm:$0xf]
    %v62 = vld [vmem:[%s0 + $0xac] sm:$0xf]
    %v63 = vld [vmem:[%s0 + $0xb0] sm:$0xf]
    %v64 = vld [vmem:[%s0 + $0xb4] sm:$0xf]
    %v65 = vld [vmem:[%s0 + $0xb8] sm:$0xf]
    %v66 = vld [vmem:[%s0 + $0xbc] sm:$0xf]
    %v67 = vld [vmem:[%s0 + $0xc0] sm:$0xf]
    %v68 = vld [vmem:[%s0 + $0xc4] sm:$0xf]
    %v69 = vld [vmem:[%s0 + $0xc8] sm:$0xf]
    %v70 = vld [vmem:[%s0 + $0xcc] sm:$0xf]
    %v71 = vld [vmem:[%s0 + $0xd0] sm:$0xf]
    %v72 = vld [vmem:[%s0 + $0xd4] sm:$0xf]
    %v73 = vld [vmem:[%s0 + $0xd8] sm:$0xf]
    %v74 = vld [vmem:[%s0 + $0xdc] sm:$0xf]
    %v75 = vld [vmem:[%s0 + $0xe0] sm:$0xf]
    %v76 = vld [vmem:[%s0 + $0xe4] sm:$0xf]
    %v77 = vld [vmem:[%s0 + $0xe8] sm:$0xf]
    %v78 = vld [vmem:[%s0 + $0xec] sm:$0xf]
    %v79 = vld [vmem:[%s0 + $0xf0] sm:$0xf]
    %v80 = vld [vmem:[%s0 + $0xf4] sm:$0xf]
    %v81 = vld [vmem:[%s0 + $0xf8] sm:$0xf]
    %v82 = vld [vmem:[%s0 + $0xfc] sm:$0xf]
    %v83 = vld [vmem:[%s0 + $0x100] sm:$0xf]
    %v84 = vld [vmem:[%s0 + $0x104] sm:$0xf]
    %v85 = vld [vmem:[%s0 + $0x108] sm:$0xf]
    %v86 = vld [vmem:[%s0 + $0x10c] sm:$0xf]
    %v87 = vld [vmem:[%s0 + $0x110] sm:$0xf]
    %v88 = vld [vmem:[%s0 + $0x114] sm:$0xf]
    %v89 = vld [vmem:[%s0 + $0x118] sm:$0xf]
    %v90 = vld [vmem:[%s0 + $0x11c] sm:$0xf]
    %v91 = vld [vmem:[%s0 + $0x120] sm:$0xf]
    %v92 = vld [vmem:[%s0 + $0x124] sm:$0xf]
    %v93 = vld [vmem:[%s0 + $0x128] sm:$0xf]
    %v94 = vld [vmem:[%s0 + $0x12c] sm:$0xf]
    %v95 = vld [vmem:[%s0 + $0x130] sm:$0xf]
    %v96 = vld [vmem:[%s0 + $0x134] sm:$0xf]
    %v97 = vld [vmem:[%s0 + $0x138] sm:$0xf]
    %v98 = vld [vmem:[%s0 + $0x13c] sm:$0xf]
    %v99 = vld [vmem:[%s0 + $0x140] sm:$0xf]
    %v100 = vld [vmem:[%s0 + $0x144] sm:$0xf]
    %v101 = vld [vmem:[%s0 + $0x148] sm:$0xf]
    %v102 = vld [vmem:[%s0 + $0x14c] sm:$0xf]
    %v103 = vld [vmem:[%s0 + $0x150] sm:$0xf]
    %v104 = vld [vmem:[%s0 + $0x154] sm:$0xf]
    %v105 = vld [vmem:[%s0 + $0x158] sm:$0xf]
    %v106 = vld [vmem:[%s0 + $0x15c] sm:$0xf]
    %v107 = vld [vmem:[%s0 + $0x160] sm:$0xf]
    %v108 = vld [vmem:[%s0 + $0x164] sm:$0xf]
    %v109 = vld [vmem:[%s0 + $0x168] sm:$0xf]
    %v110 = vld [vmem:[%s0 + $0x16c] sm:$0xf]
    %v111 = vld [vmem:[%s0 + $0x170] sm:$0xf]
    %v112 = vld [vmem:[%s0 + $0x174] sm:$0xf]
    %v113 = vld [vmem:[%s0 + $0x178] sm:$0xf]
    %v114 = vld [vmem:[%s0 + $0x17c] sm:$0xf]
    %v115 = vld [vmem:[%s0 + $0x180] sm:$0xf]
    %v116 = vld [vmem:[%s0 + $0x184] sm:$0xf]
    %v117 = vld [vmem:[%s0 + $0x188] sm:$0xf]
    %v118 = vld [vmem:[%s0 + $0x18c] sm:$0xf]
    %v119 = vld [vmem:[%s0 + $0x190] sm:$0xf]
    %v120 = vld [vmem:[%s0 + $0x194] sm:$0xf]
    %v121 = vld [vmem:[%s0 + $0x198] sm:$0xf]
    %v122 = vld [vmem:[%s0 + $0x19c] sm:$0xf]
    %v123 = vld [vmem:[%s0 + $0x1a0] sm:$0xf]
    %v124 = vld [vmem:[%s0 + $0x1a4] sm:$0xf]
    %v125 = vld [vmem:[%s0 + $0x1a8] sm:$0xf]
    %v126 = vld [vmem:[%s0 + $0x1ac] sm:$0xf]
    %v127 = vld [vmem:[%s0 + $0x1b0] sm:$0xf]
    %v128 = vld [vmem:[%s0 + $0x1b4] sm:$0xf]
    %v129 = vld [vmem:[%s0 + $0x1b8] sm:$0xf]
    %v130 = vld [vmem:[%s0 + $0x1bc] sm:$0xf]
    %v131 = vld [vmem:[%s0 + $0x1c0] sm:$0xf]
    %v132 = vld [vmem:[%s0 + $0x1c4] sm:$0xf]
    %v133 = vld [vmem:[%s0 + $0x1c8] sm:$0xf]
    %v134 = vld [vmem:[%s0 + $0x1cc] sm:$0xf]
    %v135 = vld [vmem:[%s0 + $0x1d0] sm:$0xf]
    %v136 = vld [vmem:[%s0 + $0x1d4] sm:$0xf]
    %v137 = vld [vmem:[%s0 + $0x1d8] sm:$0xf]
    %v138 = vld [vmem:[%s0 + $0x1dc] sm:$0xf]
    %v139 = vld [vmem:[%s0 + $0x1e0] sm:$0xf]
    %v140 = vld [vmem:[%s0 + $0x1e4] sm:$0xf]
    %v141 = vld [vmem:[%s0 + $0x1e8] sm:$0xf]
    %v142 = vld [vmem:[%s0 + $0x1ec] sm:$0xf]
    %v143 = vld [vmem:[%s0 + $0x1f0] sm:$0xf]
    %v144 = vld [vmem:[%s0 + $0x1f4] sm:$0xf]
    %v145 = vld [vmem:[%s0 + $0x1f8] sm:$0xf]
    %v146 = vld [vmem:[%s0 + $0x1fc] sm:$0xf]
    %v147 = vld [vmem:[%s0 + $0x200] sm:$0xf]
    %v148 = vld [vmem:[%s0 + $0x204] sm:$0xf]
    %v149 = vld [vmem:[%s0 + $0x208] sm:$0xf]
    %v150 = vld [vmem:[%s0 + $0x20c] sm:$0xf]
    %v151 = vld [vmem:[%s0 + $0x210] sm:$0xf]
    %v152 = vld [vmem:[%s0 + $0x214] sm:$0xf]
    %v153 = vld [vmem:[%s0 + $0x218] sm:$0xf]
    %v154 = vld [vmem:[%s0 + $0x21c] sm:$0xf]
    %v155 = vld [vmem:[%s0 + $0x220] sm:$0xf]
    %v156 = vld [vmem:[%s0 + $0x224] sm:$0xf]
    %v157 = vld [vmem:[%s0 + $0x228] sm:$0xf]
    %v158 = vld [vmem:[%s0 + $0x22c] sm:$0xf]
    %v159 = vld [vmem:[%s0 + $0x230] sm:$0xf]
    %v160 = vld [vmem:[%s0 + $0x234] sm:$0xf]
    %v161 = vld [vmem:[%s0 + $0x238] sm:$0xf]
    %v162 = vld [vmem:[%s0 + $0x23c] sm:$0xf]
    %v163 = vld [vmem:[%s0 + $0x240] sm:$0xf]
    %v164 = vld [vmem:[%s0 + $0x244] sm:$0xf]
    %v165 = vld [vmem:[%s0 + $0x248] sm:$0xf]
    %v166 = vld [vmem:[%s0 + $0x24c] sm:$0xf]
    %v167 = vld [vmem:[%s0 + $0x250] sm:$0xf]
    %v168 = vld [vmem:[%s0 + $0x254] sm:$0xf]
    %v169 = vld [vmem:[%s0 + $0x258] sm:$0xf]
    %v170 = vld [vmem:[%s0 + $0x25c] sm:$0xf]
    %v171 = vld [vmem:[%s0 + $0x260] sm:$0xf]
    %v172 = vld [vmem:[%s0 + $0x264] sm:$0xf]
    %v173 = vld [vmem:[%s0 + $0x268] sm:$0xf]
    %v174 = vld [vmem:[%s0 + $0x26c] sm:$0xf]
    %v175 = vld [vmem:[%s0 + $0x270] sm:$0xf]
    %v176 = vld [vmem:[%s0 + $0x274] sm:$0xf]
    %v177 = vld [vmem:[%s0 + $0x278] sm:$0xf]
    %v178 = vld [vmem:[%s0 + $0x27c] sm:$0xf]
    %v179 = vld [vmem:[%s0 + $0x280] sm:$0xf]
    %v180 = vld [vmem:[%s0 + $0x284] sm:$0xf]
    %v181 = vld [vmem:[%s0 + $0x288] sm:$0xf]
    %v182 = vld [vmem:[%s0 + $0x28c] sm:$0xf]
    %v183 = vld [vmem:[%s0 + $0x290] sm:$0xf]
    %v184 = vld [vmem:[%s0 + $0x294] sm:$0xf]
    %v185 = vld [vmem:[%s0 + $0x298] sm:$0xf]
    %v186 = vld [vmem:[%s0 + $0x29c] sm:$0xf]
    %v187 = vld [vmem:[%s0 + $0x2a0] sm:$0xf]
    %v188 = vld [vmem:[%s0 + $0x2a4] sm:$0xf]
    %v189 = vld [vmem:[%s0 + $0x2a8] sm:$0xf]
    %v190 = vld [vmem:[%s0 + $0x2ac] sm:$0xf]
    %v191 = vld [vmem:[%s0 + $0x2b0] sm:$0xf]
    %v192 = vld [vmem:[%s0 + $0x2b4] sm:$0xf]
    %v193 = vld [vmem:[%s0 + $0x2b8] sm:$0xf]
    %v194 = vld [vmem:[%s0 + $0x2bc] sm:$0xf]
    %v195 = vld [vmem:[%s0 + $0x2c0] sm:$0xf]
    %v196 = vld [vmem:[%s0 + $0x2c4] sm:$0xf]
    %v197 = vld [vmem:[%s0 + $0x2c8] sm:$0xf]
    %v198 = vld [vmem:[%s0 + $0x2cc] sm:$0xf]
    %v199 = vld [vmem:[%s0 + $0x2d0] sm:$0xf]
    %v200 = vld [vmem:[%s0 + $0x2d4] sm:$0xf]
    %v201 = vld [vmem:[%s0 + $0x2d8] sm:$0xf]
    %v202 = vld [vmem:[%s0 + $0x2dc] sm:$0xf]
    %v203 = vld [vmem:[%s0 + $0x2e0] sm:$0xf]
    %v204 = vld [vmem:[%s0 + $0x2e4] sm:$0xf]
    %v205 = vld [vmem:[%s0 + $0x2e8] sm:$0xf]
    %v206 = vld [vmem:[%s0 + $0x2ec] sm:$0xf]
    %v207 = vld [vmem:[%s0 + $0x2f0] sm:$0xf]
    %v208 = vld [vmem:[%s0 + $0x2f4] sm:$0xf]
    %v209 = vld [vmem:[%s0 + $0x2f8] sm:$0xf]
    %v210 = vld [vmem:[%s0 + $0x2fc] sm:$0xf]
    %v211 = vld [vmem:[%s0 + $0x300] sm:$0xf]
    %v212 = vld [vmem:[%s0 + $0x304] sm:$0xf]
    %v213 = vld [vmem:[%s0 + $0x308] sm:$0xf]
    %v214 = vld [vmem:[%s0 + $0x30c] sm:$0xf]
    %v215 = vld [vmem:[%s0 + $0x310] sm:$0xf]
    %v216 = vld [vmem:[%s0 + $0x314] sm:$0xf]
    %v217 = vld [vmem:[%s0 + $0x318] sm:$0xf]
    %v218 = vld [vmem:[%s0 + $0x31c] sm:$0xf]
    %v219 = vld [vmem:[%s0 + $0x320] sm:$0xf]
    %v220 = vld [vmem:[%s0 + $0x324] sm:$0xf]
    %v221 = vld [vmem:[%s0 + $0x328] sm:$0xf]
    %v222 = vld [vmem:[%s0 + $0x32c] sm:$0xf]
    %v223 = vld [vmem:[%s0 + $0x330] sm:$0xf]
    %v224 = vld [vmem:[%s0 + $0x334] sm:$0xf]
    %v225 = vld [vmem:[%s0 + $0x338] sm:$0xf]
    %v226 = vld [vmem:[%s0 + $0x33c] sm:$0xf]
    %v227 = vld [vmem:[%s0 + $0x340] sm:$0xf]
    %v228 = vld [vmem:[%s0 + $0x344] sm:$0xf]
    %v229 = vld [vmem:[%s0 + $0x348] sm:$0xf]
    %v230 = vld [vmem:[%s0 + $0x34c] sm:$0xf]
    %v231 = vld [vmem:[%s0 + $0x350] sm:$0xf]
    %v232 = vld [vmem:[%s0 + $0x354] sm:$0xf]
    %v233 = vld [vmem:[%s0 + $0x358] sm:$0xf]
    %v234 = vld [vmem:[%s0 + $0x35c] sm:$0xf]
    %v235 = vld [vmem:[%s0 + $0x360] sm:$0xf]
    %v236 = vld [vmem:[%s0 + $0x364] sm:$0xf]
    %v237 = vld [vmem:[%s0 + $0x368] sm:$0xf]
    %v238 = vld [vmem:[%s0 + $0x36c] sm:$0xf]
    %v239 = vld [vmem:[%s0 + $0x370] sm:$0xf]
    %v240 = vld [vmem:[%s0 + $0x374] sm:$0xf]
    %v241 = vld [vmem:[%s0 + $0x378] sm:$0xf]
    %v242 = vld [vmem:[%s0 + $0x37c] sm:$0xf]
    %v243 = vld [vmem:[%s0 + $0x380] sm:$0xf]
    %v244 = vld [vmem:[%s0 + $0x384] sm:$0xf]
    %v245 = vld [vmem:[%s0 + $0x388] sm:$0xf]
    %v246 = vld [vmem:[%s0 + $0x38c] sm:$0xf]
    %v247 = vld [vmem:[%s0 + $0x390] sm:$0xf]
    %v248 = vld [vmem:[%s0 + $0x394] sm:$0xf]
    %v249 = vld [vmem:[%s0 + $0x398] sm:$0xf]
    %v250 = vld [vmem:[%s0 + $0x39c] sm:$0xf]
    %v251 = vld [vmem:[%s0 + $0x3a0] sm:$0xf]
    %v252 = vld [vmem:[%s0 + $0x3a4] sm:$0xf]
    %v253 = vld [vmem:[%s0 + $0x3a8] sm:$0xf]
    %v254 = vld [vmem:[%s0 + $0x3ac] sm:$0xf]
    %v255 = vld [vmem:[%s0 + $0x3b0] sm:$0xf]
    %v256 = vld [vmem:[%s0 + $0x3b4] sm:$0xf]
    %v257 = vld [vmem:[%s0 + $0x3b8] sm:$0xf]
    %v258 = vld [vmem:[%s0 + $0x3bc] sm:$0xf]
    %v259 = vld [vmem:[%s0 + $0x3c0] sm:$0xf]
    %v260 = vld [vmem:[%s0 + $0x3c4] sm:$0xf]
    %v261 = vld [vmem:[%s0 + $0x3c8] sm:$0xf]
    %v262 = vld [vmem:[%s0 + $0x3cc] sm:$0xf]
    %v263 = vld [vmem:[%s0 + $0x3d0] sm:$0xf]
    %v264 = vld [vmem:[%s0 + $0x3d4] sm:$0xf]
    %v265 = vld [vmem:[%s0 + $0x3d8] sm:$0xf]
    %v266 = vld [vmem:[%s0 + $0x3dc] sm:$0xf]
    %v267 = vld [vmem:[%s0 + $0x3e0] sm:$0xf]
    %v268 = vld [vmem:[%s0 + $0x3e4] sm:$0xf]
    %v269 = vld [vmem:[%s0 + $0x3e8] sm:$0xf]
    %v270 = vld [vmem:[%s0 + $0x3ec] sm:$0xf]
    %v271 = vld [vmem:[%s0 + $0x3f0] sm:$0xf]
    %v272 = vld [vmem:[%s0 + $0x3f4] sm:$0xf]
    %v273 = vld [vmem:[%s0 + $0x3f8] sm:$0xf]
    %v274 = vld [vmem:[%s0 + $0x3fc] sm:$0xf]
    %v275 = vld [vmem:[%s0 + $0x400] sm:$0xf]
    %v276 = vld [vmem:[%s0 + $0x404] sm:$0xf]
    %v277 = vld [vmem:[%s0 + $0x408] sm:$0xf]
    %v278 = vld [vmem:[%s0 + $0x40c] sm:$0xf]
    %v279 = vld [vmem:[%s0 + $0x410] sm:$0xf]
    %v280 = vld [vmem:[%s0 + $0x414] sm:$0xf]
    %v281 = vld [vmem:[%s0 + $0x418] sm:$0xf]
    %v282 = vld [vmem:[%s0 + $0x41c] sm:$0xf]
    %v283 = vld [vmem:[%s0 + $0x420] sm:$0xf]
    %v284 = vld [vmem:[%s0 + $0x424] sm:$0xf]
    %v285 = vld [vmem:[%s0 + $0x428] sm:$0xf]
    %v286 = vld [vmem:[%s0 + $0x42c] sm:$0xf]
    %v287 = vld [vmem:[%s0 + $0x430] sm:$0xf]
    %v288 = vld [vmem:[%s0 + $0x434] sm:$0xf]
    %v289 = vld [vmem:[%s0 + $0x438] sm:$0xf]
    %v290 = vld [vmem:[%s0 + $0x43c] sm:$0xf]
    %v291 = vld [vmem:[%s0 + $0x440] sm:$0xf]
    %v292 = vld [vmem:[%s0 + $0x444] sm:$0xf]
    %v293 = vld [vmem:[%s0 + $0x448] sm:$0xf]
    %v294 = vld [vmem:[%s0 + $0x44c] sm:$0xf]
    %v295 = vld [vmem:[%s0 + $0x450] sm:$0xf]
    %v296 = vld [vmem:[%s0 + $0x454] sm:$0xf]
    %v297 = vld [vmem:[%s0 + $0x458] sm:$0xf]
    %v298 = vld [vmem:[%s0 + $0x45c] sm:$0xf]
    %v299 = vld [vmem:[%s0 + $0x460] sm:$0xf]
    %v300 = vld [vmem:[%s0 + $0x464] sm:$0xf]
    %v301 = vld [vmem:[%s0 + $0x468] sm:$0xf]
    %v302 = vld [vmem:[%s0 + $0x46c] sm:$0xf]
    %v303 = vld [vmem:[%s0 + $0x470] sm:$0xf]
    %v304 = vld [vmem:[%s0 + $0x474] sm:$0xf]
    %v305 = vld [vmem:[%s0 + $0x478] sm:$0xf]
    %v306 = vld [vmem:[%s0 + $0x47c] sm:$0xf]
    %v307 = vld [vmem:[%s0 + $0x480] sm:$0xf]
    %v308 = vld [vmem:[%s0 + $0x484] sm:$0xf]
    %v309 = vld [vmem:[%s0 + $0x488] sm:$0xf]
    %v310 = vld [vmem:[%s0 + $0x48c] sm:$0xf]
    %v311 = vld [vmem:[%s0 + $0x490] sm:$0xf]
    %v312 = vld [vmem:[%s0 + $0x494] sm:$0xf]
    %v313 = vld [vmem:[%s0 + $0x498] sm:$0xf]
    %v314 = vld [vmem:[%s0 + $0x49c] sm:$0xf]
    %v315 = vld [vmem:[%s0 + $0x4a0] sm:$0xf]
    %v316 = vld [vmem:[%s0 + $0x4a4] sm:$0xf]
    %v317 = vld [vmem:[%s0 + $0x4a8] sm:$0xf]
    %v318 = vld [vmem:[%s0 + $0x4ac] sm:$0xf]
    %v319 = vld [vmem:[%s0 + $0x4b0] sm:$0xf]
    %v320 = vld [vmem:[%s0 + $0x4b4] sm:$0xf]
    %v321 = vld [vmem:[%s0 + $0x4b8] sm:$0xf]
    %v322 = vld [vmem:[%s0 + $0x4bc] sm:$0xf]
    %v323 = vld [vmem:[%s0 + $0x4c0] sm:$0xf]
    %v324 = vld [vmem:[%s0 + $0x4c4] sm:$0xf]
    %v325 = vld [vmem:[%s0 + $0x4c8] sm:$0xf]
    %v326 = vld [vmem:[%s0 + $0x4cc] sm:$0xf]
    %v327 = vld [vmem:[%s0 + $0x4d0] sm:$0xf]
    %v328 = vld [vmem:[%s0 + $0x4d4] sm:$0xf]
    %v329 = vld [vmem:[%s0 + $0x4d8] sm:$0xf]
    %v330 = vld [vmem:[%s0 + $0x4dc] sm:$0xf]
    %v331 = vld [vmem:[%s0 + $0x4e0] sm:$0xf]
    %v332 = vld [vmem:[%s0 + $0x4e4] sm:$0xf]
    %v333 = vld [vmem:[%s0 + $0x4e8] sm:$0xf]
    %v334 = vld [vmem:[%s0 + $0x4ec] sm:$0xf]
    %v335 = vld [vmem:[%s0 + $0x4f0] sm:$0xf]
    %v336 = vld [vmem:[%s0 + $0x4f4] sm:$0xf]
    %v337 = vld [vmem:[%s0 + $0x4f8] sm:$0xf]
    %v338 = vld [vmem:[%s0 + $0x4fc] sm:$0xf]
    %v339 = vld [vmem:[%s0 + $0x500] sm:$0xf]
    %v340 = vld [vmem:[%s0 + $0x504] sm:$0xf]
    %v341 = vld [vmem:[%s0 + $0x508] sm:$0xf]
    %v342 = vld [vmem:[%s0 + $0x50c] sm:$0xf]
    %v343 = vld [vmem:[%s0 + $0x510] sm:$0xf]
    %v344 = vld [vmem:[%s0 + $0x514] sm:$0xf]
    %v345 = vld [vmem:[%s0 + $0x518] sm:$0xf]
    %v346 = vld [vmem:[%s0 + $0x51c] sm:$0xf]
    %v347 = vld [vmem:[%s0 + $0x520] sm:$0xf]
    %v348 = vld [vmem:[%s0 + $0x524] sm:$0xf]
    %v349 = vld [vmem:[%s0 + $0x528] sm:$0xf]
    %v350 = vld [vmem:[%s0 + $0x52c] sm:$0xf]
    %v351 = vld [vmem:[%s0 + $0x530] sm:$0xf]
    %v352 = vld [vmem:[%s0 + $0x534] sm:$0xf]
    %v353 = vld [vmem:[%s0 + $0x538] sm:$0xf]
    %v354 = vld [vmem:[%s0 + $0x53c] sm:$0xf]
    %v355 = vld [vmem:[%s0 + $0x540] sm:$0xf]
    %v356 = vld [vmem:[%s0 + $0x544] sm:$0xf]
    %v357 = vld [vmem:[%s0 + $0x548] sm:$0xf]
    %v358 = vld [vmem:[%s0 + $0x54c] sm:$0xf]
    %v359 = vld [vmem:[%s0 + $0x550] sm:$0xf]
    %v360 = vld [vmem:[%s0 + $0x554] sm:$0xf]
    %v361 = vld [vmem:[%s0 + $0x558] sm:$0xf]
    %v362 = vld [vmem:[%s0 + $0x55c] sm:$0xf]
    %v363 = vld [vmem:[%s0 + $0x560] sm:$0xf]
    %v364 = vld [vmem:[%s0 + $0x564] sm:$0xf]
    %v365 = vld [vmem:[%s0 + $0x568] sm:$0xf]
    %v366 = vld [vmem:[%s0 + $0x56c] sm:$0xf]
    %v367 = vld [vmem:[%s0 + $0x570] sm:$0xf]
    %v368 = vld [vmem:[%s0 + $0x574] sm:$0xf]
    %v369 = vld [vmem:[%s0 + $0x578] sm:$0xf]
    %v370 = vld [vmem:[%s0 + $0x57c] sm:$0xf]
    %v371 = vld [vmem:[%s0 + $0x580] sm:$0xf]
    %v372 = vld [vmem:[%s0 + $0x584] sm:$0xf]
    %v373 = vld [vmem:[%s0 + $0x588] sm:$0xf]
    %v374 = vld [vmem:[%s0 + $0x58c] sm:$0xf]
    %v375 = vld [vmem:[%s0 + $0x590] sm:$0xf]
    %v376 = vld [vmem:[%s0 + $0x594] sm:$0xf]
    %v377 = vld [vmem:[%s0 + $0x598] sm:$0xf]
    %v378 = vld [vmem:[%s0 + $0x59c] sm:$0xf]
    %v379 = vld [vmem:[%s0 + $0x5a0] sm:$0xf]
    %v380 = vld [vmem:[%s0 + $0x5a4] sm:$0xf]
    %v381 = vld [vmem:[%s0 + $0x5a8] sm:$0xf]
    %v382 = vld [vmem:[%s0 + $0x5ac] sm:$0xf]
    %v383 = vld [vmem:[%s0 + $0x5b0] sm:$0xf]
    %v384 = vld [vmem:[%s0 + $0x5b4] sm:$0xf]
    %v385 = vld [vmem:[%s0 + $0x5b8] sm:$0xf]
    %v386 = vld [vmem:[%s0 + $0x5bc] sm:$0xf]
    %v387 = vld [vmem:[%s0 + $0x5c0] sm:$0xf]
    %v388 = vld [vmem:[%s0 + $0x5c4] sm:$0xf]
    %v389 = vld [vmem:[%s0 + $0x5c8] sm:$0xf]
    %v390 = vld [vmem:[%s0 + $0x5cc] sm:$0xf]
    %v391 = vld [vmem:[%s0 + $0x5d0] sm:$0xf]
    %v392 = vld [vmem:[%s0 + $0x5d4] sm:$0xf]
    %v393 = vld [vmem:[%s0 + $0x5d8] sm:$0xf]
    %v394 = vld [vmem:[%s0 + $0x5dc] sm:$0xf]
    %v395 = vld [vmem:[%s0 + $0x5e0] sm:$0xf]
    %v396 = vld [vmem:[%s0 + $0x5e4] sm:$0xf]
    %v397 = vld [vmem:[%s0 + $0x5e8] sm:$0xf]
    %v398 = vld [vmem:[%s0 + $0x5ec] sm:$0xf]
    %v399 = vld [vmem:[%s0 + $0x5f0] sm:$0xf]
    %v400 = vld [vmem:[%s0 + $0x5f4] sm:$0xf]
    %v401 = vld [vmem:[%s0 + $0x5f8] sm:$0xf]
    %v402 = vld [vmem:[%s0 + $0x5fc] sm:$0xf]
    %v403 = vld [vmem:[%s0 + $0x600] sm:$0xf]
    %v404 = vld [vmem:[%s0 + $0x604] sm:$0xf]
    %v405 = vld [vmem:[%s0 + $0x608] sm:$0xf]
    %v406 = vld [vmem:[%s0 + $0x60c] sm:$0xf]
    %v407 = vld [vmem:[%s0 + $0x610] sm:$0xf]
    %v408 = vld [vmem:[%s0 + $0x614] sm:$0xf]
    %v409 = vld [vmem:[%s0 + $0x618] sm:$0xf]
    %v410 = vld [vmem:[%s0 + $0x61c] sm:$0xf]
    %v411 = vld [vmem:[%s0 + $0x620] sm:$0xf]
    %v412 = vld [vmem:[%s0 + $0x624] sm:$0xf]
    %v413 = vld [vmem:[%s0 + $0x628] sm:$0xf]
    %v414 = vld [vmem:[%s0 + $0x62c] sm:$0xf]
    %v415 = vld [vmem:[%s0 + $0x630] sm:$0xf]
    %v416 = vld [vmem:[%s0 + $0x634] sm:$0xf]
    %v417 = vld [vmem:[%s0 + $0x638] sm:$0xf]
    %v418 = vld [vmem:[%s0 + $0x63c] sm:$0xf]
    %v419 = vld [vmem:[%s0 + $0x640] sm:$0xf]
    %v420 = vld [vmem:[%s0 + $0x644] sm:$0xf]
    %v421 = vld [vmem:[%s0 + $0x648] sm:$0xf]
    %v422 = vld [vmem:[%s0 + $0x64c] sm:$0xf]
    %v423 = vld [vmem:[%s0 + $0x650] sm:$0xf]
    %v424 = vld [vmem:[%s0 + $0x654] sm:$0xf]
    %v425 = vld [vmem:[%s0 + $0x658] sm:$0xf]
    %v426 = vld [vmem:[%s0 + $0x65c] sm:$0xf]
    %v427 = vld [vmem:[%s0 + $0x660] sm:$0xf]
    %v428 = vld [vmem:[%s0 + $0x664] sm:$0xf]
    %v429 = vld [vmem:[%s0 + $0x668] sm:$0xf]
    %v430 = vld [vmem:[%s0 + $0x66c] sm:$0xf]
    %v431 = vld [vmem:[%s0 + $0x670] sm:$0xf]
    %v432 = vld [vmem:[%s0 + $0x674] sm:$0xf]
    %v433 = vld [vmem:[%s0 + $0x678] sm:$0xf]
    %v434 = vld [vmem:[%s0 + $0x67c] sm:$0xf]
    %v435 = vld [vmem:[%s0 + $0x680] sm:$0xf]
    %v436 = vld [vmem:[%s0 + $0x684] sm:$0xf]
    %v437 = vld [vmem:[%s0 + $0x688] sm:$0xf]
    %v438 = vld [vmem:[%s0 + $0x68c] sm:$0xf]
    %v439 = vld [vmem:[%s0 + $0x690] sm:$0xf]
    %v440 = vld [vmem:[%s0 + $0x694] sm:$0xf]
    %v441 = vld [vmem:[%s0 + $0x698] sm:$0xf]
    %v442 = vld [vmem:[%s0 + $0x69c] sm:$0xf]
    %v443 = vld [vmem:[%s0 + $0x6a0] sm:$0xf]
    %v444 = vld [vmem:[%s0 + $0x6a4] sm:$0xf]
    %v445 = vld [vmem:[%s0 + $0x6a8] sm:$0xf]
    %v446 = vld [vmem:[%s0 + $0x6ac] sm:$0xf]
    %v447 = vld [vmem:[%s0 + $0x6b0] sm:$0xf]
    %v448 = vld [vmem:[%s0 + $0x6b4] sm:$0xf]
    %v449 = vld [vmem:[%s0 + $0x6b8] sm:$0xf]
    %v450 = vld [vmem:[%s0 + $0x6bc] sm:$0xf]
    %v451 = vld [vmem:[%s0 + $0x6c0] sm:$0xf]
    %v452 = vld [vmem:[%s0 + $0x6c4] sm:$0xf]
    %v453 = vld [vmem:[%s0 + $0x6c8] sm:$0xf]
    %v454 = vld [vmem:[%s0 + $0x6cc] sm:$0xf]
    %v455 = vld [vmem:[%s0 + $0x6d0] sm:$0xf]
    %v456 = vld [vmem:[%s0 + $0x6d4] sm:$0xf]
    %v457 = vld [vmem:[%s0 + $0x6d8] sm:$0xf]
    %v458 = vld [vmem:[%s0 + $0x6dc] sm:$0xf]
    %v459 = vld [vmem:[%s0 + $0x6e0] sm:$0xf]
    %v460 = vld [vmem:[%s0 + $0x6e4] sm:$0xf]
    %v461 = vld [vmem:[%s0 + $0x6e8] sm:$0xf]
    %v462 = vld [vmem:[%s0 + $0x6ec] sm:$0xf]
    %v463 = vld [vmem:[%s0 + $0x6f0] sm:$0xf]
    %v464 = vld [vmem:[%s0 + $0x6f4] sm:$0xf]
    %v465 = vld [vmem:[%s0 + $0x6f8] sm:$0xf]
    %v466 = vld [vmem:[%s0 + $0x6fc] sm:$0xf]
    %v467 = vld [vmem:[%s0 + $0x700] sm:$0xf]
    %v468 = vld [vmem:[%s0 + $0x704] sm:$0xf]
    %v469 = vld [vmem:[%s0 + $0x708] sm:$0xf]
    %v470 = vld [vmem:[%s0 + $0x70c] sm:$0xf]
    %v471 = vld [vmem:[%s0 + $0x710] sm:$0xf]
    %v472 = vld [vmem:[%s0 + $0x714] sm:$0xf]
    %v473 = vld [vmem:[%s0 + $0x718] sm:$0xf]
    %v474 = vld [vmem:[%s0 + $0x71c] sm:$0xf]
    %v475 = vld [vmem:[%s0 + $0x720] sm:$0xf]
    %v476 = vld [vmem:[%s0 + $0x724] sm:$0xf]
    %v477 = vld [vmem:[%s0 + $0x728] sm:$0xf]
    %v478 = vld [vmem:[%s0 + $0x72c] sm:$0xf]
    %v479 = vld [vmem:[%s0 + $0x730] sm:$0xf]
    %v480 = vld [vmem:[%s0 + $0x734] sm:$0xf]
    %v481 = vld [vmem:[%s0 + $0x738] sm:$0xf]
    %v482 = vld [vmem:[%s0 + $0x73c] sm:$0xf]
    %v483 = vld [vmem:[%s0 + $0x740] sm:$0xf]
    %v484 = vld [vmem:[%s0 + $0x744] sm:$0xf]
    %v485 = vld [vmem:[%s0 + $0x748] sm:$0xf]
    %v486 = vld [vmem:[%s0 + $0x74c] sm:$0xf]
    %v487 = vld [vmem:[%s0 + $0x750] sm:$0xf]
    %v488 = vld [vmem:[%s0 + $0x754] sm:$0xf]
    %v489 = vld [vmem:[%s0 + $0x758] sm:$0xf]
    %v490 = vld [vmem:[%s0 + $0x75c] sm:$0xf]
    %v491 = vld [vmem:[%s0 + $0x760] sm:$0xf]
    %v492 = vld [vmem:[%s0 + $0x764] sm:$0xf]
    %v493 = vld [vmem:[%s0 + $0x768] sm:$0xf]
    %v494 = vld [vmem:[%s0 + $0x76c] sm:$0xf]
    %v495 = vld [vmem:[%s0 + $0x770] sm:$0xf]
    %v496 = vld [vmem:[%s0 + $0x774] sm:$0xf]
    %v497 = vld [vmem:[%s0 + $0x778] sm:$0xf]
    %v498 = vld [vmem:[%s0 + $0x77c] sm:$0xf]
    %v499 = vld [vmem:[%s0 + $0x780] sm:$0xf]
    %v500 = vld [vmem:[%s0 + $0x784] sm:$0xf]
    %v501 = vld [vmem:[%s0 + $0x788] sm:$0xf]
    %v502 = vld [vmem:[%s0 + $0x78c] sm:$0xf]
    %v503 = vld [vmem:[%s0 + $0x790] sm:$0xf]
    %v504 = vld [vmem:[%s0 + $0x794] sm:$0xf]
    %v505 = vld [vmem:[%s0 + $0x798] sm:$0xf]
    %v506 = vld [vmem:[%s0 + $0x79c] sm:$0xf]
    %v507 = vld [vmem:[%s0 + $0x7a0] sm:$0xf]
    %v508 = vld [vmem:[%s0 + $0x7a4] sm:$0xf]
    %v509 = vld [vmem:[%s0 + $0x7a8] sm:$0xf]
    %v510 = vld [vmem:[%s0 + $0x7ac] sm:$0xf]
    %v511 = vld [vmem:[%s0 + $0x7b0] sm:$0xf]
    %v512 = vld [vmem:[%s0 + $0x7b4] sm:$0xf]
    %v513 = vld [vmem:[%s0 + $0x7b8] sm:$0xf]
    %v514 = vld [vmem:[%s0 + $0x7bc] sm:$0xf]
    %v515 = vld [vmem:[%s0 + $0x7c0] sm:$0xf]
    %v516 = vld [vmem:[%s0 + $0x7c4] sm:$0xf]
    %v517 = vld [vmem:[%s0 + $0x7c8] sm:$0xf]
    %v518 = vld [vmem:[%s0 + $0x7cc] sm:$0xf]
    %v519 = vld [vmem:[%s0 + $0x7d0] sm:$0xf]
    %v520 = vld [vmem:[%s0 + $0x7d4] sm:$0xf]
    %v521 = vld [vmem:[%s0 + $0x7d8] sm:$0xf]
    %v522 = vld [vmem:[%s0 + $0x7dc] sm:$0xf]
    %v523 = vld [vmem:[%s0 + $0x7e0] sm:$0xf]
    %v524 = vld [vmem:[%s0 + $0x7e4] sm:$0xf]
    %v525 = vld [vmem:[%s0 + $0x7e8] sm:$0xf]
    %v526 = vld [vmem:[%s0 + $0x7ec] sm:$0xf]
    %v527 = vld [vmem:[%s0 + $0x7f0] sm:$0xf]
    %v528 = vld [vmem:[%s0 + $0x7f4] sm:$0xf]
    %v529 = vld [vmem:[%s0 + $0x7f8] sm:$0xf]
    %v530 = vld [vmem:[%s0 + $0x7fc] sm:$0xf]
    %v531 = vld [vmem:[%s1] sm:$0xf]
    %v532 = vld [vmem:[%s1 + $0x4] sm:$0xf]
    %v533 = vld [vmem:[%s1 + $0x8] sm:$0xf]
    %v534 = vld [vmem:[%s1 + $0xc] sm:$0x3]
    %v1047 = vunpack.c.l.b16 %v19
    %v1048 = vunpack.c.l.b16 %v20
    %v1049 = vunpack.c.l.b16 %v21
    %v1050 = vunpack.c.l.b16 %v22
    %v1051 = vunpack.c.l.b16 %v23
    %v1052 = vunpack.c.l.b16 %v24
    %v1053 = vunpack.c.l.b16 %v25
    %v1054 = vunpack.c.l.b16 %v26
    %v1055 = vunpack.c.l.b16 %v27
    %v1056 = vunpack.c.l.b16 %v28
    %v1057 = vunpack.c.l.b16 %v29
    %v1058 = vunpack.c.l.b16 %v30
    %v1059 = vunpack.c.l.b16 %v31
    %v1060 = vunpack.c.l.b16 %v32
    %v1061 = vunpack.c.l.b16 %v33
    %v1062 = vunpack.c.l.b16 %v34
    %v1063 = vunpack.c.l.b16 %v35
    %v1064 = vunpack.c.l.b16 %v36
    %v1065 = vunpack.c.l.b16 %v37
    %v1066 = vunpack.c.l.b16 %v38
    %v1067 = vunpack.c.l.b16 %v39
    %v1068 = vunpack.c.l.b16 %v40
    %v1069 = vunpack.c.l.b16 %v41
    %v1070 = vunpack.c.l.b16 %v42
    %v1071 = vunpack.c.l.b16 %v43
    %v1072 = vunpack.c.l.b16 %v44
    %v1073 = vunpack.c.l.b16 %v45
    %v1074 = vunpack.c.l.b16 %v46
    %v1075 = vunpack.c.l.b16 %v47
    %v1076 = vunpack.c.l.b16 %v48
    %v1077 = vunpack.c.l.b16 %v49
    %v1078 = vunpack.c.l.b16 %v50
    %v1079 = vunpack.c.l.b16 %v51
    %v1080 = vunpack.c.l.b16 %v52
    %v1081 = vunpack.c.l.b16 %v53
    %v1082 = vunpack.c.l.b16 %v54
    %v1083 = vunpack.c.l.b16 %v55
    %v1084 = vunpack.c.l.b16 %v56
    %v1085 = vunpack.c.l.b16 %v57
    %v1086 = vunpack.c.l.b16 %v58
    %v1087 = vunpack.c.l.b16 %v59
    %v1088 = vunpack.c.l.b16 %v60
    %v1089 = vunpack.c.l.b16 %v61
    %v1090 = vunpack.c.l.b16 %v62
    %v1091 = vunpack.c.l.b16 %v63
    %v1092 = vunpack.c.l.b16 %v64
    %v1093 = vunpack.c.l.b16 %v65
    %v1094 = vunpack.c.l.b16 %v66
    %v1095 = vunpack.c.l.b16 %v67
    %v1096 = vunpack.c.l.b16 %v68
    %v1097 = vunpack.c.l.b16 %v69
    %v1098 = vunpack.c.l.b16 %v70
    %v1099 = vunpack.c.l.b16 %v71
    %v1100 = vunpack.c.l.b16 %v72
    %v1101 = vunpack.c.l.b16 %v73
    %v1102 = vunpack.c.l.b16 %v74
    %v1103 = vunpack.c.l.b16 %v75
    %v1104 = vunpack.c.l.b16 %v76
    %v1105 = vunpack.c.l.b16 %v77
    %v1106 = vunpack.c.l.b16 %v78
    %v1107 = vunpack.c.l.b16 %v79
    %v1108 = vunpack.c.l.b16 %v80
    %v1109 = vunpack.c.l.b16 %v81
    %v1110 = vunpack.c.l.b16 %v82
    %v1111 = vunpack.c.l.b16 %v83
    %v1112 = vunpack.c.l.b16 %v84
    %v1113 = vunpack.c.l.b16 %v85
    %v1114 = vunpack.c.l.b16 %v86
    %v1115 = vunpack.c.l.b16 %v87
    %v1116 = vunpack.c.l.b16 %v88
    %v1117 = vunpack.c.l.b16 %v89
    %v1118 = vunpack.c.l.b16 %v90
    %v1119 = vunpack.c.l.b16 %v91
    %v1120 = vunpack.c.l.b16 %v92
    %v1121 = vunpack.c.l.b16 %v93
    %v1122 = vunpack.c.l.b16 %v94
    %v1123 = vunpack.c.l.b16 %v95
    %v1124 = vunpack.c.l.b16 %v96
    %v1125 = vunpack.c.l.b16 %v97
    %v1126 = vunpack.c.l.b16 %v98
    %v1127 = vunpack.c.l.b16 %v99
    %v1128 = vunpack.c.l.b16 %v100
    %v1129 = vunpack.c.l.b16 %v101
    %v1130 = vunpack.c.l.b16 %v102
    %v1131 = vunpack.c.l.b16 %v103
    %v1132 = vunpack.c.l.b16 %v104
    %v1133 = vunpack.c.l.b16 %v105
    %v1134 = vunpack.c.l.b16 %v106
    %v1135 = vunpack.c.l.b16 %v107
    %v1136 = vunpack.c.l.b16 %v108
    %v1137 = vunpack.c.l.b16 %v109
    %v1138 = vunpack.c.l.b16 %v110
    %v1139 = vunpack.c.l.b16 %v111
    %v1140 = vunpack.c.l.b16 %v112
    %v1141 = vunpack.c.l.b16 %v113
    %v1142 = vunpack.c.l.b16 %v114
    %v1143 = vunpack.c.l.b16 %v115
    %v1144 = vunpack.c.l.b16 %v116
    %v1145 = vunpack.c.l.b16 %v117
    %v1146 = vunpack.c.l.b16 %v118
    %v1147 = vunpack.c.l.b16 %v119
    %v1148 = vunpack.c.l.b16 %v120
    %v1149 = vunpack.c.l.b16 %v121
    %v1150 = vunpack.c.l.b16 %v122
    %v1151 = vunpack.c.l.b16 %v123
    %v1152 = vunpack.c.l.b16 %v124
    %v1153 = vunpack.c.l.b16 %v125
    %v1154 = vunpack.c.l.b16 %v126
    %v1155 = vunpack.c.l.b16 %v127
    %v1156 = vunpack.c.l.b16 %v128
    %v1157 = vunpack.c.l.b16 %v129
    %v1158 = vunpack.c.l.b16 %v130
    %v1159 = vunpack.c.l.b16 %v131
    %v1160 = vunpack.c.l.b16 %v132
    %v1161 = vunpack.c.l.b16 %v133
    %v1162 = vunpack.c.l.b16 %v134
    %v1163 = vunpack.c.l.b16 %v135
    %v1164 = vunpack.c.l.b16 %v136
    %v1165 = vunpack.c.l.b16 %v137
    %v1166 = vunpack.c.l.b16 %v138
    %v1167 = vunpack.c.l.b16 %v139
    %v1168 = vunpack.c.l.b16 %v140
    %v1169 = vunpack.c.l.b16 %v141
    %v1170 = vunpack.c.l.b16 %v142
    %v1171 = vunpack.c.l.b16 %v143
    %v1172 = vunpack.c.l.b16 %v144
    %v1173 = vunpack.c.l.b16 %v145
    %v1174 = vunpack.c.l.b16 %v146
    %v1175 = vunpack.c.l.b16 %v147
    %v1176 = vunpack.c.l.b16 %v148
    %v1177 = vunpack.c.l.b16 %v149
    %v1178 = vunpack.c.l.b16 %v150
    %v1179 = vunpack.c.l.b16 %v151
    %v1180 = vunpack.c.l.b16 %v152
    %v1181 = vunpack.c.l.b16 %v153
    %v1182 = vunpack.c.l.b16 %v154
    %v1183 = vunpack.c.l.b16 %v155
    %v1184 = vunpack.c.l.b16 %v156
    %v1185 = vunpack.c.l.b16 %v157
    %v1186 = vunpack.c.l.b16 %v158
    %v1187 = vunpack.c.l.b16 %v159
    %v1188 = vunpack.c.l.b16 %v160
    %v1189 = vunpack.c.l.b16 %v161
    %v1190 = vunpack.c.l.b16 %v162
    %v1191 = vunpack.c.l.b16 %v163
    %v1192 = vunpack.c.l.b16 %v164
    %v1193 = vunpack.c.l.b16 %v165
    %v1194 = vunpack.c.l.b16 %v166
    %v1195 = vunpack.c.l.b16 %v167
    %v1196 = vunpack.c.l.b16 %v168
    %v1197 = vunpack.c.l.b16 %v169
    %v1198 = vunpack.c.l.b16 %v170
    %v1199 = vunpack.c.l.b16 %v171
    %v1200 = vunpack.c.l.b16 %v172
    %v1201 = vunpack.c.l.b16 %v173
    %v1202 = vunpack.c.l.b16 %v174
    %v1203 = vunpack.c.l.b16 %v175
    %v1204 = vunpack.c.l.b16 %v176
    %v1205 = vunpack.c.l.b16 %v177
    %v1206 = vunpack.c.l.b16 %v178
    %v1207 = vunpack.c.l.b16 %v179
    %v1208 = vunpack.c.l.b16 %v180
    %v1209 = vunpack.c.l.b16 %v181
    %v1210 = vunpack.c.l.b16 %v182
    %v1211 = vunpack.c.l.b16 %v183
    %v1212 = vunpack.c.l.b16 %v184
    %v1213 = vunpack.c.l.b16 %v185
    %v1214 = vunpack.c.l.b16 %v186
    %v1215 = vunpack.c.l.b16 %v187
    %v1216 = vunpack.c.l.b16 %v188
    %v1217 = vunpack.c.l.b16 %v189
    %v1218 = vunpack.c.l.b16 %v190
    %v1219 = vunpack.c.l.b16 %v191
    %v1220 = vunpack.c.l.b16 %v192
    %v1221 = vunpack.c.l.b16 %v193
    %v1222 = vunpack.c.l.b16 %v194
    %v1223 = vunpack.c.l.b16 %v195
    %v1224 = vunpack.c.l.b16 %v196
    %v1225 = vunpack.c.l.b16 %v197
    %v1226 = vunpack.c.l.b16 %v198
    %v1227 = vunpack.c.l.b16 %v199
    %v1228 = vunpack.c.l.b16 %v200
    %v1229 = vunpack.c.l.b16 %v201
    %v1230 = vunpack.c.l.b16 %v202
    %v1231 = vunpack.c.l.b16 %v203
    %v1232 = vunpack.c.l.b16 %v204
    %v1233 = vunpack.c.l.b16 %v205
    %v1234 = vunpack.c.l.b16 %v206
    %v1235 = vunpack.c.l.b16 %v207
    %v1236 = vunpack.c.l.b16 %v208
    %v1237 = vunpack.c.l.b16 %v209
    %v1238 = vunpack.c.l.b16 %v210
    %v1239 = vunpack.c.l.b16 %v211
    %v1240 = vunpack.c.l.b16 %v212
    %v1241 = vunpack.c.l.b16 %v213
    %v1242 = vunpack.c.l.b16 %v214
    %v1243 = vunpack.c.l.b16 %v215
    %v1244 = vunpack.c.l.b16 %v216
    %v1245 = vunpack.c.l.b16 %v217
    %v1246 = vunpack.c.l.b16 %v218
    %v1247 = vunpack.c.l.b16 %v219
    %v1248 = vunpack.c.l.b16 %v220
    %v1249 = vunpack.c.l.b16 %v221
    %v1250 = vunpack.c.l.b16 %v222
    %v1251 = vunpack.c.l.b16 %v223
    %v1252 = vunpack.c.l.b16 %v224
    %v1253 = vunpack.c.l.b16 %v225
    %v1254 = vunpack.c.l.b16 %v226
    %v1255 = vunpack.c.l.b16 %v227
    %v1256 = vunpack.c.l.b16 %v228
    %v1257 = vunpack.c.l.b16 %v229
    %v1258 = vunpack.c.l.b16 %v230
    %v1259 = vunpack.c.l.b16 %v231
    %v1260 = vunpack.c.l.b16 %v232
    %v1261 = vunpack.c.l.b16 %v233
    %v1262 = vunpack.c.l.b16 %v234
    %v1263 = vunpack.c.l.b16 %v235
    %v1264 = vunpack.c.l.b16 %v236
    %v1265 = vunpack.c.l.b16 %v237
    %v1266 = vunpack.c.l.b16 %v238
    %v1267 = vunpack.c.l.b16 %v239
    %v1268 = vunpack.c.l.b16 %v240
    %v1269 = vunpack.c.l.b16 %v241
    %v1270 = vunpack.c.l.b16 %v242
    %v1271 = vunpack.c.l.b16 %v243
    %v1272 = vunpack.c.l.b16 %v244
    %v1273 = vunpack.c.l.b16 %v245
    %v1274 = vunpack.c.l.b16 %v246
    %v1275 = vunpack.c.l.b16 %v247
    %v1276 = vunpack.c.l.b16 %v248
    %v1277 = vunpack.c.l.b16 %v249
    %v1278 = vunpack.c.l.b16 %v250
    %v1279 = vunpack.c.l.b16 %v251
    %v1280 = vunpack.c.l.b16 %v252
    %v1281 = vunpack.c.l.b16 %v253
    %v1282 = vunpack.c.l.b16 %v254
    %v1283 = vunpack.c.l.b16 %v255
    %v1284 = vunpack.c.l.b16 %v256
    %v1285 = vunpack.c.l.b16 %v257
    %v1286 = vunpack.c.l.b16 %v258
    %v1287 = vunpack.c.l.b16 %v259
    %v1288 = vunpack.c.l.b16 %v260
    %v1289 = vunpack.c.l.b16 %v261
    %v1290 = vunpack.c.l.b16 %v262
    %v1291 = vunpack.c.l.b16 %v263
    %v1292 = vunpack.c.l.b16 %v264
    %v1293 = vunpack.c.l.b16 %v265
    %v1294 = vunpack.c.l.b16 %v266
    %v1295 = vunpack.c.l.b16 %v267
    %v1296 = vunpack.c.l.b16 %v268
    %v1297 = vunpack.c.l.b16 %v269
    %v1298 = vunpack.c.l.b16 %v270
    %v1299 = vunpack.c.l.b16 %v271
    %v1300 = vunpack.c.l.b16 %v272
    %v1301 = vunpack.c.l.b16 %v273
    %v1302 = vunpack.c.l.b16 %v274
    %v1303 = vunpack.c.l.b16 %v275
    %v1304 = vunpack.c.l.b16 %v276
    %v1305 = vunpack.c.l.b16 %v277
    %v1306 = vunpack.c.l.b16 %v278
    %v1307 = vunpack.c.l.b16 %v279
    %v1308 = vunpack.c.l.b16 %v280
    %v1309 = vunpack.c.l.b16 %v281
    %v1310 = vunpack.c.l.b16 %v282
    %v1311 = vunpack.c.l.b16 %v283
    %v1312 = vunpack.c.l.b16 %v284
    %v1313 = vunpack.c.l.b16 %v285
    %v1314 = vunpack.c.l.b16 %v286
    %v1315 = vunpack.c.l.b16 %v287
    %v1316 = vunpack.c.l.b16 %v288
    %v1317 = vunpack.c.l.b16 %v289
    %v1318 = vunpack.c.l.b16 %v290
    %v1319 = vunpack.c.l.b16 %v291
    %v1320 = vunpack.c.l.b16 %v292
    %v1321 = vunpack.c.l.b16 %v293
    %v1322 = vunpack.c.l.b16 %v294
    %v1323 = vunpack.c.l.b16 %v295
    %v1324 = vunpack.c.l.b16 %v296
    %v1325 = vunpack.c.l.b16 %v297
    %v1326 = vunpack.c.l.b16 %v298
    %v1327 = vunpack.c.l.b16 %v299
    %v1328 = vunpack.c.l.b16 %v300
    %v1329 = vunpack.c.l.b16 %v301
    %v1330 = vunpack.c.l.b16 %v302
    %v1331 = vunpack.c.l.b16 %v303
    %v1332 = vunpack.c.l.b16 %v304
    %v1333 = vunpack.c.l.b16 %v305
    %v1334 = vunpack.c.l.b16 %v306
    %v1335 = vunpack.c.l.b16 %v307
    %v1336 = vunpack.c.l.b16 %v308
    %v1337 = vunpack.c.l.b16 %v309
    %v1338 = vunpack.c.l.b16 %v310
    %v1339 = vunpack.c.l.b16 %v311
    %v1340 = vunpack.c.l.b16 %v312
    %v1341 = vunpack.c.l.b16 %v313
    %v1342 = vunpack.c.l.b16 %v314
    %v1343 = vunpack.c.l.b16 %v315
    %v1344 = vunpack.c.l.b16 %v316
    %v1345 = vunpack.c.l.b16 %v317
    %v1346 = vunpack.c.l.b16 %v318
    %v1347 = vunpack.c.l.b16 %v319
    %v1348 = vunpack.c.l.b16 %v320
    %v1349 = vunpack.c.l.b16 %v321
    %v1350 = vunpack.c.l.b16 %v322
    %v1351 = vunpack.c.l.b16 %v323
    %v1352 = vunpack.c.l.b16 %v324
    %v1353 = vunpack.c.l.b16 %v325
    %v1354 = vunpack.c.l.b16 %v326
    %v1355 = vunpack.c.l.b16 %v327
    %v1356 = vunpack.c.l.b16 %v328
    %v1357 = vunpack.c.l.b16 %v329
    %v1358 = vunpack.c.l.b16 %v330
    %v1359 = vunpack.c.l.b16 %v331
    %v1360 = vunpack.c.l.b16 %v332
    %v1361 = vunpack.c.l.b16 %v333
    %v1362 = vunpack.c.l.b16 %v334
    %v1363 = vunpack.c.l.b16 %v335
    %v1364 = vunpack.c.l.b16 %v336
    %v1365 = vunpack.c.l.b16 %v337
    %v1366 = vunpack.c.l.b16 %v338
    %v1367 = vunpack.c.l.b16 %v339
    %v1368 = vunpack.c.l.b16 %v340
    %v1369 = vunpack.c.l.b16 %v341
    %v1370 = vunpack.c.l.b16 %v342
    %v1371 = vunpack.c.l.b16 %v343
    %v1372 = vunpack.c.l.b16 %v344
    %v1373 = vunpack.c.l.b16 %v345
    %v1374 = vunpack.c.l.b16 %v346
    %v1375 = vunpack.c.l.b16 %v347
    %v1376 = vunpack.c.l.b16 %v348
    %v1377 = vunpack.c.l.b16 %v349
    %v1378 = vunpack.c.l.b16 %v350
    %v1379 = vunpack.c.l.b16 %v351
    %v1380 = vunpack.c.l.b16 %v352
    %v1381 = vunpack.c.l.b16 %v353
    %v1382 = vunpack.c.l.b16 %v354
    %v1383 = vunpack.c.l.b16 %v355
    %v1384 = vunpack.c.l.b16 %v356
    %v1385 = vunpack.c.l.b16 %v357
    %v1386 = vunpack.c.l.b16 %v358
    %v1387 = vunpack.c.l.b16 %v359
    %v1388 = vunpack.c.l.b16 %v360
    %v1389 = vunpack.c.l.b16 %v361
    %v1390 = vunpack.c.l.b16 %v362
    %v1391 = vunpack.c.l.b16 %v363
    %v1392 = vunpack.c.l.b16 %v364
    %v1393 = vunpack.c.l.b16 %v365
    %v1394 = vunpack.c.l.b16 %v366
    %v1395 = vunpack.c.l.b16 %v367
    %v1396 = vunpack.c.l.b16 %v368
    %v1397 = vunpack.c.l.b16 %v369
    %v1398 = vunpack.c.l.b16 %v370
    %v1399 = vunpack.c.l.b16 %v371
    %v1400 = vunpack.c.l.b16 %v372
    %v1401 = vunpack.c.l.b16 %v373
    %v1402 = vunpack.c.l.b16 %v374
    %v1403 = vunpack.c.l.b16 %v375
    %v1404 = vunpack.c.l.b16 %v376
    %v1405 = vunpack.c.l.b16 %v377
    %v1406 = vunpack.c.l.b16 %v378
    %v1407 = vunpack.c.l.b16 %v379
    %v1408 = vunpack.c.l.b16 %v380
    %v1409 = vunpack.c.l.b16 %v381
    %v1410 = vunpack.c.l.b16 %v382
    %v1411 = vunpack.c.l.b16 %v383
    %v1412 = vunpack.c.l.b16 %v384
    %v1413 = vunpack.c.l.b16 %v385
    %v1414 = vunpack.c.l.b16 %v386
    %v1415 = vunpack.c.l.b16 %v387
    %v1416 = vunpack.c.l.b16 %v388
    %v1417 = vunpack.c.l.b16 %v389
    %v1418 = vunpack.c.l.b16 %v390
    %v1419 = vunpack.c.l.b16 %v391
    %v1420 = vunpack.c.l.b16 %v392
    %v1421 = vunpack.c.l.b16 %v393
    %v1422 = vunpack.c.l.b16 %v394
    %v1423 = vunpack.c.l.b16 %v395
    %v1424 = vunpack.c.l.b16 %v396
    %v1425 = vunpack.c.l.b16 %v397
    %v1426 = vunpack.c.l.b16 %v398
    %v1427 = vunpack.c.l.b16 %v399
    %v1428 = vunpack.c.l.b16 %v400
    %v1429 = vunpack.c.l.b16 %v401
    %v1430 = vunpack.c.l.b16 %v402
    %v1431 = vunpack.c.l.b16 %v403
    %v1432 = vunpack.c.l.b16 %v404
    %v1433 = vunpack.c.l.b16 %v405
    %v1434 = vunpack.c.l.b16 %v406
    %v1435 = vunpack.c.l.b16 %v407
    %v1436 = vunpack.c.l.b16 %v408
    %v1437 = vunpack.c.l.b16 %v409
    %v1438 = vunpack.c.l.b16 %v410
    %v1439 = vunpack.c.l.b16 %v411
    %v1440 = vunpack.c.l.b16 %v412
    %v1441 = vunpack.c.l.b16 %v413
    %v1442 = vunpack.c.l.b16 %v414
    %v1443 = vunpack.c.l.b16 %v415
    %v1444 = vunpack.c.l.b16 %v416
    %v1445 = vunpack.c.l.b16 %v417
    %v1446 = vunpack.c.l.b16 %v418
    %v1447 = vunpack.c.l.b16 %v419
    %v1448 = vunpack.c.l.b16 %v420
    %v1449 = vunpack.c.l.b16 %v421
    %v1450 = vunpack.c.l.b16 %v422
    %v1451 = vunpack.c.l.b16 %v423
    %v1452 = vunpack.c.l.b16 %v424
    %v1453 = vunpack.c.l.b16 %v425
    %v1454 = vunpack.c.l.b16 %v426
    %v1455 = vunpack.c.l.b16 %v427
    %v1456 = vunpack.c.l.b16 %v428
    %v1457 = vunpack.c.l.b16 %v429
    %v1458 = vunpack.c.l.b16 %v430
    %v1459 = vunpack.c.l.b16 %v431
    %v1460 = vunpack.c.l.b16 %v432
    %v1461 = vunpack.c.l.b16 %v433
    %v1462 = vunpack.c.l.b16 %v434
    %v1463 = vunpack.c.l.b16 %v435
    %v1464 = vunpack.c.l.b16 %v436
    %v1465 = vunpack.c.l.b16 %v437
    %v1466 = vunpack.c.l.b16 %v438
    %v1467 = vunpack.c.l.b16 %v439
    %v1468 = vunpack.c.l.b16 %v440
    %v1469 = vunpack.c.l.b16 %v441
    %v1470 = vunpack.c.l.b16 %v442
    %v1471 = vunpack.c.l.b16 %v443
    %v1472 = vunpack.c.l.b16 %v444
    %v1473 = vunpack.c.l.b16 %v445
    %v1474 = vunpack.c.l.b16 %v446
    %v1475 = vunpack.c.l.b16 %v447
    %v1476 = vunpack.c.l.b16 %v448
    %v1477 = vunpack.c.l.b16 %v449
    %v1478 = vunpack.c.l.b16 %v450
    %v1479 = vunpack.c.l.b16 %v451
    %v1480 = vunpack.c.l.b16 %v452
    %v1481 = vunpack.c.l.b16 %v453
    %v1482 = vunpack.c.l.b16 %v454
    %v1483 = vunpack.c.l.b16 %v455
    %v1484 = vunpack.c.l.b16 %v456
    %v1485 = vunpack.c.l.b16 %v457
    %v1486 = vunpack.c.l.b16 %v458
    %v1487 = vunpack.c.l.b16 %v459
    %v1488 = vunpack.c.l.b16 %v460
    %v1489 = vunpack.c.l.b16 %v461
    %v1490 = vunpack.c.l.b16 %v462
    %v1491 = vunpack.c.l.b16 %v463
    %v1492 = vunpack.c.l.b16 %v464
    %v1493 = vunpack.c.l.b16 %v465
    %v1494 = vunpack.c.l.b16 %v466
    %v1495 = vunpack.c.l.b16 %v467
    %v1496 = vunpack.c.l.b16 %v468
    %v1497 = vunpack.c.l.b16 %v469
    %v1498 = vunpack.c.l.b16 %v470
    %v1499 = vunpack.c.l.b16 %v471
    %v1500 = vunpack.c.l.b16 %v472
    %v1501 = vunpack.c.l.b16 %v473
    %v1502 = vunpack.c.l.b16 %v474
    %v1503 = vunpack.c.l.b16 %v475
    %v1504 = vunpack.c.l.b16 %v476
    %v1505 = vunpack.c.l.b16 %v477
    %v1506 = vunpack.c.l.b16 %v478
    %v1507 = vunpack.c.l.b16 %v479
    %v1508 = vunpack.c.l.b16 %v480
    %v1509 = vunpack.c.l.b16 %v481
    %v1510 = vunpack.c.l.b16 %v482
    %v1511 = vunpack.c.l.b16 %v483
    %v1512 = vunpack.c.l.b16 %v484
    %v1513 = vunpack.c.l.b16 %v485
    %v1514 = vunpack.c.l.b16 %v486
    %v1515 = vunpack.c.l.b16 %v487
    %v1516 = vunpack.c.l.b16 %v488
    %v1517 = vunpack.c.l.b16 %v489
    %v1518 = vunpack.c.l.b16 %v490
    %v1519 = vunpack.c.l.b16 %v491
    %v1520 = vunpack.c.l.b16 %v492
    %v1521 = vunpack.c.l.b16 %v493
    %v1522 = vunpack.c.l.b16 %v494
    %v1523 = vunpack.c.l.b16 %v495
    %v1524 = vunpack.c.l.b16 %v496
    %v1525 = vunpack.c.l.b16 %v497
    %v1526 = vunpack.c.l.b16 %v498
    %v1527 = vunpack.c.l.b16 %v499
    %v1528 = vunpack.c.l.b16 %v500
    %v1529 = vunpack.c.l.b16 %v501
    %v1530 = vunpack.c.l.b16 %v502
    %v1531 = vunpack.c.l.b16 %v503
    %v1532 = vunpack.c.l.b16 %v504
    %v1533 = vunpack.c.l.b16 %v505
    %v1534 = vunpack.c.l.b16 %v506
    %v1535 = vunpack.c.l.b16 %v507
    %v1536 = vunpack.c.l.b16 %v508
    %v1537 = vunpack.c.l.b16 %v509
    %v1538 = vunpack.c.l.b16 %v510
    %v1539 = vunpack.c.l.b16 %v511
    %v1540 = vunpack.c.l.b16 %v512
    %v1541 = vunpack.c.l.b16 %v513
    %v1542 = vunpack.c.l.b16 %v514
    %v1543 = vunpack.c.l.b16 %v515
    %v1544 = vunpack.c.l.b16 %v516
    %v1545 = vunpack.c.l.b16 %v517
    %v1546 = vunpack.c.l.b16 %v518
    %v1547 = vunpack.c.l.b16 %v519
    %v1548 = vunpack.c.l.b16 %v520
    %v1549 = vunpack.c.l.b16 %v521
    %v1550 = vunpack.c.l.b16 %v522
    %v1551 = vunpack.c.l.b16 %v523
    %v1552 = vunpack.c.l.b16 %v524
    %v1553 = vunpack.c.l.b16 %v525
    %v1554 = vunpack.c.l.b16 %v526
    %v1555 = vunpack.c.l.b16 %v527
    %v1556 = vunpack.c.l.b16 %v528
    %v1557 = vunpack.c.l.b16 %v529
    %v1558 = vunpack.c.l.b16 %v530
    %v1559 = vpack.c.b16 %v1048, %v1047
    %v1560 = vpack.c.b16 %v1050, %v1049
    %v1561 = vpack.c.b16 %v1052, %v1051
    %v1562 = vpack.c.b16 %v1054, %v1053
    %v1563 = vpack.c.b16 %v1056, %v1055
    %v1564 = vpack.c.b16 %v1058, %v1057
    %v1565 = vpack.c.b16 %v1060, %v1059
    %v1566 = vpack.c.b16 %v1062, %v1061
    %v1567 = vpack.c.b16 %v1064, %v1063
    %v1568 = vpack.c.b16 %v1066, %v1065
    %v1569 = vpack.c.b16 %v1068, %v1067
    %v1570 = vpack.c.b16 %v1070, %v1069
    %v1571 = vpack.c.b16 %v1072, %v1071
    %v1572 = vpack.c.b16 %v1074, %v1073
    %v1573 = vpack.c.b16 %v1076, %v1075
    %v1574 = vpack.c.b16 %v1078, %v1077
    %v1575 = vpack.c.b16 %v1080, %v1079
    %v1576 = vpack.c.b16 %v1082, %v1081
    %v1577 = vpack.c.b16 %v1084, %v1083
    %v1578 = vpack.c.b16 %v1086, %v1085
    %v1579 = vpack.c.b16 %v1088, %v1087
    %v1580 = vpack.c.b16 %v1090, %v1089
    %v1581 = vpack.c.b16 %v1092, %v1091
    %v1582 = vpack.c.b16 %v1094, %v1093
    %v1583 = vpack.c.b16 %v1096, %v1095
    %v1584 = vpack.c.b16 %v1098, %v1097
    %v1585 = vpack.c.b16 %v1100, %v1099
    %v1586 = vpack.c.b16 %v1102, %v1101
    %v1587 = vpack.c.b16 %v1104, %v1103
    %v1588 = vpack.c.b16 %v1106, %v1105
    %v1589 = vpack.c.b16 %v1108, %v1107
    %v1590 = vpack.c.b16 %v1110, %v1109
    %v1591 = vpack.c.b16 %v1112, %v1111
    %v1592 = vpack.c.b16 %v1114, %v1113
    %v1593 = vpack.c.b16 %v1116, %v1115
    %v1594 = vpack.c.b16 %v1118, %v1117
    %v1595 = vpack.c.b16 %v1120, %v1119
    %v1596 = vpack.c.b16 %v1122, %v1121
    %v1597 = vpack.c.b16 %v1124, %v1123
    %v1598 = vpack.c.b16 %v1126, %v1125
    %v1599 = vpack.c.b16 %v1128, %v1127
    %v1600 = vpack.c.b16 %v1130, %v1129
    %v1601 = vpack.c.b16 %v1132, %v1131
    %v1602 = vpack.c.b16 %v1134, %v1133
    %v1603 = vpack.c.b16 %v1136, %v1135
    %v1604 = vpack.c.b16 %v1138, %v1137
    %v1605 = vpack.c.b16 %v1140, %v1139
    %v1606 = vpack.c.b16 %v1142, %v1141
    %v1607 = vpack.c.b16 %v1144, %v1143
    %v1608 = vpack.c.b16 %v1146, %v1145
    %v1609 = vpack.c.b16 %v1148, %v1147
    %v1610 = vpack.c.b16 %v1150, %v1149
    %v1611 = vpack.c.b16 %v1152, %v1151
    %v1612 = vpack.c.b16 %v1154, %v1153
    %v1613 = vpack.c.b16 %v1156, %v1155
    %v1614 = vpack.c.b16 %v1158, %v1157
    %v1615 = vpack.c.b16 %v1160, %v1159
    %v1616 = vpack.c.b16 %v1162, %v1161
    %v1617 = vpack.c.b16 %v1164, %v1163
    %v1618 = vpack.c.b16 %v1166, %v1165
    %v1619 = vpack.c.b16 %v1168, %v1167
    %v1620 = vpack.c.b16 %v1170, %v1169
    %v1621 = vpack.c.b16 %v1172, %v1171
    %v1622 = vpack.c.b16 %v1174, %v1173
    %v1623 = vpack.c.b16 %v1176, %v1175
    %v1624 = vpack.c.b16 %v1178, %v1177
    %v1625 = vpack.c.b16 %v1180, %v1179
    %v1626 = vpack.c.b16 %v1182, %v1181
    %v1627 = vpack.c.b16 %v1184, %v1183
    %v1628 = vpack.c.b16 %v1186, %v1185
    %v1629 = vpack.c.b16 %v1188, %v1187
    %v1630 = vpack.c.b16 %v1190, %v1189
    %v1631 = vpack.c.b16 %v1192, %v1191
    %v1632 = vpack.c.b16 %v1194, %v1193
    %v1633 = vpack.c.b16 %v1196, %v1195
    %v1634 = vpack.c.b16 %v1198, %v1197
    %v1635 = vpack.c.b16 %v1200, %v1199
    %v1636 = vpack.c.b16 %v1202, %v1201
    %v1637 = vpack.c.b16 %v1204, %v1203
    %v1638 = vpack.c.b16 %v1206, %v1205
    %v1639 = vpack.c.b16 %v1208, %v1207
    %v1640 = vpack.c.b16 %v1210, %v1209
    %v1641 = vpack.c.b16 %v1212, %v1211
    %v1642 = vpack.c.b16 %v1214, %v1213
    %v1643 = vpack.c.b16 %v1216, %v1215
    %v1644 = vpack.c.b16 %v1218, %v1217
    %v1645 = vpack.c.b16 %v1220, %v1219
    %v1646 = vpack.c.b16 %v1222, %v1221
    %v1647 = vpack.c.b16 %v1224, %v1223
    %v1648 = vpack.c.b16 %v1226, %v1225
    %v1649 = vpack.c.b16 %v1228, %v1227
    %v1650 = vpack.c.b16 %v1230, %v1229
    %v1651 = vpack.c.b16 %v1232, %v1231
    %v1652 = vpack.c.b16 %v1234, %v1233
    %v1653 = vpack.c.b16 %v1236, %v1235
    %v1654 = vpack.c.b16 %v1238, %v1237
    %v1655 = vpack.c.b16 %v1240, %v1239
    %v1656 = vpack.c.b16 %v1242, %v1241
    %v1657 = vpack.c.b16 %v1244, %v1243
    %v1658 = vpack.c.b16 %v1246, %v1245
    %v1659 = vpack.c.b16 %v1248, %v1247
    %v1660 = vpack.c.b16 %v1250, %v1249
    %v1661 = vpack.c.b16 %v1252, %v1251
    %v1662 = vpack.c.b16 %v1254, %v1253
    %v1663 = vpack.c.b16 %v1256, %v1255
    %v1664 = vpack.c.b16 %v1258, %v1257
    %v1665 = vpack.c.b16 %v1260, %v1259
    %v1666 = vpack.c.b16 %v1262, %v1261
    %v1667 = vpack.c.b16 %v1264, %v1263
    %v1668 = vpack.c.b16 %v1266, %v1265
    %v1669 = vpack.c.b16 %v1268, %v1267
    %v1670 = vpack.c.b16 %v1270, %v1269
    %v1671 = vpack.c.b16 %v1272, %v1271
    %v1672 = vpack.c.b16 %v1274, %v1273
    %v1673 = vpack.c.b16 %v1276, %v1275
    %v1674 = vpack.c.b16 %v1278, %v1277
    %v1675 = vpack.c.b16 %v1280, %v1279
    %v1676 = vpack.c.b16 %v1282, %v1281
    %v1677 = vpack.c.b16 %v1284, %v1283
    %v1678 = vpack.c.b16 %v1286, %v1285
    %v1679 = vpack.c.b16 %v1288, %v1287
    %v1680 = vpack.c.b16 %v1290, %v1289
    %v1681 = vpack.c.b16 %v1292, %v1291
    %v1682 = vpack.c.b16 %v1294, %v1293
    %v1683 = vpack.c.b16 %v1296, %v1295
    %v1684 = vpack.c.b16 %v1298, %v1297
    %v1685 = vpack.c.b16 %v1300, %v1299
    %v1686 = vpack.c.b16 %v1302, %v1301
    %v1687 = vpack.c.b16 %v1304, %v1303
    %v1688 = vpack.c.b16 %v1306, %v1305
    %v1689 = vpack.c.b16 %v1308, %v1307
    %v1690 = vpack.c.b16 %v1310, %v1309
    %v1691 = vpack.c.b16 %v1312, %v1311
    %v1692 = vpack.c.b16 %v1314, %v1313
    %v1693 = vpack.c.b16 %v1316, %v1315
    %v1694 = vpack.c.b16 %v1318, %v1317
    %v1695 = vpack.c.b16 %v1320, %v1319
    %v1696 = vpack.c.b16 %v1322, %v1321
    %v1697 = vpack.c.b16 %v1324, %v1323
    %v1698 = vpack.c.b16 %v1326, %v1325
    %v1699 = vpack.c.b16 %v1328, %v1327
    %v1700 = vpack.c.b16 %v1330, %v1329
    %v1701 = vpack.c.b16 %v1332, %v1331
    %v1702 = vpack.c.b16 %v1334, %v1333
    %v1703 = vpack.c.b16 %v1336, %v1335
    %v1704 = vpack.c.b16 %v1338, %v1337
    %v1705 = vpack.c.b16 %v1340, %v1339
    %v1706 = vpack.c.b16 %v1342, %v1341
    %v1707 = vpack.c.b16 %v1344, %v1343
    %v1708 = vpack.c.b16 %v1346, %v1345
    %v1709 = vpack.c.b16 %v1348, %v1347
    %v1710 = vpack.c.b16 %v1350, %v1349
    %v1711 = vpack.c.b16 %v1352, %v1351
    %v1712 = vpack.c.b16 %v1354, %v1353
    %v1713 = vpack.c.b16 %v1356, %v1355
    %v1714 = vpack.c.b16 %v1358, %v1357
    %v1715 = vpack.c.b16 %v1360, %v1359
    %v1716 = vpack.c.b16 %v1362, %v1361
    %v1717 = vpack.c.b16 %v1364, %v1363
    %v1718 = vpack.c.b16 %v1366, %v1365
    %v1719 = vpack.c.b16 %v1368, %v1367
    %v1720 = vpack.c.b16 %v1370, %v1369
    %v1721 = vpack.c.b16 %v1372, %v1371
    %v1722 = vpack.c.b16 %v1374, %v1373
    %v1723 = vpack.c.b16 %v1376, %v1375
    %v1724 = vpack.c.b16 %v1378, %v1377
    %v1725 = vpack.c.b16 %v1380, %v1379
    %v1726 = vpack.c.b16 %v1382, %v1381
    %v1727 = vpack.c.b16 %v1384, %v1383
    %v1728 = vpack.c.b16 %v1386, %v1385
    %v1729 = vpack.c.b16 %v1388, %v1387
    %v1730 = vpack.c.b16 %v1390, %v1389
    %v1731 = vpack.c.b16 %v1392, %v1391
    %v1732 = vpack.c.b16 %v1394, %v1393
    %v1733 = vpack.c.b16 %v1396, %v1395
    %v1734 = vpack.c.b16 %v1398, %v1397
    %v1735 = vpack.c.b16 %v1400, %v1399
    %v1736 = vpack.c.b16 %v1402, %v1401
    %v1737 = vpack.c.b16 %v1404, %v1403
    %v1738 = vpack.c.b16 %v1406, %v1405
    %v1739 = vpack.c.b16 %v1408, %v1407
    %v1740 = vpack.c.b16 %v1410, %v1409
    %v1741 = vpack.c.b16 %v1412, %v1411
    %v1742 = vpack.c.b16 %v1414, %v1413
    %v1743 = vpack.c.b16 %v1416, %v1415
    %v1744 = vpack.c.b16 %v1418, %v1417
    %v1745 = vpack.c.b16 %v1420, %v1419
    %v1746 = vpack.c.b16 %v1422, %v1421
    %v1747 = vpack.c.b16 %v1424, %v1423
    %v1748 = vpack.c.b16 %v1426, %v1425
    %v1749 = vpack.c.b16 %v1428, %v1427
    %v1750 = vpack.c.b16 %v1430, %v1429
    %v1751 = vpack.c.b16 %v1432, %v1431
    %v1752 = vpack.c.b16 %v1434, %v1433
    %v1753 = vpack.c.b16 %v1436, %v1435
    %v1754 = vpack.c.b16 %v1438, %v1437
    %v1755 = vpack.c.b16 %v1440, %v1439
    %v1756 = vpack.c.b16 %v1442, %v1441
    %v1757 = vpack.c.b16 %v1444, %v1443
    %v1758 = vpack.c.b16 %v1446, %v1445
    %v1759 = vpack.c.b16 %v1448, %v1447
    %v1760 = vpack.c.b16 %v1450, %v1449
    %v1761 = vpack.c.b16 %v1452, %v1451
    %v1762 = vpack.c.b16 %v1454, %v1453
    %v1763 = vpack.c.b16 %v1456, %v1455
    %v1764 = vpack.c.b16 %v1458, %v1457
    %v1765 = vpack.c.b16 %v1460, %v1459
    %v1766 = vpack.c.b16 %v1462, %v1461
    %v1767 = vpack.c.b16 %v1464, %v1463
    %v1768 = vpack.c.b16 %v1466, %v1465
    %v1769 = vpack.c.b16 %v1468, %v1467
    %v1770 = vpack.c.b16 %v1470, %v1469
    %v1771 = vpack.c.b16 %v1472, %v1471
    %v1772 = vpack.c.b16 %v1474, %v1473
    %v1773 = vpack.c.b16 %v1476, %v1475
    %v1774 = vpack.c.b16 %v1478, %v1477
    %v1775 = vpack.c.b16 %v1480, %v1479
    %v1776 = vpack.c.b16 %v1482, %v1481
    %v1777 = vpack.c.b16 %v1484, %v1483
    %v1778 = vpack.c.b16 %v1486, %v1485
    %v1779 = vpack.c.b16 %v1488, %v1487
    %v1780 = vpack.c.b16 %v1490, %v1489
    %v1781 = vpack.c.b16 %v1492, %v1491
    %v1782 = vpack.c.b16 %v1494, %v1493
    %v1783 = vpack.c.b16 %v1496, %v1495
    %v1784 = vpack.c.b16 %v1498, %v1497
    %v1785 = vpack.c.b16 %v1500, %v1499
    %v1786 = vpack.c.b16 %v1502, %v1501
    %v1787 = vpack.c.b16 %v1504, %v1503
    %v1788 = vpack.c.b16 %v1506, %v1505
    %v1789 = vpack.c.b16 %v1508, %v1507
    %v1790 = vpack.c.b16 %v1510, %v1509
    %v1791 = vpack.c.b16 %v1512, %v1511
    %v1792 = vpack.c.b16 %v1514, %v1513
    %v1793 = vpack.c.b16 %v1516, %v1515
    %v1794 = vpack.c.b16 %v1518, %v1517
    %v1795 = vpack.c.b16 %v1520, %v1519
    %v1796 = vpack.c.b16 %v1522, %v1521
    %v1797 = vpack.c.b16 %v1524, %v1523
    %v1798 = vpack.c.b16 %v1526, %v1525
    %v1799 = vpack.c.b16 %v1528, %v1527
    %v1800 = vpack.c.b16 %v1530, %v1529
    %v1801 = vpack.c.b16 %v1532, %v1531
    %v1802 = vpack.c.b16 %v1534, %v1533
    %v1803 = vpack.c.b16 %v1536, %v1535
    %v1804 = vpack.c.b16 %v1538, %v1537
    %v1805 = vpack.c.b16 %v1540, %v1539
    %v1806 = vpack.c.b16 %v1542, %v1541
    %v1807 = vpack.c.b16 %v1544, %v1543
    %v1808 = vpack.c.b16 %v1546, %v1545
    %v1809 = vpack.c.b16 %v1548, %v1547
    %v1810 = vpack.c.b16 %v1550, %v1549
    %v1811 = vpack.c.b16 %v1552, %v1551
    %v1812 = vpack.c.b16 %v1554, %v1553
    %v1813 = vpack.c.b16 %v1556, %v1555
    %v1814 = vpack.c.b16 %v1558, %v1557
    %v1819 = vunpack.c.l.b16 %v531
    %v1820 = vunpack.c.l.b16 %v532
    %v1821 = vunpack.c.l.b16 %v533
    %v1822 = vunpack.c.l.b16 %v534
    %v1823 = vpack.c.b16 %v1820, %v1819
    %v1824 = vpack.c.b16 %v1822, %v1821
    %vm1826 = vcmask 220160
    %v1828 = vsel %vm1826, %v1559, 0
    %v1831 = vsel %vm1826, %v1560, 0
    %v1834 = vsel %vm1826, %v1561, 0
    %v1837 = vsel %vm1826, %v1562, 0
    %v1840 = vsel %vm1826, %v1563, 0
    %v1843 = vsel %vm1826, %v1564, 0
    %v1846 = vsel %vm1826, %v1565, 0
    %v1849 = vsel %vm1826, %v1566, 0
    %v1852 = vsel %vm1826, %v1567, 0
    %v1855 = vsel %vm1826, %v1568, 0
    %v1858 = vsel %vm1826, %v1569, 0
    %v1861 = vsel %vm1826, %v1570, 0
    %v1864 = vsel %vm1826, %v1571, 0
    %v1867 = vsel %vm1826, %v1572, 0
    %v1870 = vsel %vm1826, %v1573, 0
    %v1873 = vsel %vm1826, %v1574, 0
    %v1876 = vsel %vm1826, %v1575, 0
    %v1879 = vsel %vm1826, %v1576, 0
    %v1882 = vsel %vm1826, %v1577, 0
    %v1885 = vsel %vm1826, %v1578, 0
    %v1888 = vsel %vm1826, %v1579, 0
    %v1891 = vsel %vm1826, %v1580, 0
    %v1894 = vsel %vm1826, %v1581, 0
    %v1897 = vsel %vm1826, %v1582, 0
    %v1900 = vsel %vm1826, %v1583, 0
    %v1903 = vsel %vm1826, %v1584, 0
    %v1906 = vsel %vm1826, %v1585, 0
    %v1909 = vsel %vm1826, %v1586, 0
    %v1912 = vsel %vm1826, %v1587, 0
    %v1915 = vsel %vm1826, %v1588, 0
    %v1918 = vsel %vm1826, %v1589, 0
    %v1921 = vsel %vm1826, %v1590, 0
    %v1924 = vsel %vm1826, %v1591, 0
    %v1927 = vsel %vm1826, %v1592, 0
    %v1930 = vsel %vm1826, %v1593, 0
    %v1933 = vsel %vm1826, %v1594, 0
    %v1936 = vsel %vm1826, %v1595, 0
    %v1939 = vsel %vm1826, %v1596, 0
    %v1942 = vsel %vm1826, %v1597, 0
    %v1945 = vsel %vm1826, %v1598, 0
    %v1948 = vsel %vm1826, %v1599, 0
    %v1951 = vsel %vm1826, %v1600, 0
    %v1954 = vsel %vm1826, %v1601, 0
    %v1957 = vsel %vm1826, %v1602, 0
    %v1960 = vsel %vm1826, %v1603, 0
    %v1963 = vsel %vm1826, %v1604, 0
    %v1966 = vsel %vm1826, %v1605, 0
    %v1969 = vsel %vm1826, %v1606, 0
    %v1972 = vsel %vm1826, %v1607, 0
    %v1975 = vsel %vm1826, %v1608, 0
    %v1978 = vsel %vm1826, %v1609, 0
    %v1981 = vsel %vm1826, %v1610, 0
    %v1984 = vsel %vm1826, %v1611, 0
    %v1987 = vsel %vm1826, %v1612, 0
    %v1990 = vsel %vm1826, %v1613, 0
    %v1993 = vsel %vm1826, %v1614, 0
    %v1996 = vsel %vm1826, %v1615, 0
    %v1999 = vsel %vm1826, %v1616, 0
    %v2002 = vsel %vm1826, %v1617, 0
    %v2005 = vsel %vm1826, %v1618, 0
    %v2008 = vsel %vm1826, %v1619, 0
    %v2011 = vsel %vm1826, %v1620, 0
    %v2014 = vsel %vm1826, %v1621, 0
    %v2017 = vsel %vm1826, %v1622, 0
    %v2020 = vsel %vm1826, %v1623, 0
    %v2023 = vsel %vm1826, %v1624, 0
    %v2026 = vsel %vm1826, %v1625, 0
    %v2029 = vsel %vm1826, %v1626, 0
    %v2032 = vsel %vm1826, %v1627, 0
    %v2035 = vsel %vm1826, %v1628, 0
    %v2038 = vsel %vm1826, %v1629, 0
    %v2041 = vsel %vm1826, %v1630, 0
    %v2044 = vsel %vm1826, %v1631, 0
    %v2047 = vsel %vm1826, %v1632, 0
    %v2050 = vsel %vm1826, %v1633, 0
    %v2053 = vsel %vm1826, %v1634, 0
    %v2056 = vsel %vm1826, %v1635, 0
    %v2059 = vsel %vm1826, %v1636, 0
    %v2062 = vsel %vm1826, %v1637, 0
    %v2065 = vsel %vm1826, %v1638, 0
    %v2068 = vsel %vm1826, %v1639, 0
    %v2071 = vsel %vm1826, %v1640, 0
    %v2074 = vsel %vm1826, %v1641, 0
    %v2077 = vsel %vm1826, %v1642, 0
    %v2080 = vsel %vm1826, %v1643, 0
    %v2083 = vsel %vm1826, %v1644, 0
    %v2086 = vsel %vm1826, %v1645, 0
    %v2089 = vsel %vm1826, %v1646, 0
    %v2092 = vsel %vm1826, %v1647, 0
    %v2095 = vsel %vm1826, %v1648, 0
    %v2098 = vsel %vm1826, %v1649, 0
    %v2101 = vsel %vm1826, %v1650, 0
    %v2104 = vsel %vm1826, %v1651, 0
    %v2107 = vsel %vm1826, %v1652, 0
    %v2110 = vsel %vm1826, %v1653, 0
    %v2113 = vsel %vm1826, %v1654, 0
    %v2116 = vsel %vm1826, %v1655, 0
    %v2119 = vsel %vm1826, %v1656, 0
    %v2122 = vsel %vm1826, %v1657, 0
    %v2125 = vsel %vm1826, %v1658, 0
    %v2128 = vsel %vm1826, %v1659, 0
    %v2131 = vsel %vm1826, %v1660, 0
    %v2134 = vsel %vm1826, %v1661, 0
    %v2137 = vsel %vm1826, %v1662, 0
    %v2140 = vsel %vm1826, %v1663, 0
    %v2143 = vsel %vm1826, %v1664, 0
    %v2146 = vsel %vm1826, %v1665, 0
    %v2149 = vsel %vm1826, %v1666, 0
    %v2152 = vsel %vm1826, %v1667, 0
    %v2155 = vsel %vm1826, %v1668, 0
    %v2158 = vsel %vm1826, %v1669, 0
    %v2161 = vsel %vm1826, %v1670, 0
    %v2164 = vsel %vm1826, %v1671, 0
    %v2167 = vsel %vm1826, %v1672, 0
    %v2170 = vsel %vm1826, %v1673, 0
    %v2173 = vsel %vm1826, %v1674, 0
    %v2176 = vsel %vm1826, %v1675, 0
    %v2179 = vsel %vm1826, %v1676, 0
    %v2182 = vsel %vm1826, %v1677, 0
    %v2185 = vsel %vm1826, %v1678, 0
    %v2188 = vsel %vm1826, %v1679, 0
    %v2191 = vsel %vm1826, %v1680, 0
    %v2194 = vsel %vm1826, %v1681, 0
    %v2197 = vsel %vm1826, %v1682, 0
    %v2200 = vsel %vm1826, %v1683, 0
    %v2203 = vsel %vm1826, %v1684, 0
    %v2206 = vsel %vm1826, %v1685, 0
    %v2209 = vsel %vm1826, %v1686, 0
    %v2212 = vsel %vm1826, %v1687, 0
    %v2215 = vsel %vm1826, %v1688, 0
    %v2218 = vsel %vm1826, %v1689, 0
    %v2221 = vsel %vm1826, %v1690, 0
    %v2224 = vsel %vm1826, %v1691, 0
    %v2227 = vsel %vm1826, %v1692, 0
    %v2230 = vsel %vm1826, %v1693, 0
    %v2233 = vsel %vm1826, %v1694, 0
    %v2236 = vsel %vm1826, %v1695, 0
    %v2239 = vsel %vm1826, %v1696, 0
    %v2242 = vsel %vm1826, %v1697, 0
    %v2245 = vsel %vm1826, %v1698, 0
    %v2248 = vsel %vm1826, %v1699, 0
    %v2251 = vsel %vm1826, %v1700, 0
    %v2254 = vsel %vm1826, %v1701, 0
    %v2257 = vsel %vm1826, %v1702, 0
    %v2260 = vsel %vm1826, %v1703, 0
    %v2263 = vsel %vm1826, %v1704, 0
    %v2266 = vsel %vm1826, %v1705, 0
    %v2269 = vsel %vm1826, %v1706, 0
    %v2272 = vsel %vm1826, %v1707, 0
    %v2275 = vsel %vm1826, %v1708, 0
    %v2278 = vsel %vm1826, %v1709, 0
    %v2281 = vsel %vm1826, %v1710, 0
    %v2284 = vsel %vm1826, %v1711, 0
    %v2287 = vsel %vm1826, %v1712, 0
    %v2290 = vsel %vm1826, %v1713, 0
    %v2293 = vsel %vm1826, %v1714, 0
    %v2296 = vsel %vm1826, %v1715, 0
    %v2299 = vsel %vm1826, %v1716, 0
    %v2302 = vsel %vm1826, %v1717, 0
    %v2305 = vsel %vm1826, %v1718, 0
    %v2308 = vsel %vm1826, %v1719, 0
    %v2311 = vsel %vm1826, %v1720, 0
    %v2314 = vsel %vm1826, %v1721, 0
    %v2317 = vsel %vm1826, %v1722, 0
    %v2320 = vsel %vm1826, %v1723, 0
    %v2323 = vsel %vm1826, %v1724, 0
    %v2326 = vsel %vm1826, %v1725, 0
    %v2329 = vsel %vm1826, %v1726, 0
    %v2332 = vsel %vm1826, %v1727, 0
    %v2335 = vsel %vm1826, %v1728, 0
    %v2338 = vsel %vm1826, %v1729, 0
    %v2341 = vsel %vm1826, %v1730, 0
    %v2344 = vsel %vm1826, %v1731, 0
    %v2347 = vsel %vm1826, %v1732, 0
    %v2350 = vsel %vm1826, %v1733, 0
    %v2353 = vsel %vm1826, %v1734, 0
    %v2356 = vsel %vm1826, %v1735, 0
    %v2359 = vsel %vm1826, %v1736, 0
    %v2362 = vsel %vm1826, %v1737, 0
    %v2365 = vsel %vm1826, %v1738, 0
    %v2368 = vsel %vm1826, %v1739, 0
    %v2371 = vsel %vm1826, %v1740, 0
    %v2374 = vsel %vm1826, %v1741, 0
    %v2377 = vsel %vm1826, %v1742, 0
    %v2380 = vsel %vm1826, %v1743, 0
    %v2383 = vsel %vm1826, %v1744, 0
    %v2386 = vsel %vm1826, %v1745, 0
    %v2389 = vsel %vm1826, %v1746, 0
    %v2392 = vsel %vm1826, %v1747, 0
    %v2395 = vsel %vm1826, %v1748, 0
    %v2398 = vsel %vm1826, %v1749, 0
    %v2401 = vsel %vm1826, %v1750, 0
    %v2404 = vsel %vm1826, %v1751, 0
    %v2407 = vsel %vm1826, %v1752, 0
    %v2410 = vsel %vm1826, %v1753, 0
    %v2413 = vsel %vm1826, %v1754, 0
    %v2416 = vsel %vm1826, %v1755, 0
    %v2419 = vsel %vm1826, %v1756, 0
    %v2422 = vsel %vm1826, %v1757, 0
    %v2425 = vsel %vm1826, %v1758, 0
    %v2428 = vsel %vm1826, %v1759, 0
    %v2431 = vsel %vm1826, %v1760, 0
    %v2434 = vsel %vm1826, %v1761, 0
    %v2437 = vsel %vm1826, %v1762, 0
    %v2440 = vsel %vm1826, %v1763, 0
    %v2443 = vsel %vm1826, %v1764, 0
    %v2446 = vsel %vm1826, %v1765, 0
    %v2449 = vsel %vm1826, %v1766, 0
    %v2452 = vsel %vm1826, %v1767, 0
    %v2455 = vsel %vm1826, %v1768, 0
    %v2458 = vsel %vm1826, %v1769, 0
    %v2461 = vsel %vm1826, %v1770, 0
    %v2464 = vsel %vm1826, %v1771, 0
    %v2467 = vsel %vm1826, %v1772, 0
    %v2470 = vsel %vm1826, %v1773, 0
    %v2473 = vsel %vm1826, %v1774, 0
    %v2476 = vsel %vm1826, %v1775, 0
    %v2479 = vsel %vm1826, %v1776, 0
    %v2482 = vsel %vm1826, %v1777, 0
    %v2485 = vsel %vm1826, %v1778, 0
    %v2488 = vsel %vm1826, %v1779, 0
    %v2491 = vsel %vm1826, %v1780, 0
    %v2494 = vsel %vm1826, %v1781, 0
    %v2497 = vsel %vm1826, %v1782, 0
    %v2500 = vsel %vm1826, %v1783, 0
    %v2503 = vsel %vm1826, %v1784, 0
    %v2506 = vsel %vm1826, %v1785, 0
    %v2509 = vsel %vm1826, %v1786, 0
    %v2512 = vsel %vm1826, %v1787, 0
    %v2515 = vsel %vm1826, %v1788, 0
    %v2518 = vsel %vm1826, %v1789, 0
    %v2521 = vsel %vm1826, %v1790, 0
    %v2524 = vsel %vm1826, %v1791, 0
    %v2527 = vsel %vm1826, %v1792, 0
    %v2530 = vsel %vm1826, %v1793, 0
    %v2533 = vsel %vm1826, %v1794, 0
    %v2536 = vsel %vm1826, %v1795, 0
    %v2539 = vsel %vm1826, %v1796, 0
    %v2542 = vsel %vm1826, %v1797, 0
    %v2545 = vsel %vm1826, %v1798, 0
    %v2548 = vsel %vm1826, %v1799, 0
    %v2551 = vsel %vm1826, %v1800, 0
    %v2554 = vsel %vm1826, %v1801, 0
    %v2557 = vsel %vm1826, %v1802, 0
    %v2560 = vsel %vm1826, %v1803, 0
    %v2563 = vsel %vm1826, %v1804, 0
    %v2566 = vsel %vm1826, %v1805, 0
    %v2569 = vsel %vm1826, %v1806, 0
    %v2572 = vsel %vm1826, %v1807, 0
    %v2575 = vsel %vm1826, %v1808, 0
    %v2578 = vsel %vm1826, %v1809, 0
    %v2581 = vsel %vm1826, %v1810, 0
    %v2584 = vsel %vm1826, %v1811, 0
    %v2587 = vsel %vm1826, %v1812, 0
    %v2590 = vsel %vm1826, %v1813, 0
    %v2593 = vsel %vm1826, %v1814, 0
    %vm2595 = vcmask 1044480
    %vm2596 = vcmask 1045504
    %v2597 = vsel %vm2595, 4294967295, 65535
    %v2598 = vsel %vm2596, %v2597, 0
    %v2600 = vand.u32 %v1824, %v2598
    %2602 = vmatpush.bf16.msra.mxu0 0
    %2603 = vmatpush.bf16.msra.mxu0 0
    %2604 = vmatpush.bf16.msra.mxu0 0
    %2605 = vmatpush.bf16.msra.mxu0 0
    %2606 = vmatpush.bf16.msra.mxu0 0
    %2607 = vmatpush.bf16.msra.mxu0 0
    %2608 = vmatpush.bf16.msra.mxu0 %v2600
    %2609 = vmatpush.bf16.msra.mxu0 %v1823
    %2610 = vmatmul.bf16.gmra.mxu0 %v1828
    %v2611 = vpop.f32.mrf.mxu0
    %v2612 = vadd.f32 0.0, %v2611
    %v2613 = vpop.f32.mrf.mxu0
    %v2614 = vadd.f32 0.0, %v2613
    %2615 = vmatmul.bf16.gmra.mxu0 %v1831
    %v2616 = vpop.f32.mrf.mxu0
    %v2617 = vadd.f32 0.0, %v2616
    %v2618 = vpop.f32.mrf.mxu0
    %v2619 = vadd.f32 0.0, %v2618
    %2620 = vmatmul.bf16.gmra.mxu0 %v1834
    %v2621 = vpop.f32.mrf.mxu0
    %v2622 = vadd.f32 0.0, %v2621
    %v2623 = vpop.f32.mrf.mxu0
    %v2624 = vadd.f32 0.0, %v2623
    %2625 = vmatmul.bf16.gmra.mxu0 %v1837
    %v2626 = vpop.f32.mrf.mxu0
    %v2627 = vadd.f32 0.0, %v2626
    %v2628 = vpop.f32.mrf.mxu0
    %v2629 = vadd.f32 0.0, %v2628
    %2630 = vmatmul.bf16.gmra.mxu0 %v1840
    %v2631 = vpop.f32.mrf.mxu0
    %v2632 = vadd.f32 0.0, %v2631
    %v2633 = vpop.f32.mrf.mxu0
    %v2634 = vadd.f32 0.0, %v2633
    %2635 = vmatmul.bf16.gmra.mxu0 %v1843
    %v2636 = vpop.f32.mrf.mxu0
    %v2637 = vadd.f32 0.0, %v2636
    %v2638 = vpop.f32.mrf.mxu0
    %v2639 = vadd.f32 0.0, %v2638
    %2640 = vmatmul.bf16.gmra.mxu0 %v1846
    %v2641 = vpop.f32.mrf.mxu0
    %v2642 = vadd.f32 0.0, %v2641
    %v2643 = vpop.f32.mrf.mxu0
    %v2644 = vadd.f32 0.0, %v2643
    %2645 = vmatmul.bf16.gmra.mxu0 %v1849
    %v2646 = vpop.f32.mrf.mxu0
    %v2647 = vadd.f32 0.0, %v2646
    %v2648 = vpop.f32.mrf.mxu0
    %v2649 = vadd.f32 0.0, %v2648
    %2650 = vmatmul.bf16.gmra.mxu0 %v1852
    %v2651 = vpop.f32.mrf.mxu0
    %v2652 = vadd.f32 0.0, %v2651
    %v2653 = vpop.f32.mrf.mxu0
    %v2654 = vadd.f32 0.0, %v2653
    %2655 = vmatmul.bf16.gmra.mxu0 %v1855
    %v2656 = vpop.f32.mrf.mxu0
    %v2657 = vadd.f32 0.0, %v2656
    %v2658 = vpop.f32.mrf.mxu0
    %v2659 = vadd.f32 0.0, %v2658
    %2660 = vmatmul.bf16.gmra.mxu0 %v1858
    %v2661 = vpop.f32.mrf.mxu0
    %v2662 = vadd.f32 0.0, %v2661
    %v2663 = vpop.f32.mrf.mxu0
    %v2664 = vadd.f32 0.0, %v2663
    %2665 = vmatmul.bf16.gmra.mxu0 %v1861
    %v2666 = vpop.f32.mrf.mxu0
    %v2667 = vadd.f32 0.0, %v2666
    %v2668 = vpop.f32.mrf.mxu0
    %v2669 = vadd.f32 0.0, %v2668
    %2670 = vmatmul.bf16.gmra.mxu0 %v1864
    %v2671 = vpop.f32.mrf.mxu0
    %v2672 = vadd.f32 0.0, %v2671
    %v2673 = vpop.f32.mrf.mxu0
    %v2674 = vadd.f32 0.0, %v2673
    %2675 = vmatmul.bf16.gmra.mxu0 %v1867
    %v2676 = vpop.f32.mrf.mxu0
    %v2677 = vadd.f32 0.0, %v2676
    %v2678 = vpop.f32.mrf.mxu0
    %v2679 = vadd.f32 0.0, %v2678
    %2680 = vmatmul.bf16.gmra.mxu0 %v1870
    %v2681 = vpop.f32.mrf.mxu0
    %v2682 = vadd.f32 0.0, %v2681
    %v2683 = vpop.f32.mrf.mxu0
    %v2684 = vadd.f32 0.0, %v2683
    %2685 = vmatmul.bf16.gmra.mxu0 %v1873
    %v2686 = vpop.f32.mrf.mxu0
    %v2687 = vadd.f32 0.0, %v2686
    %v2688 = vpop.f32.mrf.mxu0
    %v2689 = vadd.f32 0.0, %v2688
    %2690 = vmatmul.bf16.gmra.mxu0 %v1876
    %v2691 = vpop.f32.mrf.mxu0
    %v2692 = vadd.f32 0.0, %v2691
    %v2693 = vpop.f32.mrf.mxu0
    %v2694 = vadd.f32 0.0, %v2693
    %2695 = vmatmul.bf16.gmra.mxu0 %v1879
    %v2696 = vpop.f32.mrf.mxu0
    %v2697 = vadd.f32 0.0, %v2696
    %v2698 = vpop.f32.mrf.mxu0
    %v2699 = vadd.f32 0.0, %v2698
    %2700 = vmatmul.bf16.gmra.mxu0 %v1882
    %v2701 = vpop.f32.mrf.mxu0
    %v2702 = vadd.f32 0.0, %v2701
    %v2703 = vpop.f32.mrf.mxu0
    %v2704 = vadd.f32 0.0, %v2703
    %2705 = vmatmul.bf16.gmra.mxu0 %v1885
    %v2706 = vpop.f32.mrf.mxu0
    %v2707 = vadd.f32 0.0, %v2706
    %v2708 = vpop.f32.mrf.mxu0
    %v2709 = vadd.f32 0.0, %v2708
    %2710 = vmatmul.bf16.gmra.mxu0 %v1888
    %v2711 = vpop.f32.mrf.mxu0
    %v2712 = vadd.f32 0.0, %v2711
    %v2713 = vpop.f32.mrf.mxu0
    %v2714 = vadd.f32 0.0, %v2713
    %2715 = vmatmul.bf16.gmra.mxu0 %v1891
    %v2716 = vpop.f32.mrf.mxu0
    %v2717 = vadd.f32 0.0, %v2716
    %v2718 = vpop.f32.mrf.mxu0
    %v2719 = vadd.f32 0.0, %v2718
    %2720 = vmatmul.bf16.gmra.mxu0 %v1894
    %v2721 = vpop.f32.mrf.mxu0
    %v2722 = vadd.f32 0.0, %v2721
    %v2723 = vpop.f32.mrf.mxu0
    %v2724 = vadd.f32 0.0, %v2723
    %2725 = vmatmul.bf16.gmra.mxu0 %v1897
    %v2726 = vpop.f32.mrf.mxu0
    %v2727 = vadd.f32 0.0, %v2726
    %v2728 = vpop.f32.mrf.mxu0
    %v2729 = vadd.f32 0.0, %v2728
    %2730 = vmatmul.bf16.gmra.mxu0 %v1900
    %v2731 = vpop.f32.mrf.mxu0
    %v2732 = vadd.f32 0.0, %v2731
    %v2733 = vpop.f32.mrf.mxu0
    %v2734 = vadd.f32 0.0, %v2733
    %2735 = vmatmul.bf16.gmra.mxu0 %v1903
    %v2736 = vpop.f32.mrf.mxu0
    %v2737 = vadd.f32 0.0, %v2736
    %v2738 = vpop.f32.mrf.mxu0
    %v2739 = vadd.f32 0.0, %v2738
    %2740 = vmatmul.bf16.gmra.mxu0 %v1906
    %v2741 = vpop.f32.mrf.mxu0
    %v2742 = vadd.f32 0.0, %v2741
    %v2743 = vpop.f32.mrf.mxu0
    %v2744 = vadd.f32 0.0, %v2743
    %2745 = vmatmul.bf16.gmra.mxu0 %v1909
    %v2746 = vpop.f32.mrf.mxu0
    %v2747 = vadd.f32 0.0, %v2746
    %v2748 = vpop.f32.mrf.mxu0
    %v2749 = vadd.f32 0.0, %v2748
    %2750 = vmatmul.bf16.gmra.mxu0 %v1912
    %v2751 = vpop.f32.mrf.mxu0
    %v2752 = vadd.f32 0.0, %v2751
    %v2753 = vpop.f32.mrf.mxu0
    %v2754 = vadd.f32 0.0, %v2753
    %2755 = vmatmul.bf16.gmra.mxu0 %v1915
    %v2756 = vpop.f32.mrf.mxu0
    %v2757 = vadd.f32 0.0, %v2756
    %v2758 = vpop.f32.mrf.mxu0
    %v2759 = vadd.f32 0.0, %v2758
    %2760 = vmatmul.bf16.gmra.mxu0 %v1918
    %v2761 = vpop.f32.mrf.mxu0
    %v2762 = vadd.f32 0.0, %v2761
    %v2763 = vpop.f32.mrf.mxu0
    %v2764 = vadd.f32 0.0, %v2763
    %2765 = vmatmul.bf16.gmra.mxu0 %v1921
    %v2766 = vpop.f32.mrf.mxu0
    %v2767 = vadd.f32 0.0, %v2766
    %v2768 = vpop.f32.mrf.mxu0
    %v2769 = vadd.f32 0.0, %v2768
    %2770 = vmatmul.bf16.gmra.mxu0 %v1924
    %v2771 = vpop.f32.mrf.mxu0
    %v2772 = vadd.f32 0.0, %v2771
    %v2773 = vpop.f32.mrf.mxu0
    %v2774 = vadd.f32 0.0, %v2773
    %2775 = vmatmul.bf16.gmra.mxu0 %v1927
    %v2776 = vpop.f32.mrf.mxu0
    %v2777 = vadd.f32 0.0, %v2776
    %v2778 = vpop.f32.mrf.mxu0
    %v2779 = vadd.f32 0.0, %v2778
    %2780 = vmatmul.bf16.gmra.mxu0 %v1930
    %v2781 = vpop.f32.mrf.mxu0
    %v2782 = vadd.f32 0.0, %v2781
    %v2783 = vpop.f32.mrf.mxu0
    %v2784 = vadd.f32 0.0, %v2783
    %2785 = vmatmul.bf16.gmra.mxu0 %v1933
    %v2786 = vpop.f32.mrf.mxu0
    %v2787 = vadd.f32 0.0, %v2786
    %v2788 = vpop.f32.mrf.mxu0
    %v2789 = vadd.f32 0.0, %v2788
    %2790 = vmatmul.bf16.gmra.mxu0 %v1936
    %v2791 = vpop.f32.mrf.mxu0
    %v2792 = vadd.f32 0.0, %v2791
    %v2793 = vpop.f32.mrf.mxu0
    %v2794 = vadd.f32 0.0, %v2793
    %2795 = vmatmul.bf16.gmra.mxu0 %v1939
    %v2796 = vpop.f32.mrf.mxu0
    %v2797 = vadd.f32 0.0, %v2796
    %v2798 = vpop.f32.mrf.mxu0
    %v2799 = vadd.f32 0.0, %v2798
    %2800 = vmatmul.bf16.gmra.mxu0 %v1942
    %v2801 = vpop.f32.mrf.mxu0
    %v2802 = vadd.f32 0.0, %v2801
    %v2803 = vpop.f32.mrf.mxu0
    %v2804 = vadd.f32 0.0, %v2803
    %2805 = vmatmul.bf16.gmra.mxu0 %v1945
    %v2806 = vpop.f32.mrf.mxu0
    %v2807 = vadd.f32 0.0, %v2806
    %v2808 = vpop.f32.mrf.mxu0
    %v2809 = vadd.f32 0.0, %v2808
    %2810 = vmatmul.bf16.gmra.mxu0 %v1948
    %v2811 = vpop.f32.mrf.mxu0
    %v2812 = vadd.f32 0.0, %v2811
    %v2813 = vpop.f32.mrf.mxu0
    %v2814 = vadd.f32 0.0, %v2813
    %2815 = vmatmul.bf16.gmra.mxu0 %v1951
    %v2816 = vpop.f32.mrf.mxu0
    %v2817 = vadd.f32 0.0, %v2816
    %v2818 = vpop.f32.mrf.mxu0
    %v2819 = vadd.f32 0.0, %v2818
    %2820 = vmatmul.bf16.gmra.mxu0 %v1954
    %v2821 = vpop.f32.mrf.mxu0
    %v2822 = vadd.f32 0.0, %v2821
    %v2823 = vpop.f32.mrf.mxu0
    %v2824 = vadd.f32 0.0, %v2823
    %2825 = vmatmul.bf16.gmra.mxu0 %v1957
    %v2826 = vpop.f32.mrf.mxu0
    %v2827 = vadd.f32 0.0, %v2826
    %v2828 = vpop.f32.mrf.mxu0
    %v2829 = vadd.f32 0.0, %v2828
    %2830 = vmatmul.bf16.gmra.mxu0 %v1960
    %v2831 = vpop.f32.mrf.mxu0
    %v2832 = vadd.f32 0.0, %v2831
    %v2833 = vpop.f32.mrf.mxu0
    %v2834 = vadd.f32 0.0, %v2833
    %2835 = vmatmul.bf16.gmra.mxu0 %v1963
    %v2836 = vpop.f32.mrf.mxu0
    %v2837 = vadd.f32 0.0, %v2836
    %v2838 = vpop.f32.mrf.mxu0
    %v2839 = vadd.f32 0.0, %v2838
    %2840 = vmatmul.bf16.gmra.mxu0 %v1966
    %v2841 = vpop.f32.mrf.mxu0
    %v2842 = vadd.f32 0.0, %v2841
    %v2843 = vpop.f32.mrf.mxu0
    %v2844 = vadd.f32 0.0, %v2843
    %2845 = vmatmul.bf16.gmra.mxu0 %v1969
    %v2846 = vpop.f32.mrf.mxu0
    %v2847 = vadd.f32 0.0, %v2846
    %v2848 = vpop.f32.mrf.mxu0
    %v2849 = vadd.f32 0.0, %v2848
    %2850 = vmatmul.bf16.gmra.mxu0 %v1972
    %v2851 = vpop.f32.mrf.mxu0
    %v2852 = vadd.f32 0.0, %v2851
    %v2853 = vpop.f32.mrf.mxu0
    %v2854 = vadd.f32 0.0, %v2853
    %2855 = vmatmul.bf16.gmra.mxu0 %v1975
    %v2856 = vpop.f32.mrf.mxu0
    %v2857 = vadd.f32 0.0, %v2856
    %v2858 = vpop.f32.mrf.mxu0
    %v2859 = vadd.f32 0.0, %v2858
    %2860 = vmatmul.bf16.gmra.mxu0 %v1978
    %v2861 = vpop.f32.mrf.mxu0
    %v2862 = vadd.f32 0.0, %v2861
    %v2863 = vpop.f32.mrf.mxu0
    %v2864 = vadd.f32 0.0, %v2863
    %2865 = vmatmul.bf16.gmra.mxu0 %v1981
    %v2866 = vpop.f32.mrf.mxu0
    %v2867 = vadd.f32 0.0, %v2866
    %v2868 = vpop.f32.mrf.mxu0
    %v2869 = vadd.f32 0.0, %v2868
    %2870 = vmatmul.bf16.gmra.mxu0 %v1984
    %v2871 = vpop.f32.mrf.mxu0
    %v2872 = vadd.f32 0.0, %v2871
    %v2873 = vpop.f32.mrf.mxu0
    %v2874 = vadd.f32 0.0, %v2873
    %2875 = vmatmul.bf16.gmra.mxu0 %v1987
    %v2876 = vpop.f32.mrf.mxu0
    %v2877 = vadd.f32 0.0, %v2876
    %v2878 = vpop.f32.mrf.mxu0
    %v2879 = vadd.f32 0.0, %v2878
    %2880 = vmatmul.bf16.gmra.mxu0 %v1990
    %v2881 = vpop.f32.mrf.mxu0
    %v2882 = vadd.f32 0.0, %v2881
    %v2883 = vpop.f32.mrf.mxu0
    %v2884 = vadd.f32 0.0, %v2883
    %2885 = vmatmul.bf16.gmra.mxu0 %v1993
    %v2886 = vpop.f32.mrf.mxu0
    %v2887 = vadd.f32 0.0, %v2886
    %v2888 = vpop.f32.mrf.mxu0
    %v2889 = vadd.f32 0.0, %v2888
    %2890 = vmatmul.bf16.gmra.mxu0 %v1996
    %v2891 = vpop.f32.mrf.mxu0
    %v2892 = vadd.f32 0.0, %v2891
    %v2893 = vpop.f32.mrf.mxu0
    %v2894 = vadd.f32 0.0, %v2893
    %2895 = vmatmul.bf16.gmra.mxu0 %v1999
    %v2896 = vpop.f32.mrf.mxu0
    %v2897 = vadd.f32 0.0, %v2896
    %v2898 = vpop.f32.mrf.mxu0
    %v2899 = vadd.f32 0.0, %v2898
    %2900 = vmatmul.bf16.gmra.mxu0 %v2002
    %v2901 = vpop.f32.mrf.mxu0
    %v2902 = vadd.f32 0.0, %v2901
    %v2903 = vpop.f32.mrf.mxu0
    %v2904 = vadd.f32 0.0, %v2903
    %2905 = vmatmul.bf16.gmra.mxu0 %v2005
    %v2906 = vpop.f32.mrf.mxu0
    %v2907 = vadd.f32 0.0, %v2906
    %v2908 = vpop.f32.mrf.mxu0
    %v2909 = vadd.f32 0.0, %v2908
    %2910 = vmatmul.bf16.gmra.mxu0 %v2008
    %v2911 = vpop.f32.mrf.mxu0
    %v2912 = vadd.f32 0.0, %v2911
    %v2913 = vpop.f32.mrf.mxu0
    %v2914 = vadd.f32 0.0, %v2913
    %2915 = vmatmul.bf16.gmra.mxu0 %v2011
    %v2916 = vpop.f32.mrf.mxu0
    %v2917 = vadd.f32 0.0, %v2916
    %v2918 = vpop.f32.mrf.mxu0
    %v2919 = vadd.f32 0.0, %v2918
    %2920 = vmatmul.bf16.gmra.mxu0 %v2014
    %v2921 = vpop.f32.mrf.mxu0
    %v2922 = vadd.f32 0.0, %v2921
    %v2923 = vpop.f32.mrf.mxu0
    %v2924 = vadd.f32 0.0, %v2923
    %2925 = vmatmul.bf16.gmra.mxu0 %v2017
    %v2926 = vpop.f32.mrf.mxu0
    %v2927 = vadd.f32 0.0, %v2926
    %v2928 = vpop.f32.mrf.mxu0
    %v2929 = vadd.f32 0.0, %v2928
    %2930 = vmatmul.bf16.gmra.mxu0 %v2020
    %v2931 = vpop.f32.mrf.mxu0
    %v2932 = vadd.f32 0.0, %v2931
    %v2933 = vpop.f32.mrf.mxu0
    %v2934 = vadd.f32 0.0, %v2933
    %2935 = vmatmul.bf16.gmra.mxu0 %v2023
    %v2936 = vpop.f32.mrf.mxu0
    %v2937 = vadd.f32 0.0, %v2936
    %v2938 = vpop.f32.mrf.mxu0
    %v2939 = vadd.f32 0.0, %v2938
    %2940 = vmatmul.bf16.gmra.mxu0 %v2026
    %v2941 = vpop.f32.mrf.mxu0
    %v2942 = vadd.f32 0.0, %v2941
    %v2943 = vpop.f32.mrf.mxu0
    %v2944 = vadd.f32 0.0, %v2943
    %2945 = vmatmul.bf16.gmra.mxu0 %v2029
    %v2946 = vpop.f32.mrf.mxu0
    %v2947 = vadd.f32 0.0, %v2946
    %v2948 = vpop.f32.mrf.mxu0
    %v2949 = vadd.f32 0.0, %v2948
    %2950 = vmatmul.bf16.gmra.mxu0 %v2032
    %v2951 = vpop.f32.mrf.mxu0
    %v2952 = vadd.f32 0.0, %v2951
    %v2953 = vpop.f32.mrf.mxu0
    %v2954 = vadd.f32 0.0, %v2953
    %2955 = vmatmul.bf16.gmra.mxu0 %v2035
    %v2956 = vpop.f32.mrf.mxu0
    %v2957 = vadd.f32 0.0, %v2956
    %v2958 = vpop.f32.mrf.mxu0
    %v2959 = vadd.f32 0.0, %v2958
    %2960 = vmatmul.bf16.gmra.mxu0 %v2038
    %v2961 = vpop.f32.mrf.mxu0
    %v2962 = vadd.f32 0.0, %v2961
    %v2963 = vpop.f32.mrf.mxu0
    %v2964 = vadd.f32 0.0, %v2963
    %2965 = vmatmul.bf16.gmra.mxu0 %v2041
    %v2966 = vpop.f32.mrf.mxu0
    %v2967 = vadd.f32 0.0, %v2966
    %v2968 = vpop.f32.mrf.mxu0
    %v2969 = vadd.f32 0.0, %v2968
    %2970 = vmatmul.bf16.gmra.mxu0 %v2044
    %v2971 = vpop.f32.mrf.mxu0
    %v2972 = vadd.f32 0.0, %v2971
    %v2973 = vpop.f32.mrf.mxu0
    %v2974 = vadd.f32 0.0, %v2973
    %2975 = vmatmul.bf16.gmra.mxu0 %v2047
    %v2976 = vpop.f32.mrf.mxu0
    %v2977 = vadd.f32 0.0, %v2976
    %v2978 = vpop.f32.mrf.mxu0
    %v2979 = vadd.f32 0.0, %v2978
    %2980 = vmatmul.bf16.gmra.mxu0 %v2050
    %v2981 = vpop.f32.mrf.mxu0
    %v2982 = vadd.f32 0.0, %v2981
    %v2983 = vpop.f32.mrf.mxu0
    %v2984 = vadd.f32 0.0, %v2983
    %2985 = vmatmul.bf16.gmra.mxu0 %v2053
    %v2986 = vpop.f32.mrf.mxu0
    %v2987 = vadd.f32 0.0, %v2986
    %v2988 = vpop.f32.mrf.mxu0
    %v2989 = vadd.f32 0.0, %v2988
    %2990 = vmatmul.bf16.gmra.mxu0 %v2056
    %v2991 = vpop.f32.mrf.mxu0
    %v2992 = vadd.f32 0.0, %v2991
    %v2993 = vpop.f32.mrf.mxu0
    %v2994 = vadd.f32 0.0, %v2993
    %2995 = vmatmul.bf16.gmra.mxu0 %v2059
    %v2996 = vpop.f32.mrf.mxu0
    %v2997 = vadd.f32 0.0, %v2996
    %v2998 = vpop.f32.mrf.mxu0
    %v2999 = vadd.f32 0.0, %v2998
    %3000 = vmatmul.bf16.gmra.mxu0 %v2062
    %v3001 = vpop.f32.mrf.mxu0
    %v3002 = vadd.f32 0.0, %v3001
    %v3003 = vpop.f32.mrf.mxu0
    %v3004 = vadd.f32 0.0, %v3003
    %3005 = vmatmul.bf16.gmra.mxu0 %v2065
    %v3006 = vpop.f32.mrf.mxu0
    %v3007 = vadd.f32 0.0, %v3006
    %v3008 = vpop.f32.mrf.mxu0
    %v3009 = vadd.f32 0.0, %v3008
    %3010 = vmatmul.bf16.gmra.mxu0 %v2068
    %v3011 = vpop.f32.mrf.mxu0
    %v3012 = vadd.f32 0.0, %v3011
    %v3013 = vpop.f32.mrf.mxu0
    %v3014 = vadd.f32 0.0, %v3013
    %3015 = vmatmul.bf16.gmra.mxu0 %v2071
    %v3016 = vpop.f32.mrf.mxu0
    %v3017 = vadd.f32 0.0, %v3016
    %v3018 = vpop.f32.mrf.mxu0
    %v3019 = vadd.f32 0.0, %v3018
    %3020 = vmatmul.bf16.gmra.mxu0 %v2074
    %v3021 = vpop.f32.mrf.mxu0
    %v3022 = vadd.f32 0.0, %v3021
    %v3023 = vpop.f32.mrf.mxu0
    %v3024 = vadd.f32 0.0, %v3023
    %3025 = vmatmul.bf16.gmra.mxu0 %v2077
    %v3026 = vpop.f32.mrf.mxu0
    %v3027 = vadd.f32 0.0, %v3026
    %v3028 = vpop.f32.mrf.mxu0
    %v3029 = vadd.f32 0.0, %v3028
    %3030 = vmatmul.bf16.gmra.mxu0 %v2080
    %v3031 = vpop.f32.mrf.mxu0
    %v3032 = vadd.f32 0.0, %v3031
    %v3033 = vpop.f32.mrf.mxu0
    %v3034 = vadd.f32 0.0, %v3033
    %3035 = vmatmul.bf16.gmra.mxu0 %v2083
    %v3036 = vpop.f32.mrf.mxu0
    %v3037 = vadd.f32 0.0, %v3036
    %v3038 = vpop.f32.mrf.mxu0
    %v3039 = vadd.f32 0.0, %v3038
    %3040 = vmatmul.bf16.gmra.mxu0 %v2086
    %v3041 = vpop.f32.mrf.mxu0
    %v3042 = vadd.f32 0.0, %v3041
    %v3043 = vpop.f32.mrf.mxu0
    %v3044 = vadd.f32 0.0, %v3043
    %3045 = vmatmul.bf16.gmra.mxu0 %v2089
    %v3046 = vpop.f32.mrf.mxu0
    %v3047 = vadd.f32 0.0, %v3046
    %v3048 = vpop.f32.mrf.mxu0
    %v3049 = vadd.f32 0.0, %v3048
    %3050 = vmatmul.bf16.gmra.mxu0 %v2092
    %v3051 = vpop.f32.mrf.mxu0
    %v3052 = vadd.f32 0.0, %v3051
    %v3053 = vpop.f32.mrf.mxu0
    %v3054 = vadd.f32 0.0, %v3053
    %3055 = vmatmul.bf16.gmra.mxu0 %v2095
    %v3056 = vpop.f32.mrf.mxu0
    %v3057 = vadd.f32 0.0, %v3056
    %v3058 = vpop.f32.mrf.mxu0
    %v3059 = vadd.f32 0.0, %v3058
    %3060 = vmatmul.bf16.gmra.mxu0 %v2098
    %v3061 = vpop.f32.mrf.mxu0
    %v3062 = vadd.f32 0.0, %v3061
    %v3063 = vpop.f32.mrf.mxu0
    %v3064 = vadd.f32 0.0, %v3063
    %3065 = vmatmul.bf16.gmra.mxu0 %v2101
    %v3066 = vpop.f32.mrf.mxu0
    %v3067 = vadd.f32 0.0, %v3066
    %v3068 = vpop.f32.mrf.mxu0
    %v3069 = vadd.f32 0.0, %v3068
    %3070 = vmatmul.bf16.gmra.mxu0 %v2104
    %v3071 = vpop.f32.mrf.mxu0
    %v3072 = vadd.f32 0.0, %v3071
    %v3073 = vpop.f32.mrf.mxu0
    %v3074 = vadd.f32 0.0, %v3073
    %3075 = vmatmul.bf16.gmra.mxu0 %v2107
    %v3076 = vpop.f32.mrf.mxu0
    %v3077 = vadd.f32 0.0, %v3076
    %v3078 = vpop.f32.mrf.mxu0
    %v3079 = vadd.f32 0.0, %v3078
    %3080 = vmatmul.bf16.gmra.mxu0 %v2110
    %v3081 = vpop.f32.mrf.mxu0
    %v3082 = vadd.f32 0.0, %v3081
    %v3083 = vpop.f32.mrf.mxu0
    %v3084 = vadd.f32 0.0, %v3083
    %3085 = vmatmul.bf16.gmra.mxu0 %v2113
    %v3086 = vpop.f32.mrf.mxu0
    %v3087 = vadd.f32 0.0, %v3086
    %v3088 = vpop.f32.mrf.mxu0
    %v3089 = vadd.f32 0.0, %v3088
    %3090 = vmatmul.bf16.gmra.mxu0 %v2116
    %v3091 = vpop.f32.mrf.mxu0
    %v3092 = vadd.f32 0.0, %v3091
    %v3093 = vpop.f32.mrf.mxu0
    %v3094 = vadd.f32 0.0, %v3093
    %3095 = vmatmul.bf16.gmra.mxu0 %v2119
    %v3096 = vpop.f32.mrf.mxu0
    %v3097 = vadd.f32 0.0, %v3096
    %v3098 = vpop.f32.mrf.mxu0
    %v3099 = vadd.f32 0.0, %v3098
    %3100 = vmatmul.bf16.gmra.mxu0 %v2122
    %v3101 = vpop.f32.mrf.mxu0
    %v3102 = vadd.f32 0.0, %v3101
    %v3103 = vpop.f32.mrf.mxu0
    %v3104 = vadd.f32 0.0, %v3103
    %3105 = vmatmul.bf16.gmra.mxu0 %v2125
    %v3106 = vpop.f32.mrf.mxu0
    %v3107 = vadd.f32 0.0, %v3106
    %v3108 = vpop.f32.mrf.mxu0
    %v3109 = vadd.f32 0.0, %v3108
    %3110 = vmatmul.bf16.gmra.mxu0 %v2128
    %v3111 = vpop.f32.mrf.mxu0
    %v3112 = vadd.f32 0.0, %v3111
    %v3113 = vpop.f32.mrf.mxu0
    %v3114 = vadd.f32 0.0, %v3113
    %3115 = vmatmul.bf16.gmra.mxu0 %v2131
    %v3116 = vpop.f32.mrf.mxu0
    %v3117 = vadd.f32 0.0, %v3116
    %v3118 = vpop.f32.mrf.mxu0
    %v3119 = vadd.f32 0.0, %v3118
    %3120 = vmatmul.bf16.gmra.mxu0 %v2134
    %v3121 = vpop.f32.mrf.mxu0
    %v3122 = vadd.f32 0.0, %v3121
    %v3123 = vpop.f32.mrf.mxu0
    %v3124 = vadd.f32 0.0, %v3123
    %3125 = vmatmul.bf16.gmra.mxu0 %v2137
    %v3126 = vpop.f32.mrf.mxu0
    %v3127 = vadd.f32 0.0, %v3126
    %v3128 = vpop.f32.mrf.mxu0
    %v3129 = vadd.f32 0.0, %v3128
    %3130 = vmatmul.bf16.gmra.mxu0 %v2140
    %v3131 = vpop.f32.mrf.mxu0
    %v3132 = vadd.f32 0.0, %v3131
    %v3133 = vpop.f32.mrf.mxu0
    %v3134 = vadd.f32 0.0, %v3133
    %3135 = vmatmul.bf16.gmra.mxu0 %v2143
    %v3136 = vpop.f32.mrf.mxu0
    %v3137 = vadd.f32 0.0, %v3136
    %v3138 = vpop.f32.mrf.mxu0
    %v3139 = vadd.f32 0.0, %v3138
    %3140 = vmatmul.bf16.gmra.mxu0 %v2146
    %v3141 = vpop.f32.mrf.mxu0
    %v3142 = vadd.f32 0.0, %v3141
    %v3143 = vpop.f32.mrf.mxu0
    %v3144 = vadd.f32 0.0, %v3143
    %3145 = vmatmul.bf16.gmra.mxu0 %v2149
    %v3146 = vpop.f32.mrf.mxu0
    %v3147 = vadd.f32 0.0, %v3146
    %v3148 = vpop.f32.mrf.mxu0
    %v3149 = vadd.f32 0.0, %v3148
    %3150 = vmatmul.bf16.gmra.mxu0 %v2152
    %v3151 = vpop.f32.mrf.mxu0
    %v3152 = vadd.f32 0.0, %v3151
    %v3153 = vpop.f32.mrf.mxu0
    %v3154 = vadd.f32 0.0, %v3153
    %3155 = vmatmul.bf16.gmra.mxu0 %v2155
    %v3156 = vpop.f32.mrf.mxu0
    %v3157 = vadd.f32 0.0, %v3156
    %v3158 = vpop.f32.mrf.mxu0
    %v3159 = vadd.f32 0.0, %v3158
    %3160 = vmatmul.bf16.gmra.mxu0 %v2158
    %v3161 = vpop.f32.mrf.mxu0
    %v3162 = vadd.f32 0.0, %v3161
    %v3163 = vpop.f32.mrf.mxu0
    %v3164 = vadd.f32 0.0, %v3163
    %3165 = vmatmul.bf16.gmra.mxu0 %v2161
    %v3166 = vpop.f32.mrf.mxu0
    %v3167 = vadd.f32 0.0, %v3166
    %v3168 = vpop.f32.mrf.mxu0
    %v3169 = vadd.f32 0.0, %v3168
    %3170 = vmatmul.bf16.gmra.mxu0 %v2164
    %v3171 = vpop.f32.mrf.mxu0
    %v3172 = vadd.f32 0.0, %v3171
    %v3173 = vpop.f32.mrf.mxu0
    %v3174 = vadd.f32 0.0, %v3173
    %3175 = vmatmul.bf16.gmra.mxu0 %v2167
    %v3176 = vpop.f32.mrf.mxu0
    %v3177 = vadd.f32 0.0, %v3176
    %v3178 = vpop.f32.mrf.mxu0
    %v3179 = vadd.f32 0.0, %v3178
    %3180 = vmatmul.bf16.gmra.mxu0 %v2170
    %v3181 = vpop.f32.mrf.mxu0
    %v3182 = vadd.f32 0.0, %v3181
    %v3183 = vpop.f32.mrf.mxu0
    %v3184 = vadd.f32 0.0, %v3183
    %3185 = vmatmul.bf16.gmra.mxu0 %v2173
    %v3186 = vpop.f32.mrf.mxu0
    %v3187 = vadd.f32 0.0, %v3186
    %v3188 = vpop.f32.mrf.mxu0
    %v3189 = vadd.f32 0.0, %v3188
    %3190 = vmatmul.bf16.gmra.mxu0 %v2176
    %v3191 = vpop.f32.mrf.mxu0
    %v3192 = vadd.f32 0.0, %v3191
    %v3193 = vpop.f32.mrf.mxu0
    %v3194 = vadd.f32 0.0, %v3193
    %3195 = vmatmul.bf16.gmra.mxu0 %v2179
    %v3196 = vpop.f32.mrf.mxu0
    %v3197 = vadd.f32 0.0, %v3196
    %v3198 = vpop.f32.mrf.mxu0
    %v3199 = vadd.f32 0.0, %v3198
    %3200 = vmatmul.bf16.gmra.mxu0 %v2182
    %v3201 = vpop.f32.mrf.mxu0
    %v3202 = vadd.f32 0.0, %v3201
    %v3203 = vpop.f32.mrf.mxu0
    %v3204 = vadd.f32 0.0, %v3203
    %3205 = vmatmul.bf16.gmra.mxu0 %v2185
    %v3206 = vpop.f32.mrf.mxu0
    %v3207 = vadd.f32 0.0, %v3206
    %v3208 = vpop.f32.mrf.mxu0
    %v3209 = vadd.f32 0.0, %v3208
    %3210 = vmatmul.bf16.gmra.mxu0 %v2188
    %v3211 = vpop.f32.mrf.mxu0
    %v3212 = vadd.f32 0.0, %v3211
    %v3213 = vpop.f32.mrf.mxu0
    %v3214 = vadd.f32 0.0, %v3213
    %3215 = vmatmul.bf16.gmra.mxu0 %v2191
    %v3216 = vpop.f32.mrf.mxu0
    %v3217 = vadd.f32 0.0, %v3216
    %v3218 = vpop.f32.mrf.mxu0
    %v3219 = vadd.f32 0.0, %v3218
    %3220 = vmatmul.bf16.gmra.mxu0 %v2194
    %v3221 = vpop.f32.mrf.mxu0
    %v3222 = vadd.f32 0.0, %v3221
    %v3223 = vpop.f32.mrf.mxu0
    %v3224 = vadd.f32 0.0, %v3223
    %3225 = vmatmul.bf16.gmra.mxu0 %v2197
    %v3226 = vpop.f32.mrf.mxu0
    %v3227 = vadd.f32 0.0, %v3226
    %v3228 = vpop.f32.mrf.mxu0
    %v3229 = vadd.f32 0.0, %v3228
    %3230 = vmatmul.bf16.gmra.mxu0 %v2200
    %v3231 = vpop.f32.mrf.mxu0
    %v3232 = vadd.f32 0.0, %v3231
    %v3233 = vpop.f32.mrf.mxu0
    %v3234 = vadd.f32 0.0, %v3233
    %3235 = vmatmul.bf16.gmra.mxu0 %v2203
    %v3236 = vpop.f32.mrf.mxu0
    %v3237 = vadd.f32 0.0, %v3236
    %v3238 = vpop.f32.mrf.mxu0
    %v3239 = vadd.f32 0.0, %v3238
    %3240 = vmatmul.bf16.gmra.mxu0 %v2206
    %v3241 = vpop.f32.mrf.mxu0
    %v3242 = vadd.f32 0.0, %v3241
    %v3243 = vpop.f32.mrf.mxu0
    %v3244 = vadd.f32 0.0, %v3243
    %3245 = vmatmul.bf16.gmra.mxu0 %v2209
    %v3246 = vpop.f32.mrf.mxu0
    %v3247 = vadd.f32 0.0, %v3246
    %v3248 = vpop.f32.mrf.mxu0
    %v3249 = vadd.f32 0.0, %v3248
    %3250 = vmatmul.bf16.gmra.mxu0 %v2212
    %v3251 = vpop.f32.mrf.mxu0
    %v3252 = vadd.f32 0.0, %v3251
    %v3253 = vpop.f32.mrf.mxu0
    %v3254 = vadd.f32 0.0, %v3253
    %3255 = vmatmul.bf16.gmra.mxu0 %v2215
    %v3256 = vpop.f32.mrf.mxu0
    %v3257 = vadd.f32 0.0, %v3256
    %v3258 = vpop.f32.mrf.mxu0
    %v3259 = vadd.f32 0.0, %v3258
    %3260 = vmatmul.bf16.gmra.mxu0 %v2218
    %v3261 = vpop.f32.mrf.mxu0
    %v3262 = vadd.f32 0.0, %v3261
    %v3263 = vpop.f32.mrf.mxu0
    %v3264 = vadd.f32 0.0, %v3263
    %3265 = vmatmul.bf16.gmra.mxu0 %v2221
    %v3266 = vpop.f32.mrf.mxu0
    %v3267 = vadd.f32 0.0, %v3266
    %v3268 = vpop.f32.mrf.mxu0
    %v3269 = vadd.f32 0.0, %v3268
    %3270 = vmatmul.bf16.gmra.mxu0 %v2224
    %v3271 = vpop.f32.mrf.mxu0
    %v3272 = vadd.f32 0.0, %v3271
    %v3273 = vpop.f32.mrf.mxu0
    %v3274 = vadd.f32 0.0, %v3273
    %3275 = vmatmul.bf16.gmra.mxu0 %v2227
    %v3276 = vpop.f32.mrf.mxu0
    %v3277 = vadd.f32 0.0, %v3276
    %v3278 = vpop.f32.mrf.mxu0
    %v3279 = vadd.f32 0.0, %v3278
    %3280 = vmatmul.bf16.gmra.mxu0 %v2230
    %v3281 = vpop.f32.mrf.mxu0
    %v3282 = vadd.f32 0.0, %v3281
    %v3283 = vpop.f32.mrf.mxu0
    %v3284 = vadd.f32 0.0, %v3283
    %3285 = vmatmul.bf16.gmra.mxu0 %v2233
    %v3286 = vpop.f32.mrf.mxu0
    %v3287 = vadd.f32 0.0, %v3286
    %v3288 = vpop.f32.mrf.mxu0
    %v3289 = vadd.f32 0.0, %v3288
    %3290 = vmatmul.bf16.gmra.mxu0 %v2236
    %v3291 = vpop.f32.mrf.mxu0
    %v3292 = vadd.f32 0.0, %v3291
    %v3293 = vpop.f32.mrf.mxu0
    %v3294 = vadd.f32 0.0, %v3293
    %3295 = vmatmul.bf16.gmra.mxu0 %v2239
    %v3296 = vpop.f32.mrf.mxu0
    %v3297 = vadd.f32 0.0, %v3296
    %v3298 = vpop.f32.mrf.mxu0
    %v3299 = vadd.f32 0.0, %v3298
    %3300 = vmatmul.bf16.gmra.mxu0 %v2242
    %v3301 = vpop.f32.mrf.mxu0
    %v3302 = vadd.f32 0.0, %v3301
    %v3303 = vpop.f32.mrf.mxu0
    %v3304 = vadd.f32 0.0, %v3303
    %3305 = vmatmul.bf16.gmra.mxu0 %v2245
    %v3306 = vpop.f32.mrf.mxu0
    %v3307 = vadd.f32 0.0, %v3306
    %v3308 = vpop.f32.mrf.mxu0
    %v3309 = vadd.f32 0.0, %v3308
    %3310 = vmatmul.bf16.gmra.mxu0 %v2248
    %v3311 = vpop.f32.mrf.mxu0
    %v3312 = vadd.f32 0.0, %v3311
    %v3313 = vpop.f32.mrf.mxu0
    %v3314 = vadd.f32 0.0, %v3313
    %3315 = vmatmul.bf16.gmra.mxu0 %v2251
    %v3316 = vpop.f32.mrf.mxu0
    %v3317 = vadd.f32 0.0, %v3316
    %v3318 = vpop.f32.mrf.mxu0
    %v3319 = vadd.f32 0.0, %v3318
    %3320 = vmatmul.bf16.gmra.mxu0 %v2254
    %v3321 = vpop.f32.mrf.mxu0
    %v3322 = vadd.f32 0.0, %v3321
    %v3323 = vpop.f32.mrf.mxu0
    %v3324 = vadd.f32 0.0, %v3323
    %3325 = vmatmul.bf16.gmra.mxu0 %v2257
    %v3326 = vpop.f32.mrf.mxu0
    %v3327 = vadd.f32 0.0, %v3326
    %v3328 = vpop.f32.mrf.mxu0
    %v3329 = vadd.f32 0.0, %v3328
    %3330 = vmatmul.bf16.gmra.mxu0 %v2260
    %v3331 = vpop.f32.mrf.mxu0
    %v3332 = vadd.f32 0.0, %v3331
    %v3333 = vpop.f32.mrf.mxu0
    %v3334 = vadd.f32 0.0, %v3333
    %3335 = vmatmul.bf16.gmra.mxu0 %v2263
    %v3336 = vpop.f32.mrf.mxu0
    %v3337 = vadd.f32 0.0, %v3336
    %v3338 = vpop.f32.mrf.mxu0
    %v3339 = vadd.f32 0.0, %v3338
    %3340 = vmatmul.bf16.gmra.mxu0 %v2266
    %v3341 = vpop.f32.mrf.mxu0
    %v3342 = vadd.f32 0.0, %v3341
    %v3343 = vpop.f32.mrf.mxu0
    %v3344 = vadd.f32 0.0, %v3343
    %3345 = vmatmul.bf16.gmra.mxu0 %v2269
    %v3346 = vpop.f32.mrf.mxu0
    %v3347 = vadd.f32 0.0, %v3346
    %v3348 = vpop.f32.mrf.mxu0
    %v3349 = vadd.f32 0.0, %v3348
    %3350 = vmatmul.bf16.gmra.mxu0 %v2272
    %v3351 = vpop.f32.mrf.mxu0
    %v3352 = vadd.f32 0.0, %v3351
    %v3353 = vpop.f32.mrf.mxu0
    %v3354 = vadd.f32 0.0, %v3353
    %3355 = vmatmul.bf16.gmra.mxu0 %v2275
    %v3356 = vpop.f32.mrf.mxu0
    %v3357 = vadd.f32 0.0, %v3356
    %v3358 = vpop.f32.mrf.mxu0
    %v3359 = vadd.f32 0.0, %v3358
    %3360 = vmatmul.bf16.gmra.mxu0 %v2278
    %v3361 = vpop.f32.mrf.mxu0
    %v3362 = vadd.f32 0.0, %v3361
    %v3363 = vpop.f32.mrf.mxu0
    %v3364 = vadd.f32 0.0, %v3363
    %3365 = vmatmul.bf16.gmra.mxu0 %v2281
    %v3366 = vpop.f32.mrf.mxu0
    %v3367 = vadd.f32 0.0, %v3366
    %v3368 = vpop.f32.mrf.mxu0
    %v3369 = vadd.f32 0.0, %v3368
    %3370 = vmatmul.bf16.gmra.mxu0 %v2284
    %v3371 = vpop.f32.mrf.mxu0
    %v3372 = vadd.f32 0.0, %v3371
    %v3373 = vpop.f32.mrf.mxu0
    %v3374 = vadd.f32 0.0, %v3373
    %3375 = vmatmul.bf16.gmra.mxu0 %v2287
    %v3376 = vpop.f32.mrf.mxu0
    %v3377 = vadd.f32 0.0, %v3376
    %v3378 = vpop.f32.mrf.mxu0
    %v3379 = vadd.f32 0.0, %v3378
    %3380 = vmatmul.bf16.gmra.mxu0 %v2290
    %v3381 = vpop.f32.mrf.mxu0
    %v3382 = vadd.f32 0.0, %v3381
    %v3383 = vpop.f32.mrf.mxu0
    %v3384 = vadd.f32 0.0, %v3383
    %3385 = vmatmul.bf16.gmra.mxu0 %v2293
    %v3386 = vpop.f32.mrf.mxu0
    %v3387 = vadd.f32 0.0, %v3386
    %v3388 = vpop.f32.mrf.mxu0
    %v3389 = vadd.f32 0.0, %v3388
    %3390 = vmatmul.bf16.gmra.mxu0 %v2296
    %v3391 = vpop.f32.mrf.mxu0
    %v3392 = vadd.f32 0.0, %v3391
    %v3393 = vpop.f32.mrf.mxu0
    %v3394 = vadd.f32 0.0, %v3393
    %3395 = vmatmul.bf16.gmra.mxu0 %v2299
    %v3396 = vpop.f32.mrf.mxu0
    %v3397 = vadd.f32 0.0, %v3396
    %v3398 = vpop.f32.mrf.mxu0
    %v3399 = vadd.f32 0.0, %v3398
    %3400 = vmatmul.bf16.gmra.mxu0 %v2302
    %v3401 = vpop.f32.mrf.mxu0
    %v3402 = vadd.f32 0.0, %v3401
    %v3403 = vpop.f32.mrf.mxu0
    %v3404 = vadd.f32 0.0, %v3403
    %3405 = vmatmul.bf16.gmra.mxu0 %v2305
    %v3406 = vpop.f32.mrf.mxu0
    %v3407 = vadd.f32 0.0, %v3406
    %v3408 = vpop.f32.mrf.mxu0
    %v3409 = vadd.f32 0.0, %v3408
    %3410 = vmatmul.bf16.gmra.mxu0 %v2308
    %v3411 = vpop.f32.mrf.mxu0
    %v3412 = vadd.f32 0.0, %v3411
    %v3413 = vpop.f32.mrf.mxu0
    %v3414 = vadd.f32 0.0, %v3413
    %3415 = vmatmul.bf16.gmra.mxu0 %v2311
    %v3416 = vpop.f32.mrf.mxu0
    %v3417 = vadd.f32 0.0, %v3416
    %v3418 = vpop.f32.mrf.mxu0
    %v3419 = vadd.f32 0.0, %v3418
    %3420 = vmatmul.bf16.gmra.mxu0 %v2314
    %v3421 = vpop.f32.mrf.mxu0
    %v3422 = vadd.f32 0.0, %v3421
    %v3423 = vpop.f32.mrf.mxu0
    %v3424 = vadd.f32 0.0, %v3423
    %3425 = vmatmul.bf16.gmra.mxu0 %v2317
    %v3426 = vpop.f32.mrf.mxu0
    %v3427 = vadd.f32 0.0, %v3426
    %v3428 = vpop.f32.mrf.mxu0
    %v3429 = vadd.f32 0.0, %v3428
    %3430 = vmatmul.bf16.gmra.mxu0 %v2320
    %v3431 = vpop.f32.mrf.mxu0
    %v3432 = vadd.f32 0.0, %v3431
    %v3433 = vpop.f32.mrf.mxu0
    %v3434 = vadd.f32 0.0, %v3433
    %3435 = vmatmul.bf16.gmra.mxu0 %v2323
    %v3436 = vpop.f32.mrf.mxu0
    %v3437 = vadd.f32 0.0, %v3436
    %v3438 = vpop.f32.mrf.mxu0
    %v3439 = vadd.f32 0.0, %v3438
    %3440 = vmatmul.bf16.gmra.mxu0 %v2326
    %v3441 = vpop.f32.mrf.mxu0
    %v3442 = vadd.f32 0.0, %v3441
    %v3443 = vpop.f32.mrf.mxu0
    %v3444 = vadd.f32 0.0, %v3443
    %3445 = vmatmul.bf16.gmra.mxu0 %v2329
    %v3446 = vpop.f32.mrf.mxu0
    %v3447 = vadd.f32 0.0, %v3446
    %v3448 = vpop.f32.mrf.mxu0
    %v3449 = vadd.f32 0.0, %v3448
    %3450 = vmatmul.bf16.gmra.mxu0 %v2332
    %v3451 = vpop.f32.mrf.mxu0
    %v3452 = vadd.f32 0.0, %v3451
    %v3453 = vpop.f32.mrf.mxu0
    %v3454 = vadd.f32 0.0, %v3453
    %3455 = vmatmul.bf16.gmra.mxu0 %v2335
    %v3456 = vpop.f32.mrf.mxu0
    %v3457 = vadd.f32 0.0, %v3456
    %v3458 = vpop.f32.mrf.mxu0
    %v3459 = vadd.f32 0.0, %v3458
    %3460 = vmatmul.bf16.gmra.mxu0 %v2338
    %v3461 = vpop.f32.mrf.mxu0
    %v3462 = vadd.f32 0.0, %v3461
    %v3463 = vpop.f32.mrf.mxu0
    %v3464 = vadd.f32 0.0, %v3463
    %3465 = vmatmul.bf16.gmra.mxu0 %v2341
    %v3466 = vpop.f32.mrf.mxu0
    %v3467 = vadd.f32 0.0, %v3466
    %v3468 = vpop.f32.mrf.mxu0
    %v3469 = vadd.f32 0.0, %v3468
    %3470 = vmatmul.bf16.gmra.mxu0 %v2344
    %v3471 = vpop.f32.mrf.mxu0
    %v3472 = vadd.f32 0.0, %v3471
    %v3473 = vpop.f32.mrf.mxu0
    %v3474 = vadd.f32 0.0, %v3473
    %3475 = vmatmul.bf16.gmra.mxu0 %v2347
    %v3476 = vpop.f32.mrf.mxu0
    %v3477 = vadd.f32 0.0, %v3476
    %v3478 = vpop.f32.mrf.mxu0
    %v3479 = vadd.f32 0.0, %v3478
    %3480 = vmatmul.bf16.gmra.mxu0 %v2350
    %v3481 = vpop.f32.mrf.mxu0
    %v3482 = vadd.f32 0.0, %v3481
    %v3483 = vpop.f32.mrf.mxu0
    %v3484 = vadd.f32 0.0, %v3483
    %3485 = vmatmul.bf16.gmra.mxu0 %v2353
    %v3486 = vpop.f32.mrf.mxu0
    %v3487 = vadd.f32 0.0, %v3486
    %v3488 = vpop.f32.mrf.mxu0
    %v3489 = vadd.f32 0.0, %v3488
    %3490 = vmatmul.bf16.gmra.mxu0 %v2356
    %v3491 = vpop.f32.mrf.mxu0
    %v3492 = vadd.f32 0.0, %v3491
    %v3493 = vpop.f32.mrf.mxu0
    %v3494 = vadd.f32 0.0, %v3493
    %3495 = vmatmul.bf16.gmra.mxu0 %v2359
    %v3496 = vpop.f32.mrf.mxu0
    %v3497 = vadd.f32 0.0, %v3496
    %v3498 = vpop.f32.mrf.mxu0
    %v3499 = vadd.f32 0.0, %v3498
    %3500 = vmatmul.bf16.gmra.mxu0 %v2362
    %v3501 = vpop.f32.mrf.mxu0
    %v3502 = vadd.f32 0.0, %v3501
    %v3503 = vpop.f32.mrf.mxu0
    %v3504 = vadd.f32 0.0, %v3503
    %3505 = vmatmul.bf16.gmra.mxu0 %v2365
    %v3506 = vpop.f32.mrf.mxu0
    %v3507 = vadd.f32 0.0, %v3506
    %v3508 = vpop.f32.mrf.mxu0
    %v3509 = vadd.f32 0.0, %v3508
    %3510 = vmatmul.bf16.gmra.mxu0 %v2368
    %v3511 = vpop.f32.mrf.mxu0
    %v3512 = vadd.f32 0.0, %v3511
    %v3513 = vpop.f32.mrf.mxu0
    %v3514 = vadd.f32 0.0, %v3513
    %3515 = vmatmul.bf16.gmra.mxu0 %v2371
    %v3516 = vpop.f32.mrf.mxu0
    %v3517 = vadd.f32 0.0, %v3516
    %v3518 = vpop.f32.mrf.mxu0
    %v3519 = vadd.f32 0.0, %v3518
    %3520 = vmatmul.bf16.gmra.mxu0 %v2374
    %v3521 = vpop.f32.mrf.mxu0
    %v3522 = vadd.f32 0.0, %v3521
    %v3523 = vpop.f32.mrf.mxu0
    %v3524 = vadd.f32 0.0, %v3523
    %3525 = vmatmul.bf16.gmra.mxu0 %v2377
    %v3526 = vpop.f32.mrf.mxu0
    %v3527 = vadd.f32 0.0, %v3526
    %v3528 = vpop.f32.mrf.mxu0
    %v3529 = vadd.f32 0.0, %v3528
    %3530 = vmatmul.bf16.gmra.mxu0 %v2380
    %v3531 = vpop.f32.mrf.mxu0
    %v3532 = vadd.f32 0.0, %v3531
    %v3533 = vpop.f32.mrf.mxu0
    %v3534 = vadd.f32 0.0, %v3533
    %3535 = vmatmul.bf16.gmra.mxu0 %v2383
    %v3536 = vpop.f32.mrf.mxu0
    %v3537 = vadd.f32 0.0, %v3536
    %v3538 = vpop.f32.mrf.mxu0
    %v3539 = vadd.f32 0.0, %v3538
    %3540 = vmatmul.bf16.gmra.mxu0 %v2386
    %v3541 = vpop.f32.mrf.mxu0
    %v3542 = vadd.f32 0.0, %v3541
    %v3543 = vpop.f32.mrf.mxu0
    %v3544 = vadd.f32 0.0, %v3543
    %3545 = vmatmul.bf16.gmra.mxu0 %v2389
    %v3546 = vpop.f32.mrf.mxu0
    %v3547 = vadd.f32 0.0, %v3546
    %v3548 = vpop.f32.mrf.mxu0
    %v3549 = vadd.f32 0.0, %v3548
    %3550 = vmatmul.bf16.gmra.mxu0 %v2392
    %v3551 = vpop.f32.mrf.mxu0
    %v3552 = vadd.f32 0.0, %v3551
    %v3553 = vpop.f32.mrf.mxu0
    %v3554 = vadd.f32 0.0, %v3553
    %3555 = vmatmul.bf16.gmra.mxu0 %v2395
    %v3556 = vpop.f32.mrf.mxu0
    %v3557 = vadd.f32 0.0, %v3556
    %v3558 = vpop.f32.mrf.mxu0
    %v3559 = vadd.f32 0.0, %v3558
    %3560 = vmatmul.bf16.gmra.mxu0 %v2398
    %v3561 = vpop.f32.mrf.mxu0
    %v3562 = vadd.f32 0.0, %v3561
    %v3563 = vpop.f32.mrf.mxu0
    %v3564 = vadd.f32 0.0, %v3563
    %3565 = vmatmul.bf16.gmra.mxu0 %v2401
    %v3566 = vpop.f32.mrf.mxu0
    %v3567 = vadd.f32 0.0, %v3566
    %v3568 = vpop.f32.mrf.mxu0
    %v3569 = vadd.f32 0.0, %v3568
    %3570 = vmatmul.bf16.gmra.mxu0 %v2404
    %v3571 = vpop.f32.mrf.mxu0
    %v3572 = vadd.f32 0.0, %v3571
    %v3573 = vpop.f32.mrf.mxu0
    %v3574 = vadd.f32 0.0, %v3573
    %3575 = vmatmul.bf16.gmra.mxu0 %v2407
    %v3576 = vpop.f32.mrf.mxu0
    %v3577 = vadd.f32 0.0, %v3576
    %v3578 = vpop.f32.mrf.mxu0
    %v3579 = vadd.f32 0.0, %v3578
    %3580 = vmatmul.bf16.gmra.mxu0 %v2410
    %v3581 = vpop.f32.mrf.mxu0
    %v3582 = vadd.f32 0.0, %v3581
    %v3583 = vpop.f32.mrf.mxu0
    %v3584 = vadd.f32 0.0, %v3583
    %3585 = vmatmul.bf16.gmra.mxu0 %v2413
    %v3586 = vpop.f32.mrf.mxu0
    %v3587 = vadd.f32 0.0, %v3586
    %v3588 = vpop.f32.mrf.mxu0
    %v3589 = vadd.f32 0.0, %v3588
    %3590 = vmatmul.bf16.gmra.mxu0 %v2416
    %v3591 = vpop.f32.mrf.mxu0
    %v3592 = vadd.f32 0.0, %v3591
    %v3593 = vpop.f32.mrf.mxu0
    %v3594 = vadd.f32 0.0, %v3593
    %3595 = vmatmul.bf16.gmra.mxu0 %v2419
    %v3596 = vpop.f32.mrf.mxu0
    %v3597 = vadd.f32 0.0, %v3596
    %v3598 = vpop.f32.mrf.mxu0
    %v3599 = vadd.f32 0.0, %v3598
    %3600 = vmatmul.bf16.gmra.mxu0 %v2422
    %v3601 = vpop.f32.mrf.mxu0
    %v3602 = vadd.f32 0.0, %v3601
    %v3603 = vpop.f32.mrf.mxu0
    %v3604 = vadd.f32 0.0, %v3603
    %3605 = vmatmul.bf16.gmra.mxu0 %v2425
    %v3606 = vpop.f32.mrf.mxu0
    %v3607 = vadd.f32 0.0, %v3606
    %v3608 = vpop.f32.mrf.mxu0
    %v3609 = vadd.f32 0.0, %v3608
    %3610 = vmatmul.bf16.gmra.mxu0 %v2428
    %v3611 = vpop.f32.mrf.mxu0
    %v3612 = vadd.f32 0.0, %v3611
    %v3613 = vpop.f32.mrf.mxu0
    %v3614 = vadd.f32 0.0, %v3613
    %3615 = vmatmul.bf16.gmra.mxu0 %v2431
    %v3616 = vpop.f32.mrf.mxu0
    %v3617 = vadd.f32 0.0, %v3616
    %v3618 = vpop.f32.mrf.mxu0
    %v3619 = vadd.f32 0.0, %v3618
    %3620 = vmatmul.bf16.gmra.mxu0 %v2434
    %v3621 = vpop.f32.mrf.mxu0
    %v3622 = vadd.f32 0.0, %v3621
    %v3623 = vpop.f32.mrf.mxu0
    %v3624 = vadd.f32 0.0, %v3623
    %3625 = vmatmul.bf16.gmra.mxu0 %v2437
    %v3626 = vpop.f32.mrf.mxu0
    %v3627 = vadd.f32 0.0, %v3626
    %v3628 = vpop.f32.mrf.mxu0
    %v3629 = vadd.f32 0.0, %v3628
    %3630 = vmatmul.bf16.gmra.mxu0 %v2440
    %v3631 = vpop.f32.mrf.mxu0
    %v3632 = vadd.f32 0.0, %v3631
    %v3633 = vpop.f32.mrf.mxu0
    %v3634 = vadd.f32 0.0, %v3633
    %3635 = vmatmul.bf16.gmra.mxu0 %v2443
    %v3636 = vpop.f32.mrf.mxu0
    %v3637 = vadd.f32 0.0, %v3636
    %v3638 = vpop.f32.mrf.mxu0
    %v3639 = vadd.f32 0.0, %v3638
    %3640 = vmatmul.bf16.gmra.mxu0 %v2446
    %v3641 = vpop.f32.mrf.mxu0
    %v3642 = vadd.f32 0.0, %v3641
    %v3643 = vpop.f32.mrf.mxu0
    %v3644 = vadd.f32 0.0, %v3643
    %3645 = vmatmul.bf16.gmra.mxu0 %v2449
    %v3646 = vpop.f32.mrf.mxu0
    %v3647 = vadd.f32 0.0, %v3646
    %v3648 = vpop.f32.mrf.mxu0
    %v3649 = vadd.f32 0.0, %v3648
    %3650 = vmatmul.bf16.gmra.mxu0 %v2452
    %v3651 = vpop.f32.mrf.mxu0
    %v3652 = vadd.f32 0.0, %v3651
    %v3653 = vpop.f32.mrf.mxu0
    %v3654 = vadd.f32 0.0, %v3653
    %3655 = vmatmul.bf16.gmra.mxu0 %v2455
    %v3656 = vpop.f32.mrf.mxu0
    %v3657 = vadd.f32 0.0, %v3656
    %v3658 = vpop.f32.mrf.mxu0
    %v3659 = vadd.f32 0.0, %v3658
    %3660 = vmatmul.bf16.gmra.mxu0 %v2458
    %v3661 = vpop.f32.mrf.mxu0
    %v3662 = vadd.f32 0.0, %v3661
    %v3663 = vpop.f32.mrf.mxu0
    %v3664 = vadd.f32 0.0, %v3663
    %3665 = vmatmul.bf16.gmra.mxu0 %v2461
    %v3666 = vpop.f32.mrf.mxu0
    %v3667 = vadd.f32 0.0, %v3666
    %v3668 = vpop.f32.mrf.mxu0
    %v3669 = vadd.f32 0.0, %v3668
    %3670 = vmatmul.bf16.gmra.mxu0 %v2464
    %v3671 = vpop.f32.mrf.mxu0
    %v3672 = vadd.f32 0.0, %v3671
    %v3673 = vpop.f32.mrf.mxu0
    %v3674 = vadd.f32 0.0, %v3673
    %3675 = vmatmul.bf16.gmra.mxu0 %v2467
    %v3676 = vpop.f32.mrf.mxu0
    %v3677 = vadd.f32 0.0, %v3676
    %v3678 = vpop.f32.mrf.mxu0
    %v3679 = vadd.f32 0.0, %v3678
    %3680 = vmatmul.bf16.gmra.mxu0 %v2470
    %v3681 = vpop.f32.mrf.mxu0
    %v3682 = vadd.f32 0.0, %v3681
    %v3683 = vpop.f32.mrf.mxu0
    %v3684 = vadd.f32 0.0, %v3683
    %3685 = vmatmul.bf16.gmra.mxu0 %v2473
    %v3686 = vpop.f32.mrf.mxu0
    %v3687 = vadd.f32 0.0, %v3686
    %v3688 = vpop.f32.mrf.mxu0
    %v3689 = vadd.f32 0.0, %v3688
    %3690 = vmatmul.bf16.gmra.mxu0 %v2476
    %v3691 = vpop.f32.mrf.mxu0
    %v3692 = vadd.f32 0.0, %v3691
    %v3693 = vpop.f32.mrf.mxu0
    %v3694 = vadd.f32 0.0, %v3693
    %3695 = vmatmul.bf16.gmra.mxu0 %v2479
    %v3696 = vpop.f32.mrf.mxu0
    %v3697 = vadd.f32 0.0, %v3696
    %v3698 = vpop.f32.mrf.mxu0
    %v3699 = vadd.f32 0.0, %v3698
    %3700 = vmatmul.bf16.gmra.mxu0 %v2482
    %v3701 = vpop.f32.mrf.mxu0
    %v3702 = vadd.f32 0.0, %v3701
    %v3703 = vpop.f32.mrf.mxu0
    %v3704 = vadd.f32 0.0, %v3703
    %3705 = vmatmul.bf16.gmra.mxu0 %v2485
    %v3706 = vpop.f32.mrf.mxu0
    %v3707 = vadd.f32 0.0, %v3706
    %v3708 = vpop.f32.mrf.mxu0
    %v3709 = vadd.f32 0.0, %v3708
    %3710 = vmatmul.bf16.gmra.mxu0 %v2488
    %v3711 = vpop.f32.mrf.mxu0
    %v3712 = vadd.f32 0.0, %v3711
    %v3713 = vpop.f32.mrf.mxu0
    %v3714 = vadd.f32 0.0, %v3713
    %3715 = vmatmul.bf16.gmra.mxu0 %v2491
    %v3716 = vpop.f32.mrf.mxu0
    %v3717 = vadd.f32 0.0, %v3716
    %v3718 = vpop.f32.mrf.mxu0
    %v3719 = vadd.f32 0.0, %v3718
    %3720 = vmatmul.bf16.gmra.mxu0 %v2494
    %v3721 = vpop.f32.mrf.mxu0
    %v3722 = vadd.f32 0.0, %v3721
    %v3723 = vpop.f32.mrf.mxu0
    %v3724 = vadd.f32 0.0, %v3723
    %3725 = vmatmul.bf16.gmra.mxu0 %v2497
    %v3726 = vpop.f32.mrf.mxu0
    %v3727 = vadd.f32 0.0, %v3726
    %v3728 = vpop.f32.mrf.mxu0
    %v3729 = vadd.f32 0.0, %v3728
    %3730 = vmatmul.bf16.gmra.mxu0 %v2500
    %v3731 = vpop.f32.mrf.mxu0
    %v3732 = vadd.f32 0.0, %v3731
    %v3733 = vpop.f32.mrf.mxu0
    %v3734 = vadd.f32 0.0, %v3733
    %3735 = vmatmul.bf16.gmra.mxu0 %v2503
    %v3736 = vpop.f32.mrf.mxu0
    %v3737 = vadd.f32 0.0, %v3736
    %v3738 = vpop.f32.mrf.mxu0
    %v3739 = vadd.f32 0.0, %v3738
    %3740 = vmatmul.bf16.gmra.mxu0 %v2506
    %v3741 = vpop.f32.mrf.mxu0
    %v3742 = vadd.f32 0.0, %v3741
    %v3743 = vpop.f32.mrf.mxu0
    %v3744 = vadd.f32 0.0, %v3743
    %3745 = vmatmul.bf16.gmra.mxu0 %v2509
    %v3746 = vpop.f32.mrf.mxu0
    %v3747 = vadd.f32 0.0, %v3746
    %v3748 = vpop.f32.mrf.mxu0
    %v3749 = vadd.f32 0.0, %v3748
    %3750 = vmatmul.bf16.gmra.mxu0 %v2512
    %v3751 = vpop.f32.mrf.mxu0
    %v3752 = vadd.f32 0.0, %v3751
    %v3753 = vpop.f32.mrf.mxu0
    %v3754 = vadd.f32 0.0, %v3753
    %3755 = vmatmul.bf16.gmra.mxu0 %v2515
    %v3756 = vpop.f32.mrf.mxu0
    %v3757 = vadd.f32 0.0, %v3756
    %v3758 = vpop.f32.mrf.mxu0
    %v3759 = vadd.f32 0.0, %v3758
    %3760 = vmatmul.bf16.gmra.mxu0 %v2518
    %v3761 = vpop.f32.mrf.mxu0
    %v3762 = vadd.f32 0.0, %v3761
    %v3763 = vpop.f32.mrf.mxu0
    %v3764 = vadd.f32 0.0, %v3763
    %3765 = vmatmul.bf16.gmra.mxu0 %v2521
    %v3766 = vpop.f32.mrf.mxu0
    %v3767 = vadd.f32 0.0, %v3766
    %v3768 = vpop.f32.mrf.mxu0
    %v3769 = vadd.f32 0.0, %v3768
    %3770 = vmatmul.bf16.gmra.mxu0 %v2524
    %v3771 = vpop.f32.mrf.mxu0
    %v3772 = vadd.f32 0.0, %v3771
    %v3773 = vpop.f32.mrf.mxu0
    %v3774 = vadd.f32 0.0, %v3773
    %3775 = vmatmul.bf16.gmra.mxu0 %v2527
    %v3776 = vpop.f32.mrf.mxu0
    %v3777 = vadd.f32 0.0, %v3776
    %v3778 = vpop.f32.mrf.mxu0
    %v3779 = vadd.f32 0.0, %v3778
    %3780 = vmatmul.bf16.gmra.mxu0 %v2530
    %v3781 = vpop.f32.mrf.mxu0
    %v3782 = vadd.f32 0.0, %v3781
    %v3783 = vpop.f32.mrf.mxu0
    %v3784 = vadd.f32 0.0, %v3783
    %3785 = vmatmul.bf16.gmra.mxu0 %v2533
    %v3786 = vpop.f32.mrf.mxu0
    %v3787 = vadd.f32 0.0, %v3786
    %v3788 = vpop.f32.mrf.mxu0
    %v3789 = vadd.f32 0.0, %v3788
    %3790 = vmatmul.bf16.gmra.mxu0 %v2536
    %v3791 = vpop.f32.mrf.mxu0
    %v3792 = vadd.f32 0.0, %v3791
    %v3793 = vpop.f32.mrf.mxu0
    %v3794 = vadd.f32 0.0, %v3793
    %3795 = vmatmul.bf16.gmra.mxu0 %v2539
    %v3796 = vpop.f32.mrf.mxu0
    %v3797 = vadd.f32 0.0, %v3796
    %v3798 = vpop.f32.mrf.mxu0
    %v3799 = vadd.f32 0.0, %v3798
    %3800 = vmatmul.bf16.gmra.mxu0 %v2542
    %v3801 = vpop.f32.mrf.mxu0
    %v3802 = vadd.f32 0.0, %v3801
    %v3803 = vpop.f32.mrf.mxu0
    %v3804 = vadd.f32 0.0, %v3803
    %3805 = vmatmul.bf16.gmra.mxu0 %v2545
    %v3806 = vpop.f32.mrf.mxu0
    %v3807 = vadd.f32 0.0, %v3806
    %v3808 = vpop.f32.mrf.mxu0
    %v3809 = vadd.f32 0.0, %v3808
    %3810 = vmatmul.bf16.gmra.mxu0 %v2548
    %v3811 = vpop.f32.mrf.mxu0
    %v3812 = vadd.f32 0.0, %v3811
    %v3813 = vpop.f32.mrf.mxu0
    %v3814 = vadd.f32 0.0, %v3813
    %3815 = vmatmul.bf16.gmra.mxu0 %v2551
    %v3816 = vpop.f32.mrf.mxu0
    %v3817 = vadd.f32 0.0, %v3816
    %v3818 = vpop.f32.mrf.mxu0
    %v3819 = vadd.f32 0.0, %v3818
    %3820 = vmatmul.bf16.gmra.mxu0 %v2554
    %v3821 = vpop.f32.mrf.mxu0
    %v3822 = vadd.f32 0.0, %v3821
    %v3823 = vpop.f32.mrf.mxu0
    %v3824 = vadd.f32 0.0, %v3823
    %3825 = vmatmul.bf16.gmra.mxu0 %v2557
    %v3826 = vpop.f32.mrf.mxu0
    %v3827 = vadd.f32 0.0, %v3826
    %v3828 = vpop.f32.mrf.mxu0
    %v3829 = vadd.f32 0.0, %v3828
    %3830 = vmatmul.bf16.gmra.mxu0 %v2560
    %v3831 = vpop.f32.mrf.mxu0
    %v3832 = vadd.f32 0.0, %v3831
    %v3833 = vpop.f32.mrf.mxu0
    %v3834 = vadd.f32 0.0, %v3833
    %3835 = vmatmul.bf16.gmra.mxu0 %v2563
    %v3836 = vpop.f32.mrf.mxu0
    %v3837 = vadd.f32 0.0, %v3836
    %v3838 = vpop.f32.mrf.mxu0
    %v3839 = vadd.f32 0.0, %v3838
    %3840 = vmatmul.bf16.gmra.mxu0 %v2566
    %v3841 = vpop.f32.mrf.mxu0
    %v3842 = vadd.f32 0.0, %v3841
    %v3843 = vpop.f32.mrf.mxu0
    %v3844 = vadd.f32 0.0, %v3843
    %3845 = vmatmul.bf16.gmra.mxu0 %v2569
    %v3846 = vpop.f32.mrf.mxu0
    %v3847 = vadd.f32 0.0, %v3846
    %v3848 = vpop.f32.mrf.mxu0
    %v3849 = vadd.f32 0.0, %v3848
    %3850 = vmatmul.bf16.gmra.mxu0 %v2572
    %v3851 = vpop.f32.mrf.mxu0
    %v3852 = vadd.f32 0.0, %v3851
    %v3853 = vpop.f32.mrf.mxu0
    %v3854 = vadd.f32 0.0, %v3853
    %3855 = vmatmul.bf16.gmra.mxu0 %v2575
    %v3856 = vpop.f32.mrf.mxu0
    %v3857 = vadd.f32 0.0, %v3856
    %v3858 = vpop.f32.mrf.mxu0
    %v3859 = vadd.f32 0.0, %v3858
    %3860 = vmatmul.bf16.gmra.mxu0 %v2578
    %v3861 = vpop.f32.mrf.mxu0
    %v3862 = vadd.f32 0.0, %v3861
    %v3863 = vpop.f32.mrf.mxu0
    %v3864 = vadd.f32 0.0, %v3863
    %3865 = vmatmul.bf16.gmra.mxu0 %v2581
    %v3866 = vpop.f32.mrf.mxu0
    %v3867 = vadd.f32 0.0, %v3866
    %v3868 = vpop.f32.mrf.mxu0
    %v3869 = vadd.f32 0.0, %v3868
    %3870 = vmatmul.bf16.gmra.mxu0 %v2584
    %v3871 = vpop.f32.mrf.mxu0
    %v3872 = vadd.f32 0.0, %v3871
    %v3873 = vpop.f32.mrf.mxu0
    %v3874 = vadd.f32 0.0, %v3873
    %3875 = vmatmul.bf16.gmra.mxu0 %v2587
    %v3876 = vpop.f32.mrf.mxu0
    %v3877 = vadd.f32 0.0, %v3876
    %v3878 = vpop.f32.mrf.mxu0
    %v3879 = vadd.f32 0.0, %v3878
    %3880 = vmatmul.bf16.gmra.mxu0 %v2590
    %v3881 = vpop.f32.mrf.mxu0
    %v3882 = vadd.f32 0.0, %v3881
    %v3883 = vpop.f32.mrf.mxu0
    %v3884 = vadd.f32 0.0, %v3883
    %3885 = vmatmul.bf16.gmra.mxu0 %v2593
    %v3886 = vpop.f32.mrf.mxu0
    %v3887 = vadd.f32 0.0, %v3886
    %v3888 = vpop.f32.mrf.mxu0
    %v3889 = vadd.f32 0.0, %v3888
    %3890 = vdwg.mxu0
    %v3891 = vld [vmem:[%s2] sm:$0x1]
    %v3893 = vperm.slane %v3891, 0
    %v3895 = vmul.f32 %v2612, %v3893
    %v3896 = vmul.f32 %v2614, %v3893
    %v3897 = vmul.f32 %v2617, %v3893
    %v3898 = vmul.f32 %v2619, %v3893
    %v3899 = vmul.f32 %v2622, %v3893
    %v3900 = vmul.f32 %v2624, %v3893
    %v3901 = vmul.f32 %v2627, %v3893
    %v3902 = vmul.f32 %v2629, %v3893
    %v3903 = vmul.f32 %v2632, %v3893
    %v3904 = vmul.f32 %v2634, %v3893
    %v3905 = vmul.f32 %v2637, %v3893
    %v3906 = vmul.f32 %v2639, %v3893
    %v3907 = vmul.f32 %v2642, %v3893
    %v3908 = vmul.f32 %v2644, %v3893
    %v3909 = vmul.f32 %v2647, %v3893
    %v3910 = vmul.f32 %v2649, %v3893
    %v3911 = vmul.f32 %v2652, %v3893
    %v3912 = vmul.f32 %v2654, %v3893
    %v3913 = vmul.f32 %v2657, %v3893
    %v3914 = vmul.f32 %v2659, %v3893
    %v3915 = vmul.f32 %v2662, %v3893
    %v3916 = vmul.f32 %v2664, %v3893
    %v3917 = vmul.f32 %v2667, %v3893
    %v3918 = vmul.f32 %v2669, %v3893
    %v3919 = vmul.f32 %v2672, %v3893
    %v3920 = vmul.f32 %v2674, %v3893
    %v3921 = vmul.f32 %v2677, %v3893
    %v3922 = vmul.f32 %v2679, %v3893
    %v3923 = vmul.f32 %v2682, %v3893
    %v3924 = vmul.f32 %v2684, %v3893
    %v3925 = vmul.f32 %v2687, %v3893
    %v3926 = vmul.f32 %v2689, %v3893
    %v3927 = vmul.f32 %v2692, %v3893
    %v3928 = vmul.f32 %v2694, %v3893
    %v3929 = vmul.f32 %v2697, %v3893
    %v3930 = vmul.f32 %v2699, %v3893
    %v3931 = vmul.f32 %v2702, %v3893
    %v3932 = vmul.f32 %v2704, %v3893
    %v3933 = vmul.f32 %v2707, %v3893
    %v3934 = vmul.f32 %v2709, %v3893
    %v3935 = vmul.f32 %v2712, %v3893
    %v3936 = vmul.f32 %v2714, %v3893
    %v3937 = vmul.f32 %v2717, %v3893
    %v3938 = vmul.f32 %v2719, %v3893
    %v3939 = vmul.f32 %v2722, %v3893
    %v3940 = vmul.f32 %v2724, %v3893
    %v3941 = vmul.f32 %v2727, %v3893
    %v3942 = vmul.f32 %v2729, %v3893
    %v3943 = vmul.f32 %v2732, %v3893
    %v3944 = vmul.f32 %v2734, %v3893
    %v3945 = vmul.f32 %v2737, %v3893
    %v3946 = vmul.f32 %v2739, %v3893
    %v3947 = vmul.f32 %v2742, %v3893
    %v3948 = vmul.f32 %v2744, %v3893
    %v3949 = vmul.f32 %v2747, %v3893
    %v3950 = vmul.f32 %v2749, %v3893
    %v3951 = vmul.f32 %v2752, %v3893
    %v3952 = vmul.f32 %v2754, %v3893
    %v3953 = vmul.f32 %v2757, %v3893
    %v3954 = vmul.f32 %v2759, %v3893
    %v3955 = vmul.f32 %v2762, %v3893
    %v3956 = vmul.f32 %v2764, %v3893
    %v3957 = vmul.f32 %v2767, %v3893
    %v3958 = vmul.f32 %v2769, %v3893
    %v3959 = vmul.f32 %v2772, %v3893
    %v3960 = vmul.f32 %v2774, %v3893
    %v3961 = vmul.f32 %v2777, %v3893
    %v3962 = vmul.f32 %v2779, %v3893
    %v3963 = vmul.f32 %v2782, %v3893
    %v3964 = vmul.f32 %v2784, %v3893
    %v3965 = vmul.f32 %v2787, %v3893
    %v3966 = vmul.f32 %v2789, %v3893
    %v3967 = vmul.f32 %v2792, %v3893
    %v3968 = vmul.f32 %v2794, %v3893
    %v3969 = vmul.f32 %v2797, %v3893
    %v3970 = vmul.f32 %v2799, %v3893
    %v3971 = vmul.f32 %v2802, %v3893
    %v3972 = vmul.f32 %v2804, %v3893
    %v3973 = vmul.f32 %v2807, %v3893
    %v3974 = vmul.f32 %v2809, %v3893
    %v3975 = vmul.f32 %v2812, %v3893
    %v3976 = vmul.f32 %v2814, %v3893
    %v3977 = vmul.f32 %v2817, %v3893
    %v3978 = vmul.f32 %v2819, %v3893
    %v3979 = vmul.f32 %v2822, %v3893
    %v3980 = vmul.f32 %v2824, %v3893
    %v3981 = vmul.f32 %v2827, %v3893
    %v3982 = vmul.f32 %v2829, %v3893
    %v3983 = vmul.f32 %v2832, %v3893
    %v3984 = vmul.f32 %v2834, %v3893
    %v3985 = vmul.f32 %v2837, %v3893
    %v3986 = vmul.f32 %v2839, %v3893
    %v3987 = vmul.f32 %v2842, %v3893
    %v3988 = vmul.f32 %v2844, %v3893
    %v3989 = vmul.f32 %v2847, %v3893
    %v3990 = vmul.f32 %v2849, %v3893
    %v3991 = vmul.f32 %v2852, %v3893
    %v3992 = vmul.f32 %v2854, %v3893
    %v3993 = vmul.f32 %v2857, %v3893
    %v3994 = vmul.f32 %v2859, %v3893
    %v3995 = vmul.f32 %v2862, %v3893
    %v3996 = vmul.f32 %v2864, %v3893
    %v3997 = vmul.f32 %v2867, %v3893
    %v3998 = vmul.f32 %v2869, %v3893
    %v3999 = vmul.f32 %v2872, %v3893
    %v4000 = vmul.f32 %v2874, %v3893
    %v4001 = vmul.f32 %v2877, %v3893
    %v4002 = vmul.f32 %v2879, %v3893
    %v4003 = vmul.f32 %v2882, %v3893
    %v4004 = vmul.f32 %v2884, %v3893
    %v4005 = vmul.f32 %v2887, %v3893
    %v4006 = vmul.f32 %v2889, %v3893
    %v4007 = vmul.f32 %v2892, %v3893
    %v4008 = vmul.f32 %v2894, %v3893
    %v4009 = vmul.f32 %v2897, %v3893
    %v4010 = vmul.f32 %v2899, %v3893
    %v4011 = vmul.f32 %v2902, %v3893
    %v4012 = vmul.f32 %v2904, %v3893
    %v4013 = vmul.f32 %v2907, %v3893
    %v4014 = vmul.f32 %v2909, %v3893
    %v4015 = vmul.f32 %v2912, %v3893
    %v4016 = vmul.f32 %v2914, %v3893
    %v4017 = vmul.f32 %v2917, %v3893
    %v4018 = vmul.f32 %v2919, %v3893
    %v4019 = vmul.f32 %v2922, %v3893
    %v4020 = vmul.f32 %v2924, %v3893
    %v4021 = vmul.f32 %v2927, %v3893
    %v4022 = vmul.f32 %v2929, %v3893
    %v4023 = vmul.f32 %v2932, %v3893
    %v4024 = vmul.f32 %v2934, %v3893
    %v4025 = vmul.f32 %v2937, %v3893
    %v4026 = vmul.f32 %v2939, %v3893
    %v4027 = vmul.f32 %v2942, %v3893
    %v4028 = vmul.f32 %v2944, %v3893
    %v4029 = vmul.f32 %v2947, %v3893
    %v4030 = vmul.f32 %v2949, %v3893
    %v4031 = vmul.f32 %v2952, %v3893
    %v4032 = vmul.f32 %v2954, %v3893
    %v4033 = vmul.f32 %v2957, %v3893
    %v4034 = vmul.f32 %v2959, %v3893
    %v4035 = vmul.f32 %v2962, %v3893
    %v4036 = vmul.f32 %v2964, %v3893
    %v4037 = vmul.f32 %v2967, %v3893
    %v4038 = vmul.f32 %v2969, %v3893
    %v4039 = vmul.f32 %v2972, %v3893
    %v4040 = vmul.f32 %v2974, %v3893
    %v4041 = vmul.f32 %v2977, %v3893
    %v4042 = vmul.f32 %v2979, %v3893
    %v4043 = vmul.f32 %v2982, %v3893
    %v4044 = vmul.f32 %v2984, %v3893
    %v4045 = vmul.f32 %v2987, %v3893
    %v4046 = vmul.f32 %v2989, %v3893
    %v4047 = vmul.f32 %v2992, %v3893
    %v4048 = vmul.f32 %v2994, %v3893
    %v4049 = vmul.f32 %v2997, %v3893
    %v4050 = vmul.f32 %v2999, %v3893
    %v4051 = vmul.f32 %v3002, %v3893
    %v4052 = vmul.f32 %v3004, %v3893
    %v4053 = vmul.f32 %v3007, %v3893
    %v4054 = vmul.f32 %v3009, %v3893
    %v4055 = vmul.f32 %v3012, %v3893
    %v4056 = vmul.f32 %v3014, %v3893
    %v4057 = vmul.f32 %v3017, %v3893
    %v4058 = vmul.f32 %v3019, %v3893
    %v4059 = vmul.f32 %v3022, %v3893
    %v4060 = vmul.f32 %v3024, %v3893
    %v4061 = vmul.f32 %v3027, %v3893
    %v4062 = vmul.f32 %v3029, %v3893
    %v4063 = vmul.f32 %v3032, %v3893
    %v4064 = vmul.f32 %v3034, %v3893
    %v4065 = vmul.f32 %v3037, %v3893
    %v4066 = vmul.f32 %v3039, %v3893
    %v4067 = vmul.f32 %v3042, %v3893
    %v4068 = vmul.f32 %v3044, %v3893
    %v4069 = vmul.f32 %v3047, %v3893
    %v4070 = vmul.f32 %v3049, %v3893
    %v4071 = vmul.f32 %v3052, %v3893
    %v4072 = vmul.f32 %v3054, %v3893
    %v4073 = vmul.f32 %v3057, %v3893
    %v4074 = vmul.f32 %v3059, %v3893
    %v4075 = vmul.f32 %v3062, %v3893
    %v4076 = vmul.f32 %v3064, %v3893
    %v4077 = vmul.f32 %v3067, %v3893
    %v4078 = vmul.f32 %v3069, %v3893
    %v4079 = vmul.f32 %v3072, %v3893
    %v4080 = vmul.f32 %v3074, %v3893
    %v4081 = vmul.f32 %v3077, %v3893
    %v4082 = vmul.f32 %v3079, %v3893
    %v4083 = vmul.f32 %v3082, %v3893
    %v4084 = vmul.f32 %v3084, %v3893
    %v4085 = vmul.f32 %v3087, %v3893
    %v4086 = vmul.f32 %v3089, %v3893
    %v4087 = vmul.f32 %v3092, %v3893
    %v4088 = vmul.f32 %v3094, %v3893
    %v4089 = vmul.f32 %v3097, %v3893
    %v4090 = vmul.f32 %v3099, %v3893
    %v4091 = vmul.f32 %v3102, %v3893
    %v4092 = vmul.f32 %v3104, %v3893
    %v4093 = vmul.f32 %v3107, %v3893
    %v4094 = vmul.f32 %v3109, %v3893
    %v4095 = vmul.f32 %v3112, %v3893
    %v4096 = vmul.f32 %v3114, %v3893
    %v4097 = vmul.f32 %v3117, %v3893
    %v4098 = vmul.f32 %v3119, %v3893
    %v4099 = vmul.f32 %v3122, %v3893
    %v4100 = vmul.f32 %v3124, %v3893
    %v4101 = vmul.f32 %v3127, %v3893
    %v4102 = vmul.f32 %v3129, %v3893
    %v4103 = vmul.f32 %v3132, %v3893
    %v4104 = vmul.f32 %v3134, %v3893
    %v4105 = vmul.f32 %v3137, %v3893
    %v4106 = vmul.f32 %v3139, %v3893
    %v4107 = vmul.f32 %v3142, %v3893
    %v4108 = vmul.f32 %v3144, %v3893
    %v4109 = vmul.f32 %v3147, %v3893
    %v4110 = vmul.f32 %v3149, %v3893
    %v4111 = vmul.f32 %v3152, %v3893
    %v4112 = vmul.f32 %v3154, %v3893
    %v4113 = vmul.f32 %v3157, %v3893
    %v4114 = vmul.f32 %v3159, %v3893
    %v4115 = vmul.f32 %v3162, %v3893
    %v4116 = vmul.f32 %v3164, %v3893
    %v4117 = vmul.f32 %v3167, %v3893
    %v4118 = vmul.f32 %v3169, %v3893
    %v4119 = vmul.f32 %v3172, %v3893
    %v4120 = vmul.f32 %v3174, %v3893
    %v4121 = vmul.f32 %v3177, %v3893
    %v4122 = vmul.f32 %v3179, %v3893
    %v4123 = vmul.f32 %v3182, %v3893
    %v4124 = vmul.f32 %v3184, %v3893
    %v4125 = vmul.f32 %v3187, %v3893
    %v4126 = vmul.f32 %v3189, %v3893
    %v4127 = vmul.f32 %v3192, %v3893
    %v4128 = vmul.f32 %v3194, %v3893
    %v4129 = vmul.f32 %v3197, %v3893
    %v4130 = vmul.f32 %v3199, %v3893
    %v4131 = vmul.f32 %v3202, %v3893
    %v4132 = vmul.f32 %v3204, %v3893
    %v4133 = vmul.f32 %v3207, %v3893
    %v4134 = vmul.f32 %v3209, %v3893
    %v4135 = vmul.f32 %v3212, %v3893
    %v4136 = vmul.f32 %v3214, %v3893
    %v4137 = vmul.f32 %v3217, %v3893
    %v4138 = vmul.f32 %v3219, %v3893
    %v4139 = vmul.f32 %v3222, %v3893
    %v4140 = vmul.f32 %v3224, %v3893
    %v4141 = vmul.f32 %v3227, %v3893
    %v4142 = vmul.f32 %v3229, %v3893
    %v4143 = vmul.f32 %v3232, %v3893
    %v4144 = vmul.f32 %v3234, %v3893
    %v4145 = vmul.f32 %v3237, %v3893
    %v4146 = vmul.f32 %v3239, %v3893
    %v4147 = vmul.f32 %v3242, %v3893
    %v4148 = vmul.f32 %v3244, %v3893
    %v4149 = vmul.f32 %v3247, %v3893
    %v4150 = vmul.f32 %v3249, %v3893
    %v4151 = vmul.f32 %v3252, %v3893
    %v4152 = vmul.f32 %v3254, %v3893
    %v4153 = vmul.f32 %v3257, %v3893
    %v4154 = vmul.f32 %v3259, %v3893
    %v4155 = vmul.f32 %v3262, %v3893
    %v4156 = vmul.f32 %v3264, %v3893
    %v4157 = vmul.f32 %v3267, %v3893
    %v4158 = vmul.f32 %v3269, %v3893
    %v4159 = vmul.f32 %v3272, %v3893
    %v4160 = vmul.f32 %v3274, %v3893
    %v4161 = vmul.f32 %v3277, %v3893
    %v4162 = vmul.f32 %v3279, %v3893
    %v4163 = vmul.f32 %v3282, %v3893
    %v4164 = vmul.f32 %v3284, %v3893
    %v4165 = vmul.f32 %v3287, %v3893
    %v4166 = vmul.f32 %v3289, %v3893
    %v4167 = vmul.f32 %v3292, %v3893
    %v4168 = vmul.f32 %v3294, %v3893
    %v4169 = vmul.f32 %v3297, %v3893
    %v4170 = vmul.f32 %v3299, %v3893
    %v4171 = vmul.f32 %v3302, %v3893
    %v4172 = vmul.f32 %v3304, %v3893
    %v4173 = vmul.f32 %v3307, %v3893
    %v4174 = vmul.f32 %v3309, %v3893
    %v4175 = vmul.f32 %v3312, %v3893
    %v4176 = vmul.f32 %v3314, %v3893
    %v4177 = vmul.f32 %v3317, %v3893
    %v4178 = vmul.f32 %v3319, %v3893
    %v4179 = vmul.f32 %v3322, %v3893
    %v4180 = vmul.f32 %v3324, %v3893
    %v4181 = vmul.f32 %v3327, %v3893
    %v4182 = vmul.f32 %v3329, %v3893
    %v4183 = vmul.f32 %v3332, %v3893
    %v4184 = vmul.f32 %v3334, %v3893
    %v4185 = vmul.f32 %v3337, %v3893
    %v4186 = vmul.f32 %v3339, %v3893
    %v4187 = vmul.f32 %v3342, %v3893
    %v4188 = vmul.f32 %v3344, %v3893
    %v4189 = vmul.f32 %v3347, %v3893
    %v4190 = vmul.f32 %v3349, %v3893
    %v4191 = vmul.f32 %v3352, %v3893
    %v4192 = vmul.f32 %v3354, %v3893
    %v4193 = vmul.f32 %v3357, %v3893
    %v4194 = vmul.f32 %v3359, %v3893
    %v4195 = vmul.f32 %v3362, %v3893
    %v4196 = vmul.f32 %v3364, %v3893
    %v4197 = vmul.f32 %v3367, %v3893
    %v4198 = vmul.f32 %v3369, %v3893
    %v4199 = vmul.f32 %v3372, %v3893
    %v4200 = vmul.f32 %v3374, %v3893
    %v4201 = vmul.f32 %v3377, %v3893
    %v4202 = vmul.f32 %v3379, %v3893
    %v4203 = vmul.f32 %v3382, %v3893
    %v4204 = vmul.f32 %v3384, %v3893
    %v4205 = vmul.f32 %v3387, %v3893
    %v4206 = vmul.f32 %v3389, %v3893
    %v4207 = vmul.f32 %v3392, %v3893
    %v4208 = vmul.f32 %v3394, %v3893
    %v4209 = vmul.f32 %v3397, %v3893
    %v4210 = vmul.f32 %v3399, %v3893
    %v4211 = vmul.f32 %v3402, %v3893
    %v4212 = vmul.f32 %v3404, %v3893
    %v4213 = vmul.f32 %v3407, %v3893
    %v4214 = vmul.f32 %v3409, %v3893
    %v4215 = vmul.f32 %v3412, %v3893
    %v4216 = vmul.f32 %v3414, %v3893
    %v4217 = vmul.f32 %v3417, %v3893
    %v4218 = vmul.f32 %v3419, %v3893
    %v4219 = vmul.f32 %v3422, %v3893
    %v4220 = vmul.f32 %v3424, %v3893
    %v4221 = vmul.f32 %v3427, %v3893
    %v4222 = vmul.f32 %v3429, %v3893
    %v4223 = vmul.f32 %v3432, %v3893
    %v4224 = vmul.f32 %v3434, %v3893
    %v4225 = vmul.f32 %v3437, %v3893
    %v4226 = vmul.f32 %v3439, %v3893
    %v4227 = vmul.f32 %v3442, %v3893
    %v4228 = vmul.f32 %v3444, %v3893
    %v4229 = vmul.f32 %v3447, %v3893
    %v4230 = vmul.f32 %v3449, %v3893
    %v4231 = vmul.f32 %v3452, %v3893
    %v4232 = vmul.f32 %v3454, %v3893
    %v4233 = vmul.f32 %v3457, %v3893
    %v4234 = vmul.f32 %v3459, %v3893
    %v4235 = vmul.f32 %v3462, %v3893
    %v4236 = vmul.f32 %v3464, %v3893
    %v4237 = vmul.f32 %v3467, %v3893
    %v4238 = vmul.f32 %v3469, %v3893
    %v4239 = vmul.f32 %v3472, %v3893
    %v4240 = vmul.f32 %v3474, %v3893
    %v4241 = vmul.f32 %v3477, %v3893
    %v4242 = vmul.f32 %v3479, %v3893
    %v4243 = vmul.f32 %v3482, %v3893
    %v4244 = vmul.f32 %v3484, %v3893
    %v4245 = vmul.f32 %v3487, %v3893
    %v4246 = vmul.f32 %v3489, %v3893
    %v4247 = vmul.f32 %v3492, %v3893
    %v4248 = vmul.f32 %v3494, %v3893
    %v4249 = vmul.f32 %v3497, %v3893
    %v4250 = vmul.f32 %v3499, %v3893
    %v4251 = vmul.f32 %v3502, %v3893
    %v4252 = vmul.f32 %v3504, %v3893
    %v4253 = vmul.f32 %v3507, %v3893
    %v4254 = vmul.f32 %v3509, %v3893
    %v4255 = vmul.f32 %v3512, %v3893
    %v4256 = vmul.f32 %v3514, %v3893
    %v4257 = vmul.f32 %v3517, %v3893
    %v4258 = vmul.f32 %v3519, %v3893
    %v4259 = vmul.f32 %v3522, %v3893
    %v4260 = vmul.f32 %v3524, %v3893
    %v4261 = vmul.f32 %v3527, %v3893
    %v4262 = vmul.f32 %v3529, %v3893
    %v4263 = vmul.f32 %v3532, %v3893
    %v4264 = vmul.f32 %v3534, %v3893
    %v4265 = vmul.f32 %v3537, %v3893
    %v4266 = vmul.f32 %v3539, %v3893
    %v4267 = vmul.f32 %v3542, %v3893
    %v4268 = vmul.f32 %v3544, %v3893
    %v4269 = vmul.f32 %v3547, %v3893
    %v4270 = vmul.f32 %v3549, %v3893
    %v4271 = vmul.f32 %v3552, %v3893
    %v4272 = vmul.f32 %v3554, %v3893
    %v4273 = vmul.f32 %v3557, %v3893
    %v4274 = vmul.f32 %v3559, %v3893
    %v4275 = vmul.f32 %v3562, %v3893
    %v4276 = vmul.f32 %v3564, %v3893
    %v4277 = vmul.f32 %v3567, %v3893
    %v4278 = vmul.f32 %v3569, %v3893
    %v4279 = vmul.f32 %v3572, %v3893
    %v4280 = vmul.f32 %v3574, %v3893
    %v4281 = vmul.f32 %v3577, %v3893
    %v4282 = vmul.f32 %v3579, %v3893
    %v4283 = vmul.f32 %v3582, %v3893
    %v4284 = vmul.f32 %v3584, %v3893
    %v4285 = vmul.f32 %v3587, %v3893
    %v4286 = vmul.f32 %v3589, %v3893
    %v4287 = vmul.f32 %v3592, %v3893
    %v4288 = vmul.f32 %v3594, %v3893
    %v4289 = vmul.f32 %v3597, %v3893
    %v4290 = vmul.f32 %v3599, %v3893
    %v4291 = vmul.f32 %v3602, %v3893
    %v4292 = vmul.f32 %v3604, %v3893
    %v4293 = vmul.f32 %v3607, %v3893
    %v4294 = vmul.f32 %v3609, %v3893
    %v4295 = vmul.f32 %v3612, %v3893
    %v4296 = vmul.f32 %v3614, %v3893
    %v4297 = vmul.f32 %v3617, %v3893
    %v4298 = vmul.f32 %v3619, %v3893
    %v4299 = vmul.f32 %v3622, %v3893
    %v4300 = vmul.f32 %v3624, %v3893
    %v4301 = vmul.f32 %v3627, %v3893
    %v4302 = vmul.f32 %v3629, %v3893
    %v4303 = vmul.f32 %v3632, %v3893
    %v4304 = vmul.f32 %v3634, %v3893
    %v4305 = vmul.f32 %v3637, %v3893
    %v4306 = vmul.f32 %v3639, %v3893
    %v4307 = vmul.f32 %v3642, %v3893
    %v4308 = vmul.f32 %v3644, %v3893
    %v4309 = vmul.f32 %v3647, %v3893
    %v4310 = vmul.f32 %v3649, %v3893
    %v4311 = vmul.f32 %v3652, %v3893
    %v4312 = vmul.f32 %v3654, %v3893
    %v4313 = vmul.f32 %v3657, %v3893
    %v4314 = vmul.f32 %v3659, %v3893
    %v4315 = vmul.f32 %v3662, %v3893
    %v4316 = vmul.f32 %v3664, %v3893
    %v4317 = vmul.f32 %v3667, %v3893
    %v4318 = vmul.f32 %v3669, %v3893
    %v4319 = vmul.f32 %v3672, %v3893
    %v4320 = vmul.f32 %v3674, %v3893
    %v4321 = vmul.f32 %v3677, %v3893
    %v4322 = vmul.f32 %v3679, %v3893
    %v4323 = vmul.f32 %v3682, %v3893
    %v4324 = vmul.f32 %v3684, %v3893
    %v4325 = vmul.f32 %v3687, %v3893
    %v4326 = vmul.f32 %v3689, %v3893
    %v4327 = vmul.f32 %v3692, %v3893
    %v4328 = vmul.f32 %v3694, %v3893
    %v4329 = vmul.f32 %v3697, %v3893
    %v4330 = vmul.f32 %v3699, %v3893
    %v4331 = vmul.f32 %v3702, %v3893
    %v4332 = vmul.f32 %v3704, %v3893
    %v4333 = vmul.f32 %v3707, %v3893
    %v4334 = vmul.f32 %v3709, %v3893
    %v4335 = vmul.f32 %v3712, %v3893
    %v4336 = vmul.f32 %v3714, %v3893
    %v4337 = vmul.f32 %v3717, %v3893
    %v4338 = vmul.f32 %v3719, %v3893
    %v4339 = vmul.f32 %v3722, %v3893
    %v4340 = vmul.f32 %v3724, %v3893
    %v4341 = vmul.f32 %v3727, %v3893
    %v4342 = vmul.f32 %v3729, %v3893
    %v4343 = vmul.f32 %v3732, %v3893
    %v4344 = vmul.f32 %v3734, %v3893
    %v4345 = vmul.f32 %v3737, %v3893
    %v4346 = vmul.f32 %v3739, %v3893
    %v4347 = vmul.f32 %v3742, %v3893
    %v4348 = vmul.f32 %v3744, %v3893
    %v4349 = vmul.f32 %v3747, %v3893
    %v4350 = vmul.f32 %v3749, %v3893
    %v4351 = vmul.f32 %v3752, %v3893
    %v4352 = vmul.f32 %v3754, %v3893
    %v4353 = vmul.f32 %v3757, %v3893
    %v4354 = vmul.f32 %v3759, %v3893
    %v4355 = vmul.f32 %v3762, %v3893
    %v4356 = vmul.f32 %v3764, %v3893
    %v4357 = vmul.f32 %v3767, %v3893
    %v4358 = vmul.f32 %v3769, %v3893
    %v4359 = vmul.f32 %v3772, %v3893
    %v4360 = vmul.f32 %v3774, %v3893
    %v4361 = vmul.f32 %v3777, %v3893
    %v4362 = vmul.f32 %v3779, %v3893
    %v4363 = vmul.f32 %v3782, %v3893
    %v4364 = vmul.f32 %v3784, %v3893
    %v4365 = vmul.f32 %v3787, %v3893
    %v4366 = vmul.f32 %v3789, %v3893
    %v4367 = vmul.f32 %v3792, %v3893
    %v4368 = vmul.f32 %v3794, %v3893
    %v4369 = vmul.f32 %v3797, %v3893
    %v4370 = vmul.f32 %v3799, %v3893
    %v4371 = vmul.f32 %v3802, %v3893
    %v4372 = vmul.f32 %v3804, %v3893
    %v4373 = vmul.f32 %v3807, %v3893
    %v4374 = vmul.f32 %v3809, %v3893
    %v4375 = vmul.f32 %v3812, %v3893
    %v4376 = vmul.f32 %v3814, %v3893
    %v4377 = vmul.f32 %v3817, %v3893
    %v4378 = vmul.f32 %v3819, %v3893
    %v4379 = vmul.f32 %v3822, %v3893
    %v4380 = vmul.f32 %v3824, %v3893
    %v4381 = vmul.f32 %v3827, %v3893
    %v4382 = vmul.f32 %v3829, %v3893
    %v4383 = vmul.f32 %v3832, %v3893
    %v4384 = vmul.f32 %v3834, %v3893
    %v4385 = vmul.f32 %v3837, %v3893
    %v4386 = vmul.f32 %v3839, %v3893
    %v4387 = vmul.f32 %v3842, %v3893
    %v4388 = vmul.f32 %v3844, %v3893
    %v4389 = vmul.f32 %v3847, %v3893
    %v4390 = vmul.f32 %v3849, %v3893
    %v4391 = vmul.f32 %v3852, %v3893
    %v4392 = vmul.f32 %v3854, %v3893
    %v4393 = vmul.f32 %v3857, %v3893
    %v4394 = vmul.f32 %v3859, %v3893
    %v4395 = vmul.f32 %v3862, %v3893
    %v4396 = vmul.f32 %v3864, %v3893
    %v4397 = vmul.f32 %v3867, %v3893
    %v4398 = vmul.f32 %v3869, %v3893
    %v4399 = vmul.f32 %v3872, %v3893
    %v4400 = vmul.f32 %v3874, %v3893
    %v4401 = vmul.f32 %v3877, %v3893
    %v4402 = vmul.f32 %v3879, %v3893
    %v4403 = vmul.f32 %v3882, %v3893
    %v4404 = vmul.f32 %v3884, %v3893
    %v4405 = vmul.f32 %v3887, %v3893
    %v4406 = vmul.f32 %v3889, %v3893
    %v4407 = vld [vmem:[%s3] sm:$0x1]
    %v4409 = vperm.slane %v4407, 0
    %v4411 = vadd.f32 %v3895, %v4409
    %v4412 = vadd.f32 %v3896, %v4409
    %v4413 = vadd.f32 %v3897, %v4409
    %v4414 = vadd.f32 %v3898, %v4409
    %v4415 = vadd.f32 %v3899, %v4409
    %v4416 = vadd.f32 %v3900, %v4409
    %v4417 = vadd.f32 %v3901, %v4409
    %v4418 = vadd.f32 %v3902, %v4409
    %v4419 = vadd.f32 %v3903, %v4409
    %v4420 = vadd.f32 %v3904, %v4409
    %v4421 = vadd.f32 %v3905, %v4409
    %v4422 = vadd.f32 %v3906, %v4409
    %v4423 = vadd.f32 %v3907, %v4409
    %v4424 = vadd.f32 %v3908, %v4409
    %v4425 = vadd.f32 %v3909, %v4409
    %v4426 = vadd.f32 %v3910, %v4409
    %v4427 = vadd.f32 %v3911, %v4409
    %v4428 = vadd.f32 %v3912, %v4409
    %v4429 = vadd.f32 %v3913, %v4409
    %v4430 = vadd.f32 %v3914, %v4409
    %v4431 = vadd.f32 %v3915, %v4409
    %v4432 = vadd.f32 %v3916, %v4409
    %v4433 = vadd.f32 %v3917, %v4409
    %v4434 = vadd.f32 %v3918, %v4409
    %v4435 = vadd.f32 %v3919, %v4409
    %v4436 = vadd.f32 %v3920, %v4409
    %v4437 = vadd.f32 %v3921, %v4409
    %v4438 = vadd.f32 %v3922, %v4409
    %v4439 = vadd.f32 %v3923, %v4409
    %v4440 = vadd.f32 %v3924, %v4409
    %v4441 = vadd.f32 %v3925, %v4409
    %v4442 = vadd.f32 %v3926, %v4409
    %v4443 = vadd.f32 %v3927, %v4409
    %v4444 = vadd.f32 %v3928, %v4409
    %v4445 = vadd.f32 %v3929, %v4409
    %v4446 = vadd.f32 %v3930, %v4409
    %v4447 = vadd.f32 %v3931, %v4409
    %v4448 = vadd.f32 %v3932, %v4409
    %v4449 = vadd.f32 %v3933, %v4409
    %v4450 = vadd.f32 %v3934, %v4409
    %v4451 = vadd.f32 %v3935, %v4409
    %v4452 = vadd.f32 %v3936, %v4409
    %v4453 = vadd.f32 %v3937, %v4409
    %v4454 = vadd.f32 %v3938, %v4409
    %v4455 = vadd.f32 %v3939, %v4409
    %v4456 = vadd.f32 %v3940, %v4409
    %v4457 = vadd.f32 %v3941, %v4409
    %v4458 = vadd.f32 %v3942, %v4409
    %v4459 = vadd.f32 %v3943, %v4409
    %v4460 = vadd.f32 %v3944, %v4409
    %v4461 = vadd.f32 %v3945, %v4409
    %v4462 = vadd.f32 %v3946, %v4409
    %v4463 = vadd.f32 %v3947, %v4409
    %v4464 = vadd.f32 %v3948, %v4409
    %v4465 = vadd.f32 %v3949, %v4409
    %v4466 = vadd.f32 %v3950, %v4409
    %v4467 = vadd.f32 %v3951, %v4409
    %v4468 = vadd.f32 %v3952, %v4409
    %v4469 = vadd.f32 %v3953, %v4409
    %v4470 = vadd.f32 %v3954, %v4409
    %v4471 = vadd.f32 %v3955, %v4409
    %v4472 = vadd.f32 %v3956, %v4409
    %v4473 = vadd.f32 %v3957, %v4409
    %v4474 = vadd.f32 %v3958, %v4409
    %v4475 = vadd.f32 %v3959, %v4409
    %v4476 = vadd.f32 %v3960, %v4409
    %v4477 = vadd.f32 %v3961, %v4409
    %v4478 = vadd.f32 %v3962, %v4409
    %v4479 = vadd.f32 %v3963, %v4409
    %v4480 = vadd.f32 %v3964, %v4409
    %v4481 = vadd.f32 %v3965, %v4409
    %v4482 = vadd.f32 %v3966, %v4409
    %v4483 = vadd.f32 %v3967, %v4409
    %v4484 = vadd.f32 %v3968, %v4409
    %v4485 = vadd.f32 %v3969, %v4409
    %v4486 = vadd.f32 %v3970, %v4409
    %v4487 = vadd.f32 %v3971, %v4409
    %v4488 = vadd.f32 %v3972, %v4409
    %v4489 = vadd.f32 %v3973, %v4409
    %v4490 = vadd.f32 %v3974, %v4409
    %v4491 = vadd.f32 %v3975, %v4409
    %v4492 = vadd.f32 %v3976, %v4409
    %v4493 = vadd.f32 %v3977, %v4409
    %v4494 = vadd.f32 %v3978, %v4409
    %v4495 = vadd.f32 %v3979, %v4409
    %v4496 = vadd.f32 %v3980, %v4409
    %v4497 = vadd.f32 %v3981, %v4409
    %v4498 = vadd.f32 %v3982, %v4409
    %v4499 = vadd.f32 %v3983, %v4409
    %v4500 = vadd.f32 %v3984, %v4409
    %v4501 = vadd.f32 %v3985, %v4409
    %v4502 = vadd.f32 %v3986, %v4409
    %v4503 = vadd.f32 %v3987, %v4409
    %v4504 = vadd.f32 %v3988, %v4409
    %v4505 = vadd.f32 %v3989, %v4409
    %v4506 = vadd.f32 %v3990, %v4409
    %v4507 = vadd.f32 %v3991, %v4409
    %v4508 = vadd.f32 %v3992, %v4409
    %v4509 = vadd.f32 %v3993, %v4409
    %v4510 = vadd.f32 %v3994, %v4409
    %v4511 = vadd.f32 %v3995, %v4409
    %v4512 = vadd.f32 %v3996, %v4409
    %v4513 = vadd.f32 %v3997, %v4409
    %v4514 = vadd.f32 %v3998, %v4409
    %v4515 = vadd.f32 %v3999, %v4409
    %v4516 = vadd.f32 %v4000, %v4409
    %v4517 = vadd.f32 %v4001, %v4409
    %v4518 = vadd.f32 %v4002, %v4409
    %v4519 = vadd.f32 %v4003, %v4409
    %v4520 = vadd.f32 %v4004, %v4409
    %v4521 = vadd.f32 %v4005, %v4409
    %v4522 = vadd.f32 %v4006, %v4409
    %v4523 = vadd.f32 %v4007, %v4409
    %v4524 = vadd.f32 %v4008, %v4409
    %v4525 = vadd.f32 %v4009, %v4409
    %v4526 = vadd.f32 %v4010, %v4409
    %v4527 = vadd.f32 %v4011, %v4409
    %v4528 = vadd.f32 %v4012, %v4409
    %v4529 = vadd.f32 %v4013, %v4409
    %v4530 = vadd.f32 %v4014, %v4409
    %v4531 = vadd.f32 %v4015, %v4409
    %v4532 = vadd.f32 %v4016, %v4409
    %v4533 = vadd.f32 %v4017, %v4409
    %v4534 = vadd.f32 %v4018, %v4409
    %v4535 = vadd.f32 %v4019, %v4409
    %v4536 = vadd.f32 %v4020, %v4409
    %v4537 = vadd.f32 %v4021, %v4409
    %v4538 = vadd.f32 %v4022, %v4409
    %v4539 = vadd.f32 %v4023, %v4409
    %v4540 = vadd.f32 %v4024, %v4409
    %v4541 = vadd.f32 %v4025, %v4409
    %v4542 = vadd.f32 %v4026, %v4409
    %v4543 = vadd.f32 %v4027, %v4409
    %v4544 = vadd.f32 %v4028, %v4409
    %v4545 = vadd.f32 %v4029, %v4409
    %v4546 = vadd.f32 %v4030, %v4409
    %v4547 = vadd.f32 %v4031, %v4409
    %v4548 = vadd.f32 %v4032, %v4409
    %v4549 = vadd.f32 %v4033, %v4409
    %v4550 = vadd.f32 %v4034, %v4409
    %v4551 = vadd.f32 %v4035, %v4409
    %v4552 = vadd.f32 %v4036, %v4409
    %v4553 = vadd.f32 %v4037, %v4409
    %v4554 = vadd.f32 %v4038, %v4409
    %v4555 = vadd.f32 %v4039, %v4409
    %v4556 = vadd.f32 %v4040, %v4409
    %v4557 = vadd.f32 %v4041, %v4409
    %v4558 = vadd.f32 %v4042, %v4409
    %v4559 = vadd.f32 %v4043, %v4409
    %v4560 = vadd.f32 %v4044, %v4409
    %v4561 = vadd.f32 %v4045, %v4409
    %v4562 = vadd.f32 %v4046, %v4409
    %v4563 = vadd.f32 %v4047, %v4409
    %v4564 = vadd.f32 %v4048, %v4409
    %v4565 = vadd.f32 %v4049, %v4409
    %v4566 = vadd.f32 %v4050, %v4409
    %v4567 = vadd.f32 %v4051, %v4409
    %v4568 = vadd.f32 %v4052, %v4409
    %v4569 = vadd.f32 %v4053, %v4409
    %v4570 = vadd.f32 %v4054, %v4409
    %v4571 = vadd.f32 %v4055, %v4409
    %v4572 = vadd.f32 %v4056, %v4409
    %v4573 = vadd.f32 %v4057, %v4409
    %v4574 = vadd.f32 %v4058, %v4409
    %v4575 = vadd.f32 %v4059, %v4409
    %v4576 = vadd.f32 %v4060, %v4409
    %v4577 = vadd.f32 %v4061, %v4409
    %v4578 = vadd.f32 %v4062, %v4409
    %v4579 = vadd.f32 %v4063, %v4409
    %v4580 = vadd.f32 %v4064, %v4409
    %v4581 = vadd.f32 %v4065, %v4409
    %v4582 = vadd.f32 %v4066, %v4409
    %v4583 = vadd.f32 %v4067, %v4409
    %v4584 = vadd.f32 %v4068, %v4409
    %v4585 = vadd.f32 %v4069, %v4409
    %v4586 = vadd.f32 %v4070, %v4409
    %v4587 = vadd.f32 %v4071, %v4409
    %v4588 = vadd.f32 %v4072, %v4409
    %v4589 = vadd.f32 %v4073, %v4409
    %v4590 = vadd.f32 %v4074, %v4409
    %v4591 = vadd.f32 %v4075, %v4409
    %v4592 = vadd.f32 %v4076, %v4409
    %v4593 = vadd.f32 %v4077, %v4409
    %v4594 = vadd.f32 %v4078, %v4409
    %v4595 = vadd.f32 %v4079, %v4409
    %v4596 = vadd.f32 %v4080, %v4409
    %v4597 = vadd.f32 %v4081, %v4409
    %v4598 = vadd.f32 %v4082, %v4409
    %v4599 = vadd.f32 %v4083, %v4409
    %v4600 = vadd.f32 %v4084, %v4409
    %v4601 = vadd.f32 %v4085, %v4409
    %v4602 = vadd.f32 %v4086, %v4409
    %v4603 = vadd.f32 %v4087, %v4409
    %v4604 = vadd.f32 %v4088, %v4409
    %v4605 = vadd.f32 %v4089, %v4409
    %v4606 = vadd.f32 %v4090, %v4409
    %v4607 = vadd.f32 %v4091, %v4409
    %v4608 = vadd.f32 %v4092, %v4409
    %v4609 = vadd.f32 %v4093, %v4409
    %v4610 = vadd.f32 %v4094, %v4409
    %v4611 = vadd.f32 %v4095, %v4409
    %v4612 = vadd.f32 %v4096, %v4409
    %v4613 = vadd.f32 %v4097, %v4409
    %v4614 = vadd.f32 %v4098, %v4409
    %v4615 = vadd.f32 %v4099, %v4409
    %v4616 = vadd.f32 %v4100, %v4409
    %v4617 = vadd.f32 %v4101, %v4409
    %v4618 = vadd.f32 %v4102, %v4409
    %v4619 = vadd.f32 %v4103, %v4409
    %v4620 = vadd.f32 %v4104, %v4409
    %v4621 = vadd.f32 %v4105, %v4409
    %v4622 = vadd.f32 %v4106, %v4409
    %v4623 = vadd.f32 %v4107, %v4409
    %v4624 = vadd.f32 %v4108, %v4409
    %v4625 = vadd.f32 %v4109, %v4409
    %v4626 = vadd.f32 %v4110, %v4409
    %v4627 = vadd.f32 %v4111, %v4409
    %v4628 = vadd.f32 %v4112, %v4409
    %v4629 = vadd.f32 %v4113, %v4409
    %v4630 = vadd.f32 %v4114, %v4409
    %v4631 = vadd.f32 %v4115, %v4409
    %v4632 = vadd.f32 %v4116, %v4409
    %v4633 = vadd.f32 %v4117, %v4409
    %v4634 = vadd.f32 %v4118, %v4409
    %v4635 = vadd.f32 %v4119, %v4409
    %v4636 = vadd.f32 %v4120, %v4409
    %v4637 = vadd.f32 %v4121, %v4409
    %v4638 = vadd.f32 %v4122, %v4409
    %v4639 = vadd.f32 %v4123, %v4409
    %v4640 = vadd.f32 %v4124, %v4409
    %v4641 = vadd.f32 %v4125, %v4409
    %v4642 = vadd.f32 %v4126, %v4409
    %v4643 = vadd.f32 %v4127, %v4409
    %v4644 = vadd.f32 %v4128, %v4409
    %v4645 = vadd.f32 %v4129, %v4409
    %v4646 = vadd.f32 %v4130, %v4409
    %v4647 = vadd.f32 %v4131, %v4409
    %v4648 = vadd.f32 %v4132, %v4409
    %v4649 = vadd.f32 %v4133, %v4409
    %v4650 = vadd.f32 %v4134, %v4409
    %v4651 = vadd.f32 %v4135, %v4409
    %v4652 = vadd.f32 %v4136, %v4409
    %v4653 = vadd.f32 %v4137, %v4409
    %v4654 = vadd.f32 %v4138, %v4409
    %v4655 = vadd.f32 %v4139, %v4409
    %v4656 = vadd.f32 %v4140, %v4409
    %v4657 = vadd.f32 %v4141, %v4409
    %v4658 = vadd.f32 %v4142, %v4409
    %v4659 = vadd.f32 %v4143, %v4409
    %v4660 = vadd.f32 %v4144, %v4409
    %v4661 = vadd.f32 %v4145, %v4409
    %v4662 = vadd.f32 %v4146, %v4409
    %v4663 = vadd.f32 %v4147, %v4409
    %v4664 = vadd.f32 %v4148, %v4409
    %v4665 = vadd.f32 %v4149, %v4409
    %v4666 = vadd.f32 %v4150, %v4409
    %v4667 = vadd.f32 %v4151, %v4409
    %v4668 = vadd.f32 %v4152, %v4409
    %v4669 = vadd.f32 %v4153, %v4409
    %v4670 = vadd.f32 %v4154, %v4409
    %v4671 = vadd.f32 %v4155, %v4409
    %v4672 = vadd.f32 %v4156, %v4409
    %v4673 = vadd.f32 %v4157, %v4409
    %v4674 = vadd.f32 %v4158, %v4409
    %v4675 = vadd.f32 %v4159, %v4409
    %v4676 = vadd.f32 %v4160, %v4409
    %v4677 = vadd.f32 %v4161, %v4409
    %v4678 = vadd.f32 %v4162, %v4409
    %v4679 = vadd.f32 %v4163, %v4409
    %v4680 = vadd.f32 %v4164, %v4409
    %v4681 = vadd.f32 %v4165, %v4409
    %v4682 = vadd.f32 %v4166, %v4409
    %v4683 = vadd.f32 %v4167, %v4409
    %v4684 = vadd.f32 %v4168, %v4409
    %v4685 = vadd.f32 %v4169, %v4409
    %v4686 = vadd.f32 %v4170, %v4409
    %v4687 = vadd.f32 %v4171, %v4409
    %v4688 = vadd.f32 %v4172, %v4409
    %v4689 = vadd.f32 %v4173, %v4409
    %v4690 = vadd.f32 %v4174, %v4409
    %v4691 = vadd.f32 %v4175, %v4409
    %v4692 = vadd.f32 %v4176, %v4409
    %v4693 = vadd.f32 %v4177, %v4409
    %v4694 = vadd.f32 %v4178, %v4409
    %v4695 = vadd.f32 %v4179, %v4409
    %v4696 = vadd.f32 %v4180, %v4409
    %v4697 = vadd.f32 %v4181, %v4409
    %v4698 = vadd.f32 %v4182, %v4409
    %v4699 = vadd.f32 %v4183, %v4409
    %v4700 = vadd.f32 %v4184, %v4409
    %v4701 = vadd.f32 %v4185, %v4409
    %v4702 = vadd.f32 %v4186, %v4409
    %v4703 = vadd.f32 %v4187, %v4409
    %v4704 = vadd.f32 %v4188, %v4409
    %v4705 = vadd.f32 %v4189, %v4409
    %v4706 = vadd.f32 %v4190, %v4409
    %v4707 = vadd.f32 %v4191, %v4409
    %v4708 = vadd.f32 %v4192, %v4409
    %v4709 = vadd.f32 %v4193, %v4409
    %v4710 = vadd.f32 %v4194, %v4409
    %v4711 = vadd.f32 %v4195, %v4409
    %v4712 = vadd.f32 %v4196, %v4409
    %v4713 = vadd.f32 %v4197, %v4409
    %v4714 = vadd.f32 %v4198, %v4409
    %v4715 = vadd.f32 %v4199, %v4409
    %v4716 = vadd.f32 %v4200, %v4409
    %v4717 = vadd.f32 %v4201, %v4409
    %v4718 = vadd.f32 %v4202, %v4409
    %v4719 = vadd.f32 %v4203, %v4409
    %v4720 = vadd.f32 %v4204, %v4409
    %v4721 = vadd.f32 %v4205, %v4409
    %v4722 = vadd.f32 %v4206, %v4409
    %v4723 = vadd.f32 %v4207, %v4409
    %v4724 = vadd.f32 %v4208, %v4409
    %v4725 = vadd.f32 %v4209, %v4409
    %v4726 = vadd.f32 %v4210, %v4409
    %v4727 = vadd.f32 %v4211, %v4409
    %v4728 = vadd.f32 %v4212, %v4409
    %v4729 = vadd.f32 %v4213, %v4409
    %v4730 = vadd.f32 %v4214, %v4409
    %v4731 = vadd.f32 %v4215, %v4409
    %v4732 = vadd.f32 %v4216, %v4409
    %v4733 = vadd.f32 %v4217, %v4409
    %v4734 = vadd.f32 %v4218, %v4409
    %v4735 = vadd.f32 %v4219, %v4409
    %v4736 = vadd.f32 %v4220, %v4409
    %v4737 = vadd.f32 %v4221, %v4409
    %v4738 = vadd.f32 %v4222, %v4409
    %v4739 = vadd.f32 %v4223, %v4409
    %v4740 = vadd.f32 %v4224, %v4409
    %v4741 = vadd.f32 %v4225, %v4409
    %v4742 = vadd.f32 %v4226, %v4409
    %v4743 = vadd.f32 %v4227, %v4409
    %v4744 = vadd.f32 %v4228, %v4409
    %v4745 = vadd.f32 %v4229, %v4409
    %v4746 = vadd.f32 %v4230, %v4409
    %v4747 = vadd.f32 %v4231, %v4409
    %v4748 = vadd.f32 %v4232, %v4409
    %v4749 = vadd.f32 %v4233, %v4409
    %v4750 = vadd.f32 %v4234, %v4409
    %v4751 = vadd.f32 %v4235, %v4409
    %v4752 = vadd.f32 %v4236, %v4409
    %v4753 = vadd.f32 %v4237, %v4409
    %v4754 = vadd.f32 %v4238, %v4409
    %v4755 = vadd.f32 %v4239, %v4409
    %v4756 = vadd.f32 %v4240, %v4409
    %v4757 = vadd.f32 %v4241, %v4409
    %v4758 = vadd.f32 %v4242, %v4409
    %v4759 = vadd.f32 %v4243, %v4409
    %v4760 = vadd.f32 %v4244, %v4409
    %v4761 = vadd.f32 %v4245, %v4409
    %v4762 = vadd.f32 %v4246, %v4409
    %v4763 = vadd.f32 %v4247, %v4409
    %v4764 = vadd.f32 %v4248, %v4409
    %v4765 = vadd.f32 %v4249, %v4409
    %v4766 = vadd.f32 %v4250, %v4409
    %v4767 = vadd.f32 %v4251, %v4409
    %v4768 = vadd.f32 %v4252, %v4409
    %v4769 = vadd.f32 %v4253, %v4409
    %v4770 = vadd.f32 %v4254, %v4409
    %v4771 = vadd.f32 %v4255, %v4409
    %v4772 = vadd.f32 %v4256, %v4409
    %v4773 = vadd.f32 %v4257, %v4409
    %v4774 = vadd.f32 %v4258, %v4409
    %v4775 = vadd.f32 %v4259, %v4409
    %v4776 = vadd.f32 %v4260, %v4409
    %v4777 = vadd.f32 %v4261, %v4409
    %v4778 = vadd.f32 %v4262, %v4409
    %v4779 = vadd.f32 %v4263, %v4409
    %v4780 = vadd.f32 %v4264, %v4409
    %v4781 = vadd.f32 %v4265, %v4409
    %v4782 = vadd.f32 %v4266, %v4409
    %v4783 = vadd.f32 %v4267, %v4409
    %v4784 = vadd.f32 %v4268, %v4409
    %v4785 = vadd.f32 %v4269, %v4409
    %v4786 = vadd.f32 %v4270, %v4409
    %v4787 = vadd.f32 %v4271, %v4409
    %v4788 = vadd.f32 %v4272, %v4409
    %v4789 = vadd.f32 %v4273, %v4409
    %v4790 = vadd.f32 %v4274, %v4409
    %v4791 = vadd.f32 %v4275, %v4409
    %v4792 = vadd.f32 %v4276, %v4409
    %v4793 = vadd.f32 %v4277, %v4409
    %v4794 = vadd.f32 %v4278, %v4409
    %v4795 = vadd.f32 %v4279, %v4409
    %v4796 = vadd.f32 %v4280, %v4409
    %v4797 = vadd.f32 %v4281, %v4409
    %v4798 = vadd.f32 %v4282, %v4409
    %v4799 = vadd.f32 %v4283, %v4409
    %v4800 = vadd.f32 %v4284, %v4409
    %v4801 = vadd.f32 %v4285, %v4409
    %v4802 = vadd.f32 %v4286, %v4409
    %v4803 = vadd.f32 %v4287, %v4409
    %v4804 = vadd.f32 %v4288, %v4409
    %v4805 = vadd.f32 %v4289, %v4409
    %v4806 = vadd.f32 %v4290, %v4409
    %v4807 = vadd.f32 %v4291, %v4409
    %v4808 = vadd.f32 %v4292, %v4409
    %v4809 = vadd.f32 %v4293, %v4409
    %v4810 = vadd.f32 %v4294, %v4409
    %v4811 = vadd.f32 %v4295, %v4409
    %v4812 = vadd.f32 %v4296, %v4409
    %v4813 = vadd.f32 %v4297, %v4409
    %v4814 = vadd.f32 %v4298, %v4409
    %v4815 = vadd.f32 %v4299, %v4409
    %v4816 = vadd.f32 %v4300, %v4409
    %v4817 = vadd.f32 %v4301, %v4409
    %v4818 = vadd.f32 %v4302, %v4409
    %v4819 = vadd.f32 %v4303, %v4409
    %v4820 = vadd.f32 %v4304, %v4409
    %v4821 = vadd.f32 %v4305, %v4409
    %v4822 = vadd.f32 %v4306, %v4409
    %v4823 = vadd.f32 %v4307, %v4409
    %v4824 = vadd.f32 %v4308, %v4409
    %v4825 = vadd.f32 %v4309, %v4409
    %v4826 = vadd.f32 %v4310, %v4409
    %v4827 = vadd.f32 %v4311, %v4409
    %v4828 = vadd.f32 %v4312, %v4409
    %v4829 = vadd.f32 %v4313, %v4409
    %v4830 = vadd.f32 %v4314, %v4409
    %v4831 = vadd.f32 %v4315, %v4409
    %v4832 = vadd.f32 %v4316, %v4409
    %v4833 = vadd.f32 %v4317, %v4409
    %v4834 = vadd.f32 %v4318, %v4409
    %v4835 = vadd.f32 %v4319, %v4409
    %v4836 = vadd.f32 %v4320, %v4409
    %v4837 = vadd.f32 %v4321, %v4409
    %v4838 = vadd.f32 %v4322, %v4409
    %v4839 = vadd.f32 %v4323, %v4409
    %v4840 = vadd.f32 %v4324, %v4409
    %v4841 = vadd.f32 %v4325, %v4409
    %v4842 = vadd.f32 %v4326, %v4409
    %v4843 = vadd.f32 %v4327, %v4409
    %v4844 = vadd.f32 %v4328, %v4409
    %v4845 = vadd.f32 %v4329, %v4409
    %v4846 = vadd.f32 %v4330, %v4409
    %v4847 = vadd.f32 %v4331, %v4409
    %v4848 = vadd.f32 %v4332, %v4409
    %v4849 = vadd.f32 %v4333, %v4409
    %v4850 = vadd.f32 %v4334, %v4409
    %v4851 = vadd.f32 %v4335, %v4409
    %v4852 = vadd.f32 %v4336, %v4409
    %v4853 = vadd.f32 %v4337, %v4409
    %v4854 = vadd.f32 %v4338, %v4409
    %v4855 = vadd.f32 %v4339, %v4409
    %v4856 = vadd.f32 %v4340, %v4409
    %v4857 = vadd.f32 %v4341, %v4409
    %v4858 = vadd.f32 %v4342, %v4409
    %v4859 = vadd.f32 %v4343, %v4409
    %v4860 = vadd.f32 %v4344, %v4409
    %v4861 = vadd.f32 %v4345, %v4409
    %v4862 = vadd.f32 %v4346, %v4409
    %v4863 = vadd.f32 %v4347, %v4409
    %v4864 = vadd.f32 %v4348, %v4409
    %v4865 = vadd.f32 %v4349, %v4409
    %v4866 = vadd.f32 %v4350, %v4409
    %v4867 = vadd.f32 %v4351, %v4409
    %v4868 = vadd.f32 %v4352, %v4409
    %v4869 = vadd.f32 %v4353, %v4409
    %v4870 = vadd.f32 %v4354, %v4409
    %v4871 = vadd.f32 %v4355, %v4409
    %v4872 = vadd.f32 %v4356, %v4409
    %v4873 = vadd.f32 %v4357, %v4409
    %v4874 = vadd.f32 %v4358, %v4409
    %v4875 = vadd.f32 %v4359, %v4409
    %v4876 = vadd.f32 %v4360, %v4409
    %v4877 = vadd.f32 %v4361, %v4409
    %v4878 = vadd.f32 %v4362, %v4409
    %v4879 = vadd.f32 %v4363, %v4409
    %v4880 = vadd.f32 %v4364, %v4409
    %v4881 = vadd.f32 %v4365, %v4409
    %v4882 = vadd.f32 %v4366, %v4409
    %v4883 = vadd.f32 %v4367, %v4409
    %v4884 = vadd.f32 %v4368, %v4409
    %v4885 = vadd.f32 %v4369, %v4409
    %v4886 = vadd.f32 %v4370, %v4409
    %v4887 = vadd.f32 %v4371, %v4409
    %v4888 = vadd.f32 %v4372, %v4409
    %v4889 = vadd.f32 %v4373, %v4409
    %v4890 = vadd.f32 %v4374, %v4409
    %v4891 = vadd.f32 %v4375, %v4409
    %v4892 = vadd.f32 %v4376, %v4409
    %v4893 = vadd.f32 %v4377, %v4409
    %v4894 = vadd.f32 %v4378, %v4409
    %v4895 = vadd.f32 %v4379, %v4409
    %v4896 = vadd.f32 %v4380, %v4409
    %v4897 = vadd.f32 %v4381, %v4409
    %v4898 = vadd.f32 %v4382, %v4409
    %v4899 = vadd.f32 %v4383, %v4409
    %v4900 = vadd.f32 %v4384, %v4409
    %v4901 = vadd.f32 %v4385, %v4409
    %v4902 = vadd.f32 %v4386, %v4409
    %v4903 = vadd.f32 %v4387, %v4409
    %v4904 = vadd.f32 %v4388, %v4409
    %v4905 = vadd.f32 %v4389, %v4409
    %v4906 = vadd.f32 %v4390, %v4409
    %v4907 = vadd.f32 %v4391, %v4409
    %v4908 = vadd.f32 %v4392, %v4409
    %v4909 = vadd.f32 %v4393, %v4409
    %v4910 = vadd.f32 %v4394, %v4409
    %v4911 = vadd.f32 %v4395, %v4409
    %v4912 = vadd.f32 %v4396, %v4409
    %v4913 = vadd.f32 %v4397, %v4409
    %v4914 = vadd.f32 %v4398, %v4409
    %v4915 = vadd.f32 %v4399, %v4409
    %v4916 = vadd.f32 %v4400, %v4409
    %v4917 = vadd.f32 %v4401, %v4409
    %v4918 = vadd.f32 %v4402, %v4409
    %v4919 = vadd.f32 %v4403, %v4409
    %v4920 = vadd.f32 %v4404, %v4409
    %v4921 = vadd.f32 %v4405, %v4409
    %v4922 = vadd.f32 %v4406, %v4409
    %v4923 = vmax.f32 %v4411, 0.0
    %v4924 = vmax.f32 %v4412, 0.0
    %v4925 = vmax.f32 %v4413, 0.0
    %v4926 = vmax.f32 %v4414, 0.0
    %v4927 = vmax.f32 %v4415, 0.0
    %v4928 = vmax.f32 %v4416, 0.0
    %v4929 = vmax.f32 %v4417, 0.0
    %v4930 = vmax.f32 %v4418, 0.0
    %v4931 = vmax.f32 %v4419, 0.0
    %v4932 = vmax.f32 %v4420, 0.0
    %v4933 = vmax.f32 %v4421, 0.0
    %v4934 = vmax.f32 %v4422, 0.0
    %v4935 = vmax.f32 %v4423, 0.0
    %v4936 = vmax.f32 %v4424, 0.0
    %v4937 = vmax.f32 %v4425, 0.0
    %v4938 = vmax.f32 %v4426, 0.0
    %v4939 = vmax.f32 %v4427, 0.0
    %v4940 = vmax.f32 %v4428, 0.0
    %v4941 = vmax.f32 %v4429, 0.0
    %v4942 = vmax.f32 %v4430, 0.0
    %v4943 = vmax.f32 %v4431, 0.0
    %v4944 = vmax.f32 %v4432, 0.0
    %v4945 = vmax.f32 %v4433, 0.0
    %v4946 = vmax.f32 %v4434, 0.0
    %v4947 = vmax.f32 %v4435, 0.0
    %v4948 = vmax.f32 %v4436, 0.0
    %v4949 = vmax.f32 %v4437, 0.0
    %v4950 = vmax.f32 %v4438, 0.0
    %v4951 = vmax.f32 %v4439, 0.0
    %v4952 = vmax.f32 %v4440, 0.0
    %v4953 = vmax.f32 %v4441, 0.0
    %v4954 = vmax.f32 %v4442, 0.0
    %v4955 = vmax.f32 %v4443, 0.0
    %v4956 = vmax.f32 %v4444, 0.0
    %v4957 = vmax.f32 %v4445, 0.0
    %v4958 = vmax.f32 %v4446, 0.0
    %v4959 = vmax.f32 %v4447, 0.0
    %v4960 = vmax.f32 %v4448, 0.0
    %v4961 = vmax.f32 %v4449, 0.0
    %v4962 = vmax.f32 %v4450, 0.0
    %v4963 = vmax.f32 %v4451, 0.0
    %v4964 = vmax.f32 %v4452, 0.0
    %v4965 = vmax.f32 %v4453, 0.0
    %v4966 = vmax.f32 %v4454, 0.0
    %v4967 = vmax.f32 %v4455, 0.0
    %v4968 = vmax.f32 %v4456, 0.0
    %v4969 = vmax.f32 %v4457, 0.0
    %v4970 = vmax.f32 %v4458, 0.0
    %v4971 = vmax.f32 %v4459, 0.0
    %v4972 = vmax.f32 %v4460, 0.0
    %v4973 = vmax.f32 %v4461, 0.0
    %v4974 = vmax.f32 %v4462, 0.0
    %v4975 = vmax.f32 %v4463, 0.0
    %v4976 = vmax.f32 %v4464, 0.0
    %v4977 = vmax.f32 %v4465, 0.0
    %v4978 = vmax.f32 %v4466, 0.0
    %v4979 = vmax.f32 %v4467, 0.0
    %v4980 = vmax.f32 %v4468, 0.0
    %v4981 = vmax.f32 %v4469, 0.0
    %v4982 = vmax.f32 %v4470, 0.0
    %v4983 = vmax.f32 %v4471, 0.0
    %v4984 = vmax.f32 %v4472, 0.0
    %v4985 = vmax.f32 %v4473, 0.0
    %v4986 = vmax.f32 %v4474, 0.0
    %v4987 = vmax.f32 %v4475, 0.0
    %v4988 = vmax.f32 %v4476, 0.0
    %v4989 = vmax.f32 %v4477, 0.0
    %v4990 = vmax.f32 %v4478, 0.0
    %v4991 = vmax.f32 %v4479, 0.0
    %v4992 = vmax.f32 %v4480, 0.0
    %v4993 = vmax.f32 %v4481, 0.0
    %v4994 = vmax.f32 %v4482, 0.0
    %v4995 = vmax.f32 %v4483, 0.0
    %v4996 = vmax.f32 %v4484, 0.0
    %v4997 = vmax.f32 %v4485, 0.0
    %v4998 = vmax.f32 %v4486, 0.0
    %v4999 = vmax.f32 %v4487, 0.0
    %v5000 = vmax.f32 %v4488, 0.0
    %v5001 = vmax.f32 %v4489, 0.0
    %v5002 = vmax.f32 %v4490, 0.0
    %v5003 = vmax.f32 %v4491, 0.0
    %v5004 = vmax.f32 %v4492, 0.0
    %v5005 = vmax.f32 %v4493, 0.0
    %v5006 = vmax.f32 %v4494, 0.0
    %v5007 = vmax.f32 %v4495, 0.0
    %v5008 = vmax.f32 %v4496, 0.0
    %v5009 = vmax.f32 %v4497, 0.0
    %v5010 = vmax.f32 %v4498, 0.0
    %v5011 = vmax.f32 %v4499, 0.0
    %v5012 = vmax.f32 %v4500, 0.0
    %v5013 = vmax.f32 %v4501, 0.0
    %v5014 = vmax.f32 %v4502, 0.0
    %v5015 = vmax.f32 %v4503, 0.0
    %v5016 = vmax.f32 %v4504, 0.0
    %v5017 = vmax.f32 %v4505, 0.0
    %v5018 = vmax.f32 %v4506, 0.0
    %v5019 = vmax.f32 %v4507, 0.0
    %v5020 = vmax.f32 %v4508, 0.0
    %v5021 = vmax.f32 %v4509, 0.0
    %v5022 = vmax.f32 %v4510, 0.0
    %v5023 = vmax.f32 %v4511, 0.0
    %v5024 = vmax.f32 %v4512, 0.0
    %v5025 = vmax.f32 %v4513, 0.0
    %v5026 = vmax.f32 %v4514, 0.0
    %v5027 = vmax.f32 %v4515, 0.0
    %v5028 = vmax.f32 %v4516, 0.0
    %v5029 = vmax.f32 %v4517, 0.0
    %v5030 = vmax.f32 %v4518, 0.0
    %v5031 = vmax.f32 %v4519, 0.0
    %v5032 = vmax.f32 %v4520, 0.0
    %v5033 = vmax.f32 %v4521, 0.0
    %v5034 = vmax.f32 %v4522, 0.0
    %v5035 = vmax.f32 %v4523, 0.0
    %v5036 = vmax.f32 %v4524, 0.0
    %v5037 = vmax.f32 %v4525, 0.0
    %v5038 = vmax.f32 %v4526, 0.0
    %v5039 = vmax.f32 %v4527, 0.0
    %v5040 = vmax.f32 %v4528, 0.0
    %v5041 = vmax.f32 %v4529, 0.0
    %v5042 = vmax.f32 %v4530, 0.0
    %v5043 = vmax.f32 %v4531, 0.0
    %v5044 = vmax.f32 %v4532, 0.0
    %v5045 = vmax.f32 %v4533, 0.0
    %v5046 = vmax.f32 %v4534, 0.0
    %v5047 = vmax.f32 %v4535, 0.0
    %v5048 = vmax.f32 %v4536, 0.0
    %v5049 = vmax.f32 %v4537, 0.0
    %v5050 = vmax.f32 %v4538, 0.0
    %v5051 = vmax.f32 %v4539, 0.0
    %v5052 = vmax.f32 %v4540, 0.0
    %v5053 = vmax.f32 %v4541, 0.0
    %v5054 = vmax.f32 %v4542, 0.0
    %v5055 = vmax.f32 %v4543, 0.0
    %v5056 = vmax.f32 %v4544, 0.0
    %v5057 = vmax.f32 %v4545, 0.0
    %v5058 = vmax.f32 %v4546, 0.0
    %v5059 = vmax.f32 %v4547, 0.0
    %v5060 = vmax.f32 %v4548, 0.0
    %v5061 = vmax.f32 %v4549, 0.0
    %v5062 = vmax.f32 %v4550, 0.0
    %v5063 = vmax.f32 %v4551, 0.0
    %v5064 = vmax.f32 %v4552, 0.0
    %v5065 = vmax.f32 %v4553, 0.0
    %v5066 = vmax.f32 %v4554, 0.0
    %v5067 = vmax.f32 %v4555, 0.0
    %v5068 = vmax.f32 %v4556, 0.0
    %v5069 = vmax.f32 %v4557, 0.0
    %v5070 = vmax.f32 %v4558, 0.0
    %v5071 = vmax.f32 %v4559, 0.0
    %v5072 = vmax.f32 %v4560, 0.0
    %v5073 = vmax.f32 %v4561, 0.0
    %v5074 = vmax.f32 %v4562, 0.0
    %v5075 = vmax.f32 %v4563, 0.0
    %v5076 = vmax.f32 %v4564, 0.0
    %v5077 = vmax.f32 %v4565, 0.0
    %v5078 = vmax.f32 %v4566, 0.0
    %v5079 = vmax.f32 %v4567, 0.0
    %v5080 = vmax.f32 %v4568, 0.0
    %v5081 = vmax.f32 %v4569, 0.0
    %v5082 = vmax.f32 %v4570, 0.0
    %v5083 = vmax.f32 %v4571, 0.0
    %v5084 = vmax.f32 %v4572, 0.0
    %v5085 = vmax.f32 %v4573, 0.0
    %v5086 = vmax.f32 %v4574, 0.0
    %v5087 = vmax.f32 %v4575, 0.0
    %v5088 = vmax.f32 %v4576, 0.0
    %v5089 = vmax.f32 %v4577, 0.0
    %v5090 = vmax.f32 %v4578, 0.0
    %v5091 = vmax.f32 %v4579, 0.0
    %v5092 = vmax.f32 %v4580, 0.0
    %v5093 = vmax.f32 %v4581, 0.0
    %v5094 = vmax.f32 %v4582, 0.0
    %v5095 = vmax.f32 %v4583, 0.0
    %v5096 = vmax.f32 %v4584, 0.0
    %v5097 = vmax.f32 %v4585, 0.0
    %v5098 = vmax.f32 %v4586, 0.0
    %v5099 = vmax.f32 %v4587, 0.0
    %v5100 = vmax.f32 %v4588, 0.0
    %v5101 = vmax.f32 %v4589, 0.0
    %v5102 = vmax.f32 %v4590, 0.0
    %v5103 = vmax.f32 %v4591, 0.0
    %v5104 = vmax.f32 %v4592, 0.0
    %v5105 = vmax.f32 %v4593, 0.0
    %v5106 = vmax.f32 %v4594, 0.0
    %v5107 = vmax.f32 %v4595, 0.0
    %v5108 = vmax.f32 %v4596, 0.0
    %v5109 = vmax.f32 %v4597, 0.0
    %v5110 = vmax.f32 %v4598, 0.0
    %v5111 = vmax.f32 %v4599, 0.0
    %v5112 = vmax.f32 %v4600, 0.0
    %v5113 = vmax.f32 %v4601, 0.0
    %v5114 = vmax.f32 %v4602, 0.0
    %v5115 = vmax.f32 %v4603, 0.0
    %v5116 = vmax.f32 %v4604, 0.0
    %v5117 = vmax.f32 %v4605, 0.0
    %v5118 = vmax.f32 %v4606, 0.0
    %v5119 = vmax.f32 %v4607, 0.0
    %v5120 = vmax.f32 %v4608, 0.0
    %v5121 = vmax.f32 %v4609, 0.0
    %v5122 = vmax.f32 %v4610, 0.0
    %v5123 = vmax.f32 %v4611, 0.0
    %v5124 = vmax.f32 %v4612, 0.0
    %v5125 = vmax.f32 %v4613, 0.0
    %v5126 = vmax.f32 %v4614, 0.0
    %v5127 = vmax.f32 %v4615, 0.0
    %v5128 = vmax.f32 %v4616, 0.0
    %v5129 = vmax.f32 %v4617, 0.0
    %v5130 = vmax.f32 %v4618, 0.0
    %v5131 = vmax.f32 %v4619, 0.0
    %v5132 = vmax.f32 %v4620, 0.0
    %v5133 = vmax.f32 %v4621, 0.0
    %v5134 = vmax.f32 %v4622, 0.0
    %v5135 = vmax.f32 %v4623, 0.0
    %v5136 = vmax.f32 %v4624, 0.0
    %v5137 = vmax.f32 %v4625, 0.0
    %v5138 = vmax.f32 %v4626, 0.0
    %v5139 = vmax.f32 %v4627, 0.0
    %v5140 = vmax.f32 %v4628, 0.0
    %v5141 = vmax.f32 %v4629, 0.0
    %v5142 = vmax.f32 %v4630, 0.0
    %v5143 = vmax.f32 %v4631, 0.0
    %v5144 = vmax.f32 %v4632, 0.0
    %v5145 = vmax.f32 %v4633, 0.0
    %v5146 = vmax.f32 %v4634, 0.0
    %v5147 = vmax.f32 %v4635, 0.0
    %v5148 = vmax.f32 %v4636, 0.0
    %v5149 = vmax.f32 %v4637, 0.0
    %v5150 = vmax.f32 %v4638, 0.0
    %v5151 = vmax.f32 %v4639, 0.0
    %v5152 = vmax.f32 %v4640, 0.0
    %v5153 = vmax.f32 %v4641, 0.0
    %v5154 = vmax.f32 %v4642, 0.0
    %v5155 = vmax.f32 %v4643, 0.0
    %v5156 = vmax.f32 %v4644, 0.0
    %v5157 = vmax.f32 %v4645, 0.0
    %v5158 = vmax.f32 %v4646, 0.0
    %v5159 = vmax.f32 %v4647, 0.0
    %v5160 = vmax.f32 %v4648, 0.0
    %v5161 = vmax.f32 %v4649, 0.0
    %v5162 = vmax.f32 %v4650, 0.0
    %v5163 = vmax.f32 %v4651, 0.0
    %v5164 = vmax.f32 %v4652, 0.0
    %v5165 = vmax.f32 %v4653, 0.0
    %v5166 = vmax.f32 %v4654, 0.0
    %v5167 = vmax.f32 %v4655, 0.0
    %v5168 = vmax.f32 %v4656, 0.0
    %v5169 = vmax.f32 %v4657, 0.0
    %v5170 = vmax.f32 %v4658, 0.0
    %v5171 = vmax.f32 %v4659, 0.0
    %v5172 = vmax.f32 %v4660, 0.0
    %v5173 = vmax.f32 %v4661, 0.0
    %v5174 = vmax.f32 %v4662, 0.0
    %v5175 = vmax.f32 %v4663, 0.0
    %v5176 = vmax.f32 %v4664, 0.0
    %v5177 = vmax.f32 %v4665, 0.0
    %v5178 = vmax.f32 %v4666, 0.0
    %v5179 = vmax.f32 %v4667, 0.0
    %v5180 = vmax.f32 %v4668, 0.0
    %v5181 = vmax.f32 %v4669, 0.0
    %v5182 = vmax.f32 %v4670, 0.0
    %v5183 = vmax.f32 %v4671, 0.0
    %v5184 = vmax.f32 %v4672, 0.0
    %v5185 = vmax.f32 %v4673, 0.0
    %v5186 = vmax.f32 %v4674, 0.0
    %v5187 = vmax.f32 %v4675, 0.0
    %v5188 = vmax.f32 %v4676, 0.0
    %v5189 = vmax.f32 %v4677, 0.0
    %v5190 = vmax.f32 %v4678, 0.0
    %v5191 = vmax.f32 %v4679, 0.0
    %v5192 = vmax.f32 %v4680, 0.0
    %v5193 = vmax.f32 %v4681, 0.0
    %v5194 = vmax.f32 %v4682, 0.0
    %v5195 = vmax.f32 %v4683, 0.0
    %v5196 = vmax.f32 %v4684, 0.0
    %v5197 = vmax.f32 %v4685, 0.0
    %v5198 = vmax.f32 %v4686, 0.0
    %v5199 = vmax.f32 %v4687, 0.0
    %v5200 = vmax.f32 %v4688, 0.0
    %v5201 = vmax.f32 %v4689, 0.0
    %v5202 = vmax.f32 %v4690, 0.0
    %v5203 = vmax.f32 %v4691, 0.0
    %v5204 = vmax.f32 %v4692, 0.0
    %v5205 = vmax.f32 %v4693, 0.0
    %v5206 = vmax.f32 %v4694, 0.0
    %v5207 = vmax.f32 %v4695, 0.0
    %v5208 = vmax.f32 %v4696, 0.0
    %v5209 = vmax.f32 %v4697, 0.0
    %v5210 = vmax.f32 %v4698, 0.0
    %v5211 = vmax.f32 %v4699, 0.0
    %v5212 = vmax.f32 %v4700, 0.0
    %v5213 = vmax.f32 %v4701, 0.0
    %v5214 = vmax.f32 %v4702, 0.0
    %v5215 = vmax.f32 %v4703, 0.0
    %v5216 = vmax.f32 %v4704, 0.0
    %v5217 = vmax.f32 %v4705, 0.0
    %v5218 = vmax.f32 %v4706, 0.0
    %v5219 = vmax.f32 %v4707, 0.0
    %v5220 = vmax.f32 %v4708, 0.0
    %v5221 = vmax.f32 %v4709, 0.0
    %v5222 = vmax.f32 %v4710, 0.0
    %v5223 = vmax.f32 %v4711, 0.0
    %v5224 = vmax.f32 %v4712, 0.0
    %v5225 = vmax.f32 %v4713, 0.0
    %v5226 = vmax.f32 %v4714, 0.0
    %v5227 = vmax.f32 %v4715, 0.0
    %v5228 = vmax.f32 %v4716, 0.0
    %v5229 = vmax.f32 %v4717, 0.0
    %v5230 = vmax.f32 %v4718, 0.0
    %v5231 = vmax.f32 %v4719, 0.0
    %v5232 = vmax.f32 %v4720, 0.0
    %v5233 = vmax.f32 %v4721, 0.0
    %v5234 = vmax.f32 %v4722, 0.0
    %v5235 = vmax.f32 %v4723, 0.0
    %v5236 = vmax.f32 %v4724, 0.0
    %v5237 = vmax.f32 %v4725, 0.0
    %v5238 = vmax.f32 %v4726, 0.0
    %v5239 = vmax.f32 %v4727, 0.0
    %v5240 = vmax.f32 %v4728, 0.0
    %v5241 = vmax.f32 %v4729, 0.0
    %v5242 = vmax.f32 %v4730, 0.0
    %v5243 = vmax.f32 %v4731, 0.0
    %v5244 = vmax.f32 %v4732, 0.0
    %v5245 = vmax.f32 %v4733, 0.0
    %v5246 = vmax.f32 %v4734, 0.0
    %v5247 = vmax.f32 %v4735, 0.0
    %v5248 = vmax.f32 %v4736, 0.0
    %v5249 = vmax.f32 %v4737, 0.0
    %v5250 = vmax.f32 %v4738, 0.0
    %v5251 = vmax.f32 %v4739, 0.0
    %v5252 = vmax.f32 %v4740, 0.0
    %v5253 = vmax.f32 %v4741, 0.0
    %v5254 = vmax.f32 %v4742, 0.0
    %v5255 = vmax.f32 %v4743, 0.0
    %v5256 = vmax.f32 %v4744, 0.0
    %v5257 = vmax.f32 %v4745, 0.0
    %v5258 = vmax.f32 %v4746, 0.0
    %v5259 = vmax.f32 %v4747, 0.0
    %v5260 = vmax.f32 %v4748, 0.0
    %v5261 = vmax.f32 %v4749, 0.0
    %v5262 = vmax.f32 %v4750, 0.0
    %v5263 = vmax.f32 %v4751, 0.0
    %v5264 = vmax.f32 %v4752, 0.0
    %v5265 = vmax.f32 %v4753, 0.0
    %v5266 = vmax.f32 %v4754, 0.0
    %v5267 = vmax.f32 %v4755, 0.0
    %v5268 = vmax.f32 %v4756, 0.0
    %v5269 = vmax.f32 %v4757, 0.0
    %v5270 = vmax.f32 %v4758, 0.0
    %v5271 = vmax.f32 %v4759, 0.0
    %v5272 = vmax.f32 %v4760, 0.0
    %v5273 = vmax.f32 %v4761, 0.0
    %v5274 = vmax.f32 %v4762, 0.0
    %v5275 = vmax.f32 %v4763, 0.0
    %v5276 = vmax.f32 %v4764, 0.0
    %v5277 = vmax.f32 %v4765, 0.0
    %v5278 = vmax.f32 %v4766, 0.0
    %v5279 = vmax.f32 %v4767, 0.0
    %v5280 = vmax.f32 %v4768, 0.0
    %v5281 = vmax.f32 %v4769, 0.0
    %v5282 = vmax.f32 %v4770, 0.0
    %v5283 = vmax.f32 %v4771, 0.0
    %v5284 = vmax.f32 %v4772, 0.0
    %v5285 = vmax.f32 %v4773, 0.0
    %v5286 = vmax.f32 %v4774, 0.0
    %v5287 = vmax.f32 %v4775, 0.0
    %v5288 = vmax.f32 %v4776, 0.0
    %v5289 = vmax.f32 %v4777, 0.0
    %v5290 = vmax.f32 %v4778, 0.0
    %v5291 = vmax.f32 %v4779, 0.0
    %v5292 = vmax.f32 %v4780, 0.0
    %v5293 = vmax.f32 %v4781, 0.0
    %v5294 = vmax.f32 %v4782, 0.0
    %v5295 = vmax.f32 %v4783, 0.0
    %v5296 = vmax.f32 %v4784, 0.0
    %v5297 = vmax.f32 %v4785, 0.0
    %v5298 = vmax.f32 %v4786, 0.0
    %v5299 = vmax.f32 %v4787, 0.0
    %v5300 = vmax.f32 %v4788, 0.0
    %v5301 = vmax.f32 %v4789, 0.0
    %v5302 = vmax.f32 %v4790, 0.0
    %v5303 = vmax.f32 %v4791, 0.0
    %v5304 = vmax.f32 %v4792, 0.0
    %v5305 = vmax.f32 %v4793, 0.0
    %v5306 = vmax.f32 %v4794, 0.0
    %v5307 = vmax.f32 %v4795, 0.0
    %v5308 = vmax.f32 %v4796, 0.0
    %v5309 = vmax.f32 %v4797, 0.0
    %v5310 = vmax.f32 %v4798, 0.0
    %v5311 = vmax.f32 %v4799, 0.0
    %v5312 = vmax.f32 %v4800, 0.0
    %v5313 = vmax.f32 %v4801, 0.0
    %v5314 = vmax.f32 %v4802, 0.0
    %v5315 = vmax.f32 %v4803, 0.0
    %v5316 = vmax.f32 %v4804, 0.0
    %v5317 = vmax.f32 %v4805, 0.0
    %v5318 = vmax.f32 %v4806, 0.0
    %v5319 = vmax.f32 %v4807, 0.0
    %v5320 = vmax.f32 %v4808, 0.0
    %v5321 = vmax.f32 %v4809, 0.0
    %v5322 = vmax.f32 %v4810, 0.0
    %v5323 = vmax.f32 %v4811, 0.0
    %v5324 = vmax.f32 %v4812, 0.0
    %v5325 = vmax.f32 %v4813, 0.0
    %v5326 = vmax.f32 %v4814, 0.0
    %v5327 = vmax.f32 %v4815, 0.0
    %v5328 = vmax.f32 %v4816, 0.0
    %v5329 = vmax.f32 %v4817, 0.0
    %v5330 = vmax.f32 %v4818, 0.0
    %v5331 = vmax.f32 %v4819, 0.0
    %v5332 = vmax.f32 %v4820, 0.0
    %v5333 = vmax.f32 %v4821, 0.0
    %v5334 = vmax.f32 %v4822, 0.0
    %v5335 = vmax.f32 %v4823, 0.0
    %v5336 = vmax.f32 %v4824, 0.0
    %v5337 = vmax.f32 %v4825, 0.0
    %v5338 = vmax.f32 %v4826, 0.0
    %v5339 = vmax.f32 %v4827, 0.0
    %v5340 = vmax.f32 %v4828, 0.0
    %v5341 = vmax.f32 %v4829, 0.0
    %v5342 = vmax.f32 %v4830, 0.0
    %v5343 = vmax.f32 %v4831, 0.0
    %v5344 = vmax.f32 %v4832, 0.0
    %v5345 = vmax.f32 %v4833, 0.0
    %v5346 = vmax.f32 %v4834, 0.0
    %v5347 = vmax.f32 %v4835, 0.0
    %v5348 = vmax.f32 %v4836, 0.0
    %v5349 = vmax.f32 %v4837, 0.0
    %v5350 = vmax.f32 %v4838, 0.0
    %v5351 = vmax.f32 %v4839, 0.0
    %v5352 = vmax.f32 %v4840, 0.0
    %v5353 = vmax.f32 %v4841, 0.0
    %v5354 = vmax.f32 %v4842, 0.0
    %v5355 = vmax.f32 %v4843, 0.0
    %v5356 = vmax.f32 %v4844, 0.0
    %v5357 = vmax.f32 %v4845, 0.0
    %v5358 = vmax.f32 %v4846, 0.0
    %v5359 = vmax.f32 %v4847, 0.0
    %v5360 = vmax.f32 %v4848, 0.0
    %v5361 = vmax.f32 %v4849, 0.0
    %v5362 = vmax.f32 %v4850, 0.0
    %v5363 = vmax.f32 %v4851, 0.0
    %v5364 = vmax.f32 %v4852, 0.0
    %v5365 = vmax.f32 %v4853, 0.0
    %v5366 = vmax.f32 %v4854, 0.0
    %v5367 = vmax.f32 %v4855, 0.0
    %v5368 = vmax.f32 %v4856, 0.0
    %v5369 = vmax.f32 %v4857, 0.0
    %v5370 = vmax.f32 %v4858, 0.0
    %v5371 = vmax.f32 %v4859, 0.0
    %v5372 = vmax.f32 %v4860, 0.0
    %v5373 = vmax.f32 %v4861, 0.0
    %v5374 = vmax.f32 %v4862, 0.0
    %v5375 = vmax.f32 %v4863, 0.0
    %v5376 = vmax.f32 %v4864, 0.0
    %v5377 = vmax.f32 %v4865, 0.0
    %v5378 = vmax.f32 %v4866, 0.0
    %v5379 = vmax.f32 %v4867, 0.0
    %v5380 = vmax.f32 %v4868, 0.0
    %v5381 = vmax.f32 %v4869, 0.0
    %v5382 = vmax.f32 %v4870, 0.0
    %v5383 = vmax.f32 %v4871, 0.0
    %v5384 = vmax.f32 %v4872, 0.0
    %v5385 = vmax.f32 %v4873, 0.0
    %v5386 = vmax.f32 %v4874, 0.0
    %v5387 = vmax.f32 %v4875, 0.0
    %v5388 = vmax.f32 %v4876, 0.0
    %v5389 = vmax.f32 %v4877, 0.0
    %v5390 = vmax.f32 %v4878, 0.0
    %v5391 = vmax.f32 %v4879, 0.0
    %v5392 = vmax.f32 %v4880, 0.0
    %v5393 = vmax.f32 %v4881, 0.0
    %v5394 = vmax.f32 %v4882, 0.0
    %v5395 = vmax.f32 %v4883, 0.0
    %v5396 = vmax.f32 %v4884, 0.0
    %v5397 = vmax.f32 %v4885, 0.0
    %v5398 = vmax.f32 %v4886, 0.0
    %v5399 = vmax.f32 %v4887, 0.0
    %v5400 = vmax.f32 %v4888, 0.0
    %v5401 = vmax.f32 %v4889, 0.0
    %v5402 = vmax.f32 %v4890, 0.0
    %v5403 = vmax.f32 %v4891, 0.0
    %v5404 = vmax.f32 %v4892, 0.0
    %v5405 = vmax.f32 %v4893, 0.0
    %v5406 = vmax.f32 %v4894, 0.0
    %v5407 = vmax.f32 %v4895, 0.0
    %v5408 = vmax.f32 %v4896, 0.0
    %v5409 = vmax.f32 %v4897, 0.0
    %v5410 = vmax.f32 %v4898, 0.0
    %v5411 = vmax.f32 %v4899, 0.0
    %v5412 = vmax.f32 %v4900, 0.0
    %v5413 = vmax.f32 %v4901, 0.0
    %v5414 = vmax.f32 %v4902, 0.0
    %v5415 = vmax.f32 %v4903, 0.0
    %v5416 = vmax.f32 %v4904, 0.0
    %v5417 = vmax.f32 %v4905, 0.0
    %v5418 = vmax.f32 %v4906, 0.0
    %v5419 = vmax.f32 %v4907, 0.0
    %v5420 = vmax.f32 %v4908, 0.0
    %v5421 = vmax.f32 %v4909, 0.0
    %v5422 = vmax.f32 %v4910, 0.0
    %v5423 = vmax.f32 %v4911, 0.0
    %v5424 = vmax.f32 %v4912, 0.0
    %v5425 = vmax.f32 %v4913, 0.0
    %v5426 = vmax.f32 %v4914, 0.0
    %v5427 = vmax.f32 %v4915, 0.0
    %v5428 = vmax.f32 %v4916, 0.0
    %v5429 = vmax.f32 %v4917, 0.0
    %v5430 = vmax.f32 %v4918, 0.0
    %v5431 = vmax.f32 %v4919, 0.0
    %v5432 = vmax.f32 %v4920, 0.0
    %v5433 = vmax.f32 %v4921, 0.0
    %v5434 = vmax.f32 %v4922, 0.0
    %v5435 = vpack.c.bf16 %v4923, %v4923
    %v5436 = vpack.c.bf16 %v4924, %v4924
    %v5437 = vpack.c.bf16 %v4925, %v4925
    %v5438 = vpack.c.bf16 %v4926, %v4926
    %v5439 = vpack.c.bf16 %v4927, %v4927
    %v5440 = vpack.c.bf16 %v4928, %v4928
    %v5441 = vpack.c.bf16 %v4929, %v4929
    %v5442 = vpack.c.bf16 %v4930, %v4930
    %v5443 = vpack.c.bf16 %v4931, %v4931
    %v5444 = vpack.c.bf16 %v4932, %v4932
    %v5445 = vpack.c.bf16 %v4933, %v4933
    %v5446 = vpack.c.bf16 %v4934, %v4934
    %v5447 = vpack.c.bf16 %v4935, %v4935
    %v5448 = vpack.c.bf16 %v4936, %v4936
    %v5449 = vpack.c.bf16 %v4937, %v4937
    %v5450 = vpack.c.bf16 %v4938, %v4938
    %v5451 = vpack.c.bf16 %v4939, %v4939
    %v5452 = vpack.c.bf16 %v4940, %v4940
    %v5453 = vpack.c.bf16 %v4941, %v4941
    %v5454 = vpack.c.bf16 %v4942, %v4942
    %v5455 = vpack.c.bf16 %v4943, %v4943
    %v5456 = vpack.c.bf16 %v4944, %v4944
    %v5457 = vpack.c.bf16 %v4945, %v4945
    %v5458 = vpack.c.bf16 %v4946, %v4946
    %v5459 = vpack.c.bf16 %v4947, %v4947
    %v5460 = vpack.c.bf16 %v4948, %v4948
    %v5461 = vpack.c.bf16 %v4949, %v4949
    %v5462 = vpack.c.bf16 %v4950, %v4950
    %v5463 = vpack.c.bf16 %v4951, %v4951
    %v5464 = vpack.c.bf16 %v4952, %v4952
    %v5465 = vpack.c.bf16 %v4953, %v4953
    %v5466 = vpack.c.bf16 %v4954, %v4954
    %v5467 = vpack.c.bf16 %v4955, %v4955
    %v5468 = vpack.c.bf16 %v4956, %v4956
    %v5469 = vpack.c.bf16 %v4957, %v4957
    %v5470 = vpack.c.bf16 %v4958, %v4958
    %v5471 = vpack.c.bf16 %v4959, %v4959
    %v5472 = vpack.c.bf16 %v4960, %v4960
    %v5473 = vpack.c.bf16 %v4961, %v4961
    %v5474 = vpack.c.bf16 %v4962, %v4962
    %v5475 = vpack.c.bf16 %v4963, %v4963
    %v5476 = vpack.c.bf16 %v4964, %v4964
    %v5477 = vpack.c.bf16 %v4965, %v4965
    %v5478 = vpack.c.bf16 %v4966, %v4966
    %v5479 = vpack.c.bf16 %v4967, %v4967
    %v5480 = vpack.c.bf16 %v4968, %v4968
    %v5481 = vpack.c.bf16 %v4969, %v4969
    %v5482 = vpack.c.bf16 %v4970, %v4970
    %v5483 = vpack.c.bf16 %v4971, %v4971
    %v5484 = vpack.c.bf16 %v4972, %v4972
    %v5485 = vpack.c.bf16 %v4973, %v4973
    %v5486 = vpack.c.bf16 %v4974, %v4974
    %v5487 = vpack.c.bf16 %v4975, %v4975
    %v5488 = vpack.c.bf16 %v4976, %v4976
    %v5489 = vpack.c.bf16 %v4977, %v4977
    %v5490 = vpack.c.bf16 %v4978, %v4978
    %v5491 = vpack.c.bf16 %v4979, %v4979
    %v5492 = vpack.c.bf16 %v4980, %v4980
    %v5493 = vpack.c.bf16 %v4981, %v4981
    %v5494 = vpack.c.bf16 %v4982, %v4982
    %v5495 = vpack.c.bf16 %v4983, %v4983
    %v5496 = vpack.c.bf16 %v4984, %v4984
    %v5497 = vpack.c.bf16 %v4985, %v4985
    %v5498 = vpack.c.bf16 %v4986, %v4986
    %v5499 = vpack.c.bf16 %v4987, %v4987
    %v5500 = vpack.c.bf16 %v4988, %v4988
    %v5501 = vpack.c.bf16 %v4989, %v4989
    %v5502 = vpack.c.bf16 %v4990, %v4990
    %v5503 = vpack.c.bf16 %v4991, %v4991
    %v5504 = vpack.c.bf16 %v4992, %v4992
    %v5505 = vpack.c.bf16 %v4993, %v4993
    %v5506 = vpack.c.bf16 %v4994, %v4994
    %v5507 = vpack.c.bf16 %v4995, %v4995
    %v5508 = vpack.c.bf16 %v4996, %v4996
    %v5509 = vpack.c.bf16 %v4997, %v4997
    %v5510 = vpack.c.bf16 %v4998, %v4998
    %v5511 = vpack.c.bf16 %v4999, %v4999
    %v5512 = vpack.c.bf16 %v5000, %v5000
    %v5513 = vpack.c.bf16 %v5001, %v5001
    %v5514 = vpack.c.bf16 %v5002, %v5002
    %v5515 = vpack.c.bf16 %v5003, %v5003
    %v5516 = vpack.c.bf16 %v5004, %v5004
    %v5517 = vpack.c.bf16 %v5005, %v5005
    %v5518 = vpack.c.bf16 %v5006, %v5006
    %v5519 = vpack.c.bf16 %v5007, %v5007
    %v5520 = vpack.c.bf16 %v5008, %v5008
    %v5521 = vpack.c.bf16 %v5009, %v5009
    %v5522 = vpack.c.bf16 %v5010, %v5010
    %v5523 = vpack.c.bf16 %v5011, %v5011
    %v5524 = vpack.c.bf16 %v5012, %v5012
    %v5525 = vpack.c.bf16 %v5013, %v5013
    %v5526 = vpack.c.bf16 %v5014, %v5014
    %v5527 = vpack.c.bf16 %v5015, %v5015
    %v5528 = vpack.c.bf16 %v5016, %v5016
    %v5529 = vpack.c.bf16 %v5017, %v5017
    %v5530 = vpack.c.bf16 %v5018, %v5018
    %v5531 = vpack.c.bf16 %v5019, %v5019
    %v5532 = vpack.c.bf16 %v5020, %v5020
    %v5533 = vpack.c.bf16 %v5021, %v5021
    %v5534 = vpack.c.bf16 %v5022, %v5022
    %v5535 = vpack.c.bf16 %v5023, %v5023
    %v5536 = vpack.c.bf16 %v5024, %v5024
    %v5537 = vpack.c.bf16 %v5025, %v5025
    %v5538 = vpack.c.bf16 %v5026, %v5026
    %v5539 = vpack.c.bf16 %v5027, %v5027
    %v5540 = vpack.c.bf16 %v5028, %v5028
    %v5541 = vpack.c.bf16 %v5029, %v5029
    %v5542 = vpack.c.bf16 %v5030, %v5030
    %v5543 = vpack.c.bf16 %v5031, %v5031
    %v5544 = vpack.c.bf16 %v5032, %v5032
    %v5545 = vpack.c.bf16 %v5033, %v5033
    %v5546 = vpack.c.bf16 %v5034, %v5034
    %v5547 = vpack.c.bf16 %v5035, %v5035
    %v5548 = vpack.c.bf16 %v5036, %v5036
    %v5549 = vpack.c.bf16 %v5037, %v5037
    %v5550 = vpack.c.bf16 %v5038, %v5038
    %v5551 = vpack.c.bf16 %v5039, %v5039
    %v5552 = vpack.c.bf16 %v5040, %v5040
    %v5553 = vpack.c.bf16 %v5041, %v5041
    %v5554 = vpack.c.bf16 %v5042, %v5042
    %v5555 = vpack.c.bf16 %v5043, %v5043
    %v5556 = vpack.c.bf16 %v5044, %v5044
    %v5557 = vpack.c.bf16 %v5045, %v5045
    %v5558 = vpack.c.bf16 %v5046, %v5046
    %v5559 = vpack.c.bf16 %v5047, %v5047
    %v5560 = vpack.c.bf16 %v5048, %v5048
    %v5561 = vpack.c.bf16 %v5049, %v5049
    %v5562 = vpack.c.bf16 %v5050, %v5050
    %v5563 = vpack.c.bf16 %v5051, %v5051
    %v5564 = vpack.c.bf16 %v5052, %v5052
    %v5565 = vpack.c.bf16 %v5053, %v5053
    %v5566 = vpack.c.bf16 %v5054, %v5054
    %v5567 = vpack.c.bf16 %v5055, %v5055
    %v5568 = vpack.c.bf16 %v5056, %v5056
    %v5569 = vpack.c.bf16 %v5057, %v5057
    %v5570 = vpack.c.bf16 %v5058, %v5058
    %v5571 = vpack.c.bf16 %v5059, %v5059
    %v5572 = vpack.c.bf16 %v5060, %v5060
    %v5573 = vpack.c.bf16 %v5061, %v5061
    %v5574 = vpack.c.bf16 %v5062, %v5062
    %v5575 = vpack.c.bf16 %v5063, %v5063
    %v5576 = vpack.c.bf16 %v5064, %v5064
    %v5577 = vpack.c.bf16 %v5065, %v5065
    %v5578 = vpack.c.bf16 %v5066, %v5066
    %v5579 = vpack.c.bf16 %v5067, %v5067
    %v5580 = vpack.c.bf16 %v5068, %v5068
    %v5581 = vpack.c.bf16 %v5069, %v5069
    %v5582 = vpack.c.bf16 %v5070, %v5070
    %v5583 = vpack.c.bf16 %v5071, %v5071
    %v5584 = vpack.c.bf16 %v5072, %v5072
    %v5585 = vpack.c.bf16 %v5073, %v5073
    %v5586 = vpack.c.bf16 %v5074, %v5074
    %v5587 = vpack.c.bf16 %v5075, %v5075
    %v5588 = vpack.c.bf16 %v5076, %v5076
    %v5589 = vpack.c.bf16 %v5077, %v5077
    %v5590 = vpack.c.bf16 %v5078, %v5078
    %v5591 = vpack.c.bf16 %v5079, %v5079
    %v5592 = vpack.c.bf16 %v5080, %v5080
    %v5593 = vpack.c.bf16 %v5081, %v5081
    %v5594 = vpack.c.bf16 %v5082, %v5082
    %v5595 = vpack.c.bf16 %v5083, %v5083
    %v5596 = vpack.c.bf16 %v5084, %v5084
    %v5597 = vpack.c.bf16 %v5085, %v5085
    %v5598 = vpack.c.bf16 %v5086, %v5086
    %v5599 = vpack.c.bf16 %v5087, %v5087
    %v5600 = vpack.c.bf16 %v5088, %v5088
    %v5601 = vpack.c.bf16 %v5089, %v5089
    %v5602 = vpack.c.bf16 %v5090, %v5090
    %v5603 = vpack.c.bf16 %v5091, %v5091
    %v5604 = vpack.c.bf16 %v5092, %v5092
    %v5605 = vpack.c.bf16 %v5093, %v5093
    %v5606 = vpack.c.bf16 %v5094, %v5094
    %v5607 = vpack.c.bf16 %v5095, %v5095
    %v5608 = vpack.c.bf16 %v5096, %v5096
    %v5609 = vpack.c.bf16 %v5097, %v5097
    %v5610 = vpack.c.bf16 %v5098, %v5098
    %v5611 = vpack.c.bf16 %v5099, %v5099
    %v5612 = vpack.c.bf16 %v5100, %v5100
    %v5613 = vpack.c.bf16 %v5101, %v5101
    %v5614 = vpack.c.bf16 %v5102, %v5102
    %v5615 = vpack.c.bf16 %v5103, %v5103
    %v5616 = vpack.c.bf16 %v5104, %v5104
    %v5617 = vpack.c.bf16 %v5105, %v5105
    %v5618 = vpack.c.bf16 %v5106, %v5106
    %v5619 = vpack.c.bf16 %v5107, %v5107
    %v5620 = vpack.c.bf16 %v5108, %v5108
    %v5621 = vpack.c.bf16 %v5109, %v5109
    %v5622 = vpack.c.bf16 %v5110, %v5110
    %v5623 = vpack.c.bf16 %v5111, %v5111
    %v5624 = vpack.c.bf16 %v5112, %v5112
    %v5625 = vpack.c.bf16 %v5113, %v5113
    %v5626 = vpack.c.bf16 %v5114, %v5114
    %v5627 = vpack.c.bf16 %v5115, %v5115
    %v5628 = vpack.c.bf16 %v5116, %v5116
    %v5629 = vpack.c.bf16 %v5117, %v5117
    %v5630 = vpack.c.bf16 %v5118, %v5118
    %v5631 = vpack.c.bf16 %v5119, %v5119
    %v5632 = vpack.c.bf16 %v5120, %v5120
    %v5633 = vpack.c.bf16 %v5121, %v5121
    %v5634 = vpack.c.bf16 %v5122, %v5122
    %v5635 = vpack.c.bf16 %v5123, %v5123
    %v5636 = vpack.c.bf16 %v5124, %v5124
    %v5637 = vpack.c.bf16 %v5125, %v5125
    %v5638 = vpack.c.bf16 %v5126, %v5126
    %v5639 = vpack.c.bf16 %v5127, %v5127
    %v5640 = vpack.c.bf16 %v5128, %v5128
    %v5641 = vpack.c.bf16 %v5129, %v5129
    %v5642 = vpack.c.bf16 %v5130, %v5130
    %v5643 = vpack.c.bf16 %v5131, %v5131
    %v5644 = vpack.c.bf16 %v5132, %v5132
    %v5645 = vpack.c.bf16 %v5133, %v5133
    %v5646 = vpack.c.bf16 %v5134, %v5134
    %v5647 = vpack.c.bf16 %v5135, %v5135
    %v5648 = vpack.c.bf16 %v5136, %v5136
    %v5649 = vpack.c.bf16 %v5137, %v5137
    %v5650 = vpack.c.bf16 %v5138, %v5138
    %v5651 = vpack.c.bf16 %v5139, %v5139
    %v5652 = vpack.c.bf16 %v5140, %v5140
    %v5653 = vpack.c.bf16 %v5141, %v5141
    %v5654 = vpack.c.bf16 %v5142, %v5142
    %v5655 = vpack.c.bf16 %v5143, %v5143
    %v5656 = vpack.c.bf16 %v5144, %v5144
    %v5657 = vpack.c.bf16 %v5145, %v5145
    %v5658 = vpack.c.bf16 %v5146, %v5146
    %v5659 = vpack.c.bf16 %v5147, %v5147
    %v5660 = vpack.c.bf16 %v5148, %v5148
    %v5661 = vpack.c.bf16 %v5149, %v5149
    %v5662 = vpack.c.bf16 %v5150, %v5150
    %v5663 = vpack.c.bf16 %v5151, %v5151
    %v5664 = vpack.c.bf16 %v5152, %v5152
    %v5665 = vpack.c.bf16 %v5153, %v5153
    %v5666 = vpack.c.bf16 %v5154, %v5154
    %v5667 = vpack.c.bf16 %v5155, %v5155
    %v5668 = vpack.c.bf16 %v5156, %v5156
    %v5669 = vpack.c.bf16 %v5157, %v5157
    %v5670 = vpack.c.bf16 %v5158, %v5158
    %v5671 = vpack.c.bf16 %v5159, %v5159
    %v5672 = vpack.c.bf16 %v5160, %v5160
    %v5673 = vpack.c.bf16 %v5161, %v5161
    %v5674 = vpack.c.bf16 %v5162, %v5162
    %v5675 = vpack.c.bf16 %v5163, %v5163
    %v5676 = vpack.c.bf16 %v5164, %v5164
    %v5677 = vpack.c.bf16 %v5165, %v5165
    %v5678 = vpack.c.bf16 %v5166, %v5166
    %v5679 = vpack.c.bf16 %v5167, %v5167
    %v5680 = vpack.c.bf16 %v5168, %v5168
    %v5681 = vpack.c.bf16 %v5169, %v5169
    %v5682 = vpack.c.bf16 %v5170, %v5170
    %v5683 = vpack.c.bf16 %v5171, %v5171
    %v5684 = vpack.c.bf16 %v5172, %v5172
    %v5685 = vpack.c.bf16 %v5173, %v5173
    %v5686 = vpack.c.bf16 %v5174, %v5174
    %v5687 = vpack.c.bf16 %v5175, %v5175
    %v5688 = vpack.c.bf16 %v5176, %v5176
    %v5689 = vpack.c.bf16 %v5177, %v5177
    %v5690 = vpack.c.bf16 %v5178, %v5178
    %v5691 = vpack.c.bf16 %v5179, %v5179
    %v5692 = vpack.c.bf16 %v5180, %v5180
    %v5693 = vpack.c.bf16 %v5181, %v5181
    %v5694 = vpack.c.bf16 %v5182, %v5182
    %v5695 = vpack.c.bf16 %v5183, %v5183
    %v5696 = vpack.c.bf16 %v5184, %v5184
    %v5697 = vpack.c.bf16 %v5185, %v5185
    %v5698 = vpack.c.bf16 %v5186, %v5186
    %v5699 = vpack.c.bf16 %v5187, %v5187
    %v5700 = vpack.c.bf16 %v5188, %v5188
    %v5701 = vpack.c.bf16 %v5189, %v5189
    %v5702 = vpack.c.bf16 %v5190, %v5190
    %v5703 = vpack.c.bf16 %v5191, %v5191
    %v5704 = vpack.c.bf16 %v5192, %v5192
    %v5705 = vpack.c.bf16 %v5193, %v5193
    %v5706 = vpack.c.bf16 %v5194, %v5194
    %v5707 = vpack.c.bf16 %v5195, %v5195
    %v5708 = vpack.c.bf16 %v5196, %v5196
    %v5709 = vpack.c.bf16 %v5197, %v5197
    %v5710 = vpack.c.bf16 %v5198, %v5198
    %v5711 = vpack.c.bf16 %v5199, %v5199
    %v5712 = vpack.c.bf16 %v5200, %v5200
    %v5713 = vpack.c.bf16 %v5201, %v5201
    %v5714 = vpack.c.bf16 %v5202, %v5202
    %v5715 = vpack.c.bf16 %v5203, %v5203
    %v5716 = vpack.c.bf16 %v5204, %v5204
    %v5717 = vpack.c.bf16 %v5205, %v5205
    %v5718 = vpack.c.bf16 %v5206, %v5206
    %v5719 = vpack.c.bf16 %v5207, %v5207
    %v5720 = vpack.c.bf16 %v5208, %v5208
    %v5721 = vpack.c.bf16 %v5209, %v5209
    %v5722 = vpack.c.bf16 %v5210, %v5210
    %v5723 = vpack.c.bf16 %v5211, %v5211
    %v5724 = vpack.c.bf16 %v5212, %v5212
    %v5725 = vpack.c.bf16 %v5213, %v5213
    %v5726 = vpack.c.bf16 %v5214, %v5214
    %v5727 = vpack.c.bf16 %v5215, %v5215
    %v5728 = vpack.c.bf16 %v5216, %v5216
    %v5729 = vpack.c.bf16 %v5217, %v5217
    %v5730 = vpack.c.bf16 %v5218, %v5218
    %v5731 = vpack.c.bf16 %v5219, %v5219
    %v5732 = vpack.c.bf16 %v5220, %v5220
    %v5733 = vpack.c.bf16 %v5221, %v5221
    %v5734 = vpack.c.bf16 %v5222, %v5222
    %v5735 = vpack.c.bf16 %v5223, %v5223
    %v5736 = vpack.c.bf16 %v5224, %v5224
    %v5737 = vpack.c.bf16 %v5225, %v5225
    %v5738 = vpack.c.bf16 %v5226, %v5226
    %v5739 = vpack.c.bf16 %v5227, %v5227
    %v5740 = vpack.c.bf16 %v5228, %v5228
    %v5741 = vpack.c.bf16 %v5229, %v5229
    %v5742 = vpack.c.bf16 %v5230, %v5230
    %v5743 = vpack.c.bf16 %v5231, %v5231
    %v5744 = vpack.c.bf16 %v5232, %v5232
    %v5745 = vpack.c.bf16 %v5233, %v5233
    %v5746 = vpack.c.bf16 %v5234, %v5234
    %v5747 = vpack.c.bf16 %v5235, %v5235
    %v5748 = vpack.c.bf16 %v5236, %v5236
    %v5749 = vpack.c.bf16 %v5237, %v5237
    %v5750 = vpack.c.bf16 %v5238, %v5238
    %v5751 = vpack.c.bf16 %v5239, %v5239
    %v5752 = vpack.c.bf16 %v5240, %v5240
    %v5753 = vpack.c.bf16 %v5241, %v5241
    %v5754 = vpack.c.bf16 %v5242, %v5242
    %v5755 = vpack.c.bf16 %v5243, %v5243
    %v5756 = vpack.c.bf16 %v5244, %v5244
    %v5757 = vpack.c.bf16 %v5245, %v5245
    %v5758 = vpack.c.bf16 %v5246, %v5246
    %v5759 = vpack.c.bf16 %v5247, %v5247
    %v5760 = vpack.c.bf16 %v5248, %v5248
    %v5761 = vpack.c.bf16 %v5249, %v5249
    %v5762 = vpack.c.bf16 %v5250, %v5250
    %v5763 = vpack.c.bf16 %v5251, %v5251
    %v5764 = vpack.c.bf16 %v5252, %v5252
    %v5765 = vpack.c.bf16 %v5253, %v5253
    %v5766 = vpack.c.bf16 %v5254, %v5254
    %v5767 = vpack.c.bf16 %v5255, %v5255
    %v5768 = vpack.c.bf16 %v5256, %v5256
    %v5769 = vpack.c.bf16 %v5257, %v5257
    %v5770 = vpack.c.bf16 %v5258, %v5258
    %v5771 = vpack.c.bf16 %v5259, %v5259
    %v5772 = vpack.c.bf16 %v5260, %v5260
    %v5773 = vpack.c.bf16 %v5261, %v5261
    %v5774 = vpack.c.bf16 %v5262, %v5262
    %v5775 = vpack.c.bf16 %v5263, %v5263
    %v5776 = vpack.c.bf16 %v5264, %v5264
    %v5777 = vpack.c.bf16 %v5265, %v5265
    %v5778 = vpack.c.bf16 %v5266, %v5266
    %v5779 = vpack.c.bf16 %v5267, %v5267
    %v5780 = vpack.c.bf16 %v5268, %v5268
    %v5781 = vpack.c.bf16 %v5269, %v5269
    %v5782 = vpack.c.bf16 %v5270, %v5270
    %v5783 = vpack.c.bf16 %v5271, %v5271
    %v5784 = vpack.c.bf16 %v5272, %v5272
    %v5785 = vpack.c.bf16 %v5273, %v5273
    %v5786 = vpack.c.bf16 %v5274, %v5274
    %v5787 = vpack.c.bf16 %v5275, %v5275
    %v5788 = vpack.c.bf16 %v5276, %v5276
    %v5789 = vpack.c.bf16 %v5277, %v5277
    %v5790 = vpack.c.bf16 %v5278, %v5278
    %v5791 = vpack.c.bf16 %v5279, %v5279
    %v5792 = vpack.c.bf16 %v5280, %v5280
    %v5793 = vpack.c.bf16 %v5281, %v5281
    %v5794 = vpack.c.bf16 %v5282, %v5282
    %v5795 = vpack.c.bf16 %v5283, %v5283
    %v5796 = vpack.c.bf16 %v5284, %v5284
    %v5797 = vpack.c.bf16 %v5285, %v5285
    %v5798 = vpack.c.bf16 %v5286, %v5286
    %v5799 = vpack.c.bf16 %v5287, %v5287
    %v5800 = vpack.c.bf16 %v5288, %v5288
    %v5801 = vpack.c.bf16 %v5289, %v5289
    %v5802 = vpack.c.bf16 %v5290, %v5290
    %v5803 = vpack.c.bf16 %v5291, %v5291
    %v5804 = vpack.c.bf16 %v5292, %v5292
    %v5805 = vpack.c.bf16 %v5293, %v5293
    %v5806 = vpack.c.bf16 %v5294, %v5294
    %v5807 = vpack.c.bf16 %v5295, %v5295
    %v5808 = vpack.c.bf16 %v5296, %v5296
    %v5809 = vpack.c.bf16 %v5297, %v5297
    %v5810 = vpack.c.bf16 %v5298, %v5298
    %v5811 = vpack.c.bf16 %v5299, %v5299
    %v5812 = vpack.c.bf16 %v5300, %v5300
    %v5813 = vpack.c.bf16 %v5301, %v5301
    %v5814 = vpack.c.bf16 %v5302, %v5302
    %v5815 = vpack.c.bf16 %v5303, %v5303
    %v5816 = vpack.c.bf16 %v5304, %v5304
    %v5817 = vpack.c.bf16 %v5305, %v5305
    %v5818 = vpack.c.bf16 %v5306, %v5306
    %v5819 = vpack.c.bf16 %v5307, %v5307
    %v5820 = vpack.c.bf16 %v5308, %v5308
    %v5821 = vpack.c.bf16 %v5309, %v5309
    %v5822 = vpack.c.bf16 %v5310, %v5310
    %v5823 = vpack.c.bf16 %v5311, %v5311
    %v5824 = vpack.c.bf16 %v5312, %v5312
    %v5825 = vpack.c.bf16 %v5313, %v5313
    %v5826 = vpack.c.bf16 %v5314, %v5314
    %v5827 = vpack.c.bf16 %v5315, %v5315
    %v5828 = vpack.c.bf16 %v5316, %v5316
    %v5829 = vpack.c.bf16 %v5317, %v5317
    %v5830 = vpack.c.bf16 %v5318, %v5318
    %v5831 = vpack.c.bf16 %v5319, %v5319
    %v5832 = vpack.c.bf16 %v5320, %v5320
    %v5833 = vpack.c.bf16 %v5321, %v5321
    %v5834 = vpack.c.bf16 %v5322, %v5322
    %v5835 = vpack.c.bf16 %v5323, %v5323
    %v5836 = vpack.c.bf16 %v5324, %v5324
    %v5837 = vpack.c.bf16 %v5325, %v5325
    %v5838 = vpack.c.bf16 %v5326, %v5326
    %v5839 = vpack.c.bf16 %v5327, %v5327
    %v5840 = vpack.c.bf16 %v5328, %v5328
    %v5841 = vpack.c.bf16 %v5329, %v5329
    %v5842 = vpack.c.bf16 %v5330, %v5330
    %v5843 = vpack.c.bf16 %v5331, %v5331
    %v5844 = vpack.c.bf16 %v5332, %v5332
    %v5845 = vpack.c.bf16 %v5333, %v5333
    %v5846 = vpack.c.bf16 %v5334, %v5334
    %v5847 = vpack.c.bf16 %v5335, %v5335
    %v5848 = vpack.c.bf16 %v5336, %v5336
    %v5849 = vpack.c.bf16 %v5337, %v5337
    %v5850 = vpack.c.bf16 %v5338, %v5338
    %v5851 = vpack.c.bf16 %v5339, %v5339
    %v5852 = vpack.c.bf16 %v5340, %v5340
    %v5853 = vpack.c.bf16 %v5341, %v5341
    %v5854 = vpack.c.bf16 %v5342, %v5342
    %v5855 = vpack.c.bf16 %v5343, %v5343
    %v5856 = vpack.c.bf16 %v5344, %v5344
    %v5857 = vpack.c.bf16 %v5345, %v5345
    %v5858 = vpack.c.bf16 %v5346, %v5346
    %v5859 = vpack.c.bf16 %v5347, %v5347
    %v5860 = vpack.c.bf16 %v5348, %v5348
    %v5861 = vpack.c.bf16 %v5349, %v5349
    %v5862 = vpack.c.bf16 %v5350, %v5350
    %v5863 = vpack.c.bf16 %v5351, %v5351
    %v5864 = vpack.c.bf16 %v5352, %v5352
    %v5865 = vpack.c.bf16 %v5353, %v5353
    %v5866 = vpack.c.bf16 %v5354, %v5354
    %v5867 = vpack.c.bf16 %v5355, %v5355
    %v5868 = vpack.c.bf16 %v5356, %v5356
    %v5869 = vpack.c.bf16 %v5357, %v5357
    %v5870 = vpack.c.bf16 %v5358, %v5358
    %v5871 = vpack.c.bf16 %v5359, %v5359
    %v5872 = vpack.c.bf16 %v5360, %v5360
    %v5873 = vpack.c.bf16 %v5361, %v5361
    %v5874 = vpack.c.bf16 %v5362, %v5362
    %v5875 = vpack.c.bf16 %v5363, %v5363
    %v5876 = vpack.c.bf16 %v5364, %v5364
    %v5877 = vpack.c.bf16 %v5365, %v5365
    %v5878 = vpack.c.bf16 %v5366, %v5366
    %v5879 = vpack.c.bf16 %v5367, %v5367
    %v5880 = vpack.c.bf16 %v5368, %v5368
    %v5881 = vpack.c.bf16 %v5369, %v5369
    %v5882 = vpack.c.bf16 %v5370, %v5370
    %v5883 = vpack.c.bf16 %v5371, %v5371
    %v5884 = vpack.c.bf16 %v5372, %v5372
    %v5885 = vpack.c.bf16 %v5373, %v5373
    %v5886 = vpack.c.bf16 %v5374, %v5374
    %v5887 = vpack.c.bf16 %v5375, %v5375
    %v5888 = vpack.c.bf16 %v5376, %v5376
    %v5889 = vpack.c.bf16 %v5377, %v5377
    %v5890 = vpack.c.bf16 %v5378, %v5378
    %v5891 = vpack.c.bf16 %v5379, %v5379
    %v5892 = vpack.c.bf16 %v5380, %v5380
    %v5893 = vpack.c.bf16 %v5381, %v5381
    %v5894 = vpack.c.bf16 %v5382, %v5382
    %v5895 = vpack.c.bf16 %v5383, %v5383
    %v5896 = vpack.c.bf16 %v5384, %v5384
    %v5897 = vpack.c.bf16 %v5385, %v5385
    %v5898 = vpack.c.bf16 %v5386, %v5386
    %v5899 = vpack.c.bf16 %v5387, %v5387
    %v5900 = vpack.c.bf16 %v5388, %v5388
    %v5901 = vpack.c.bf16 %v5389, %v5389
    %v5902 = vpack.c.bf16 %v5390, %v5390
    %v5903 = vpack.c.bf16 %v5391, %v5391
    %v5904 = vpack.c.bf16 %v5392, %v5392
    %v5905 = vpack.c.bf16 %v5393, %v5393
    %v5906 = vpack.c.bf16 %v5394, %v5394
    %v5907 = vpack.c.bf16 %v5395, %v5395
    %v5908 = vpack.c.bf16 %v5396, %v5396
    %v5909 = vpack.c.bf16 %v5397, %v5397
    %v5910 = vpack.c.bf16 %v5398, %v5398
    %v5911 = vpack.c.bf16 %v5399, %v5399
    %v5912 = vpack.c.bf16 %v5400, %v5400
    %v5913 = vpack.c.bf16 %v5401, %v5401
    %v5914 = vpack.c.bf16 %v5402, %v5402
    %v5915 = vpack.c.bf16 %v5403, %v5403
    %v5916 = vpack.c.bf16 %v5404, %v5404
    %v5917 = vpack.c.bf16 %v5405, %v5405
    %v5918 = vpack.c.bf16 %v5406, %v5406
    %v5919 = vpack.c.bf16 %v5407, %v5407
    %v5920 = vpack.c.bf16 %v5408, %v5408
    %v5921 = vpack.c.bf16 %v5409, %v5409
    %v5922 = vpack.c.bf16 %v5410, %v5410
    %v5923 = vpack.c.bf16 %v5411, %v5411
    %v5924 = vpack.c.bf16 %v5412, %v5412
    %v5925 = vpack.c.bf16 %v5413, %v5413
    %v5926 = vpack.c.bf16 %v5414, %v5414
    %v5927 = vpack.c.bf16 %v5415, %v5415
    %v5928 = vpack.c.bf16 %v5416, %v5416
    %v5929 = vpack.c.bf16 %v5417, %v5417
    %v5930 = vpack.c.bf16 %v5418, %v5418
    %v5931 = vpack.c.bf16 %v5419, %v5419
    %v5932 = vpack.c.bf16 %v5420, %v5420
    %v5933 = vpack.c.bf16 %v5421, %v5421
    %v5934 = vpack.c.bf16 %v5422, %v5422
    %v5935 = vpack.c.bf16 %v5423, %v5423
    %v5936 = vpack.c.bf16 %v5424, %v5424
    %v5937 = vpack.c.bf16 %v5425, %v5425
    %v5938 = vpack.c.bf16 %v5426, %v5426
    %v5939 = vpack.c.bf16 %v5427, %v5427
    %v5940 = vpack.c.bf16 %v5428, %v5428
    %v5941 = vpack.c.bf16 %v5429, %v5429
    %v5942 = vpack.c.bf16 %v5430, %v5430
    %v5943 = vpack.c.bf16 %v5431, %v5431
    %v5944 = vpack.c.bf16 %v5432, %v5432
    %v5945 = vpack.c.bf16 %v5433, %v5433
    %v5946 = vpack.c.bf16 %v5434, %v5434
    %vm5947 = vcmask 519168
    %5948 = vst.msk [vmem:[#allocation2] sm:$0xf] %vm5947, %v5435
    %5949 = vst.msk [vmem:[#allocation2 + $0x4] sm:$0xf] %vm5947, %v5436
    %5950 = vst.msk [vmem:[#allocation2 + $0x8] sm:$0xf] %vm5947, %v5437
    %5951 = vst.msk [vmem:[#allocation2 + $0xc] sm:$0xf] %vm5947, %v5438
    %5952 = vst.msk [vmem:[#allocation2 + $0x10] sm:$0xf] %vm5947, %v5439
    %5953 = vst.msk [vmem:[#allocation2 + $0x14] sm:$0xf] %vm5947, %v5440
    %5954 = vst.msk [vmem:[#allocation2 + $0x18] sm:$0xf] %vm5947, %v5441
    %5955 = vst.msk [vmem:[#allocation2 + $0x1c] sm:$0xf] %vm5947, %v5442
    %5956 = vst.msk [vmem:[#allocation2 + $0x20] sm:$0xf] %vm5947, %v5443
    %5957 = vst.msk [vmem:[#allocation2 + $0x24] sm:$0xf] %vm5947, %v5444
    %5958 = vst.msk [vmem:[#allocation2 + $0x28] sm:$0xf] %vm5947, %v5445
    %5959 = vst.msk [vmem:[#allocation2 + $0x2c] sm:$0xf] %vm5947, %v5446
    %5960 = vst.msk [vmem:[#allocation2 + $0x30] sm:$0xf] %vm5947, %v5447
    %5961 = vst.msk [vmem:[#allocation2 + $0x34] sm:$0xf] %vm5947, %v5448
    %5962 = vst.msk [vmem:[#allocation2 + $0x38] sm:$0xf] %vm5947, %v5449
    %5963 = vst.msk [vmem:[#allocation2 + $0x3c] sm:$0xf] %vm5947, %v5450
    %5964 = vst.msk [vmem:[#allocation2 + $0x40] sm:$0xf] %vm5947, %v5451
    %5965 = vst.msk [vmem:[#allocation2 + $0x44] sm:$0xf] %vm5947, %v5452
    %5966 = vst.msk [vmem:[#allocation2 + $0x48] sm:$0xf] %vm5947, %v5453
    %5967 = vst.msk [vmem:[#allocation2 + $0x4c] sm:$0xf] %vm5947, %v5454
    %5968 = vst.msk [vmem:[#allocation2 + $0x50] sm:$0xf] %vm5947, %v5455
    %5969 = vst.msk [vmem:[#allocation2 + $0x54] sm:$0xf] %vm5947, %v5456
    %5970 = vst.msk [vmem:[#allocation2 + $0x58] sm:$0xf] %vm5947, %v5457
    %5971 = vst.msk [vmem:[#allocation2 + $0x5c] sm:$0xf] %vm5947, %v5458
    %5972 = vst.msk [vmem:[#allocation2 + $0x60] sm:$0xf] %vm5947, %v5459
    %5973 = vst.msk [vmem:[#allocation2 + $0x64] sm:$0xf] %vm5947, %v5460
    %5974 = vst.msk [vmem:[#allocation2 + $0x68] sm:$0xf] %vm5947, %v5461
    %5975 = vst.msk [vmem:[#allocation2 + $0x6c] sm:$0xf] %vm5947, %v5462
    %5976 = vst.msk [vmem:[#allocation2 + $0x70] sm:$0xf] %vm5947, %v5463
    %5977 = vst.msk [vmem:[#allocation2 + $0x74] sm:$0xf] %vm5947, %v5464
    %5978 = vst.msk [vmem:[#allocation2 + $0x78] sm:$0xf] %vm5947, %v5465
    %5979 = vst.msk [vmem:[#allocation2 + $0x7c] sm:$0xf] %vm5947, %v5466
    %5980 = vst.msk [vmem:[#allocation2 + $0x80] sm:$0xf] %vm5947, %v5467
    %5981 = vst.msk [vmem:[#allocation2 + $0x84] sm:$0xf] %vm5947, %v5468
    %5982 = vst.msk [vmem:[#allocation2 + $0x88] sm:$0xf] %vm5947, %v5469
    %5983 = vst.msk [vmem:[#allocation2 + $0x8c] sm:$0xf] %vm5947, %v5470
    %5984 = vst.msk [vmem:[#allocation2 + $0x90] sm:$0xf] %vm5947, %v5471
    %5985 = vst.msk [vmem:[#allocation2 + $0x94] sm:$0xf] %vm5947, %v5472
    %5986 = vst.msk [vmem:[#allocation2 + $0x98] sm:$0xf] %vm5947, %v5473
    %5987 = vst.msk [vmem:[#allocation2 + $0x9c] sm:$0xf] %vm5947, %v5474
    %5988 = vst.msk [vmem:[#allocation2 + $0xa0] sm:$0xf] %vm5947, %v5475
    %5989 = vst.msk [vmem:[#allocation2 + $0xa4] sm:$0xf] %vm5947, %v5476
    %5990 = vst.msk [vmem:[#allocation2 + $0xa8] sm:$0xf] %vm5947, %v5477
    %5991 = vst.msk [vmem:[#allocation2 + $0xac] sm:$0xf] %vm5947, %v5478
    %5992 = vst.msk [vmem:[#allocation2 + $0xb0] sm:$0xf] %vm5947, %v5479
    %5993 = vst.msk [vmem:[#allocation2 + $0xb4] sm:$0xf] %vm5947, %v5480
    %5994 = vst.msk [vmem:[#allocation2 + $0xb8] sm:$0xf] %vm5947, %v5481
    %5995 = vst.msk [vmem:[#allocation2 + $0xbc] sm:$0xf] %vm5947, %v5482
    %5996 = vst.msk [vmem:[#allocation2 + $0xc0] sm:$0xf] %vm5947, %v5483
    %5997 = vst.msk [vmem:[#allocation2 + $0xc4] sm:$0xf] %vm5947, %v5484
    %5998 = vst.msk [vmem:[#allocation2 + $0xc8] sm:$0xf] %vm5947, %v5485
    %5999 = vst.msk [vmem:[#allocation2 + $0xcc] sm:$0xf] %vm5947, %v5486
    %6000 = vst.msk [vmem:[#allocation2 + $0xd0] sm:$0xf] %vm5947, %v5487
    %6001 = vst.msk [vmem:[#allocation2 + $0xd4] sm:$0xf] %vm5947, %v5488
    %6002 = vst.msk [vmem:[#allocation2 + $0xd8] sm:$0xf] %vm5947, %v5489
    %6003 = vst.msk [vmem:[#allocation2 + $0xdc] sm:$0xf] %vm5947, %v5490
    %6004 = vst.msk [vmem:[#allocation2 + $0xe0] sm:$0xf] %vm5947, %v5491
    %6005 = vst.msk [vmem:[#allocation2 + $0xe4] sm:$0xf] %vm5947, %v5492
    %6006 = vst.msk [vmem:[#allocation2 + $0xe8] sm:$0xf] %vm5947, %v5493
    %6007 = vst.msk [vmem:[#allocation2 + $0xec] sm:$0xf] %vm5947, %v5494
    %6008 = vst.msk [vmem:[#allocation2 + $0xf0] sm:$0xf] %vm5947, %v5495
    %6009 = vst.msk [vmem:[#allocation2 + $0xf4] sm:$0xf] %vm5947, %v5496
    %6010 = vst.msk [vmem:[#allocation2 + $0xf8] sm:$0xf] %vm5947, %v5497
    %6011 = vst.msk [vmem:[#allocation2 + $0xfc] sm:$0xf] %vm5947, %v5498
    %6012 = vst.msk [vmem:[#allocation2 + $0x100] sm:$0xf] %vm5947, %v5499
    %6013 = vst.msk [vmem:[#allocation2 + $0x104] sm:$0xf] %vm5947, %v5500
    %6014 = vst.msk [vmem:[#allocation2 + $0x108] sm:$0xf] %vm5947, %v5501
    %6015 = vst.msk [vmem:[#allocation2 + $0x10c] sm:$0xf] %vm5947, %v5502
    %6016 = vst.msk [vmem:[#allocation2 + $0x110] sm:$0xf] %vm5947, %v5503
    %6017 = vst.msk [vmem:[#allocation2 + $0x114] sm:$0xf] %vm5947, %v5504
    %6018 = vst.msk [vmem:[#allocation2 + $0x118] sm:$0xf] %vm5947, %v5505
    %6019 = vst.msk [vmem:[#allocation2 + $0x11c] sm:$0xf] %vm5947, %v5506
    %6020 = vst.msk [vmem:[#allocation2 + $0x120] sm:$0xf] %vm5947, %v5507
    %6021 = vst.msk [vmem:[#allocation2 + $0x124] sm:$0xf] %vm5947, %v5508
    %6022 = vst.msk [vmem:[#allocation2 + $0x128] sm:$0xf] %vm5947, %v5509
    %6023 = vst.msk [vmem:[#allocation2 + $0x12c] sm:$0xf] %vm5947, %v5510
    %6024 = vst.msk [vmem:[#allocation2 + $0x130] sm:$0xf] %vm5947, %v5511
    %6025 = vst.msk [vmem:[#allocation2 + $0x134] sm:$0xf] %vm5947, %v5512
    %6026 = vst.msk [vmem:[#allocation2 + $0x138] sm:$0xf] %vm5947, %v5513
    %6027 = vst.msk [vmem:[#allocation2 + $0x13c] sm:$0xf] %vm5947, %v5514
    %6028 = vst.msk [vmem:[#allocation2 + $0x140] sm:$0xf] %vm5947, %v5515
    %6029 = vst.msk [vmem:[#allocation2 + $0x144] sm:$0xf] %vm5947, %v5516
    %6030 = vst.msk [vmem:[#allocation2 + $0x148] sm:$0xf] %vm5947, %v5517
    %6031 = vst.msk [vmem:[#allocation2 + $0x14c] sm:$0xf] %vm5947, %v5518
    %6032 = vst.msk [vmem:[#allocation2 + $0x150] sm:$0xf] %vm5947, %v5519
    %6033 = vst.msk [vmem:[#allocation2 + $0x154] sm:$0xf] %vm5947, %v5520
    %6034 = vst.msk [vmem:[#allocation2 + $0x158] sm:$0xf] %vm5947, %v5521
    %6035 = vst.msk [vmem:[#allocation2 + $0x15c] sm:$0xf] %vm5947, %v5522
    %6036 = vst.msk [vmem:[#allocation2 + $0x160] sm:$0xf] %vm5947, %v5523
    %6037 = vst.msk [vmem:[#allocation2 + $0x164] sm:$0xf] %vm5947, %v5524
    %6038 = vst.msk [vmem:[#allocation2 + $0x168] sm:$0xf] %vm5947, %v5525
    %6039 = vst.msk [vmem:[#allocation2 + $0x16c] sm:$0xf] %vm5947, %v5526
    %6040 = vst.msk [vmem:[#allocation2 + $0x170] sm:$0xf] %vm5947, %v5527
    %6041 = vst.msk [vmem:[#allocation2 + $0x174] sm:$0xf] %vm5947, %v5528
    %6042 = vst.msk [vmem:[#allocation2 + $0x178] sm:$0xf] %vm5947, %v5529
    %6043 = vst.msk [vmem:[#allocation2 + $0x17c] sm:$0xf] %vm5947, %v5530
    %6044 = vst.msk [vmem:[#allocation2 + $0x180] sm:$0xf] %vm5947, %v5531
    %6045 = vst.msk [vmem:[#allocation2 + $0x184] sm:$0xf] %vm5947, %v5532
    %6046 = vst.msk [vmem:[#allocation2 + $0x188] sm:$0xf] %vm5947, %v5533
    %6047 = vst.msk [vmem:[#allocation2 + $0x18c] sm:$0xf] %vm5947, %v5534
    %6048 = vst.msk [vmem:[#allocation2 + $0x190] sm:$0xf] %vm5947, %v5535
    %6049 = vst.msk [vmem:[#allocation2 + $0x194] sm:$0xf] %vm5947, %v5536
    %6050 = vst.msk [vmem:[#allocation2 + $0x198] sm:$0xf] %vm5947, %v5537
    %6051 = vst.msk [vmem:[#allocation2 + $0x19c] sm:$0xf] %vm5947, %v5538
    %6052 = vst.msk [vmem:[#allocation2 + $0x1a0] sm:$0xf] %vm5947, %v5539
    %6053 = vst.msk [vmem:[#allocation2 + $0x1a4] sm:$0xf] %vm5947, %v5540
    %6054 = vst.msk [vmem:[#allocation2 + $0x1a8] sm:$0xf] %vm5947, %v5541
    %6055 = vst.msk [vmem:[#allocation2 + $0x1ac] sm:$0xf] %vm5947, %v5542
    %6056 = vst.msk [vmem:[#allocation2 + $0x1b0] sm:$0xf] %vm5947, %v5543
    %6057 = vst.msk [vmem:[#allocation2 + $0x1b4] sm:$0xf] %vm5947, %v5544
    %6058 = vst.msk [vmem:[#allocation2 + $0x1b8] sm:$0xf] %vm5947, %v5545
    %6059 = vst.msk [vmem:[#allocation2 + $0x1bc] sm:$0xf] %vm5947, %v5546
    %6060 = vst.msk [vmem:[#allocation2 + $0x1c0] sm:$0xf] %vm5947, %v5547
    %6061 = vst.msk [vmem:[#allocation2 + $0x1c4] sm:$0xf] %vm5947, %v5548
    %6062 = vst.msk [vmem:[#allocation2 + $0x1c8] sm:$0xf] %vm5947, %v5549
    %6063 = vst.msk [vmem:[#allocation2 + $0x1cc] sm:$0xf] %vm5947, %v5550
    %6064 = vst.msk [vmem:[#allocation2 + $0x1d0] sm:$0xf] %vm5947, %v5551
    %6065 = vst.msk [vmem:[#allocation2 + $0x1d4] sm:$0xf] %vm5947, %v5552
    %6066 = vst.msk [vmem:[#allocation2 + $0x1d8] sm:$0xf] %vm5947, %v5553
    %6067 = vst.msk [vmem:[#allocation2 + $0x1dc] sm:$0xf] %vm5947, %v5554
    %6068 = vst.msk [vmem:[#allocation2 + $0x1e0] sm:$0xf] %vm5947, %v5555
    %6069 = vst.msk [vmem:[#allocation2 + $0x1e4] sm:$0xf] %vm5947, %v5556
    %6070 = vst.msk [vmem:[#allocation2 + $0x1e8] sm:$0xf] %vm5947, %v5557
    %6071 = vst.msk [vmem:[#allocation2 + $0x1ec] sm:$0xf] %vm5947, %v5558
    %6072 = vst.msk [vmem:[#allocation2 + $0x1f0] sm:$0xf] %vm5947, %v5559
    %6073 = vst.msk [vmem:[#allocation2 + $0x1f4] sm:$0xf] %vm5947, %v5560
    %6074 = vst.msk [vmem:[#allocation2 + $0x1f8] sm:$0xf] %vm5947, %v5561
    %6075 = vst.msk [vmem:[#allocation2 + $0x1fc] sm:$0xf] %vm5947, %v5562
    %6076 = vst.msk [vmem:[#allocation2 + $0x200] sm:$0xf] %vm5947, %v5563
    %6077 = vst.msk [vmem:[#allocation2 + $0x204] sm:$0xf] %vm5947, %v5564
    %6078 = vst.msk [vmem:[#allocation2 + $0x208] sm:$0xf] %vm5947, %v5565
    %6079 = vst.msk [vmem:[#allocation2 + $0x20c] sm:$0xf] %vm5947, %v5566
    %6080 = vst.msk [vmem:[#allocation2 + $0x210] sm:$0xf] %vm5947, %v5567
    %6081 = vst.msk [vmem:[#allocation2 + $0x214] sm:$0xf] %vm5947, %v5568
    %6082 = vst.msk [vmem:[#allocation2 + $0x218] sm:$0xf] %vm5947, %v5569
    %6083 = vst.msk [vmem:[#allocation2 + $0x21c] sm:$0xf] %vm5947, %v5570
    %6084 = vst.msk [vmem:[#allocation2 + $0x220] sm:$0xf] %vm5947, %v5571
    %6085 = vst.msk [vmem:[#allocation2 + $0x224] sm:$0xf] %vm5947, %v5572
    %6086 = vst.msk [vmem:[#allocation2 + $0x228] sm:$0xf] %vm5947, %v5573
    %6087 = vst.msk [vmem:[#allocation2 + $0x22c] sm:$0xf] %vm5947, %v5574
    %6088 = vst.msk [vmem:[#allocation2 + $0x230] sm:$0xf] %vm5947, %v5575
    %6089 = vst.msk [vmem:[#allocation2 + $0x234] sm:$0xf] %vm5947, %v5576
    %6090 = vst.msk [vmem:[#allocation2 + $0x238] sm:$0xf] %vm5947, %v5577
    %6091 = vst.msk [vmem:[#allocation2 + $0x23c] sm:$0xf] %vm5947, %v5578
    %6092 = vst.msk [vmem:[#allocation2 + $0x240] sm:$0xf] %vm5947, %v5579
    %6093 = vst.msk [vmem:[#allocation2 + $0x244] sm:$0xf] %vm5947, %v5580
    %6094 = vst.msk [vmem:[#allocation2 + $0x248] sm:$0xf] %vm5947, %v5581
    %6095 = vst.msk [vmem:[#allocation2 + $0x24c] sm:$0xf] %vm5947, %v5582
    %6096 = vst.msk [vmem:[#allocation2 + $0x250] sm:$0xf] %vm5947, %v5583
    %6097 = vst.msk [vmem:[#allocation2 + $0x254] sm:$0xf] %vm5947, %v5584
    %6098 = vst.msk [vmem:[#allocation2 + $0x258] sm:$0xf] %vm5947, %v5585
    %6099 = vst.msk [vmem:[#allocation2 + $0x25c] sm:$0xf] %vm5947, %v5586
    %6100 = vst.msk [vmem:[#allocation2 + $0x260] sm:$0xf] %vm5947, %v5587
    %6101 = vst.msk [vmem:[#allocation2 + $0x264] sm:$0xf] %vm5947, %v5588
    %6102 = vst.msk [vmem:[#allocation2 + $0x268] sm:$0xf] %vm5947, %v5589
    %6103 = vst.msk [vmem:[#allocation2 + $0x26c] sm:$0xf] %vm5947, %v5590
    %6104 = vst.msk [vmem:[#allocation2 + $0x270] sm:$0xf] %vm5947, %v5591
    %6105 = vst.msk [vmem:[#allocation2 + $0x274] sm:$0xf] %vm5947, %v5592
    %6106 = vst.msk [vmem:[#allocation2 + $0x278] sm:$0xf] %vm5947, %v5593
    %6107 = vst.msk [vmem:[#allocation2 + $0x27c] sm:$0xf] %vm5947, %v5594
    %6108 = vst.msk [vmem:[#allocation2 + $0x280] sm:$0xf] %vm5947, %v5595
    %6109 = vst.msk [vmem:[#allocation2 + $0x284] sm:$0xf] %vm5947, %v5596
    %6110 = vst.msk [vmem:[#allocation2 + $0x288] sm:$0xf] %vm5947, %v5597
    %6111 = vst.msk [vmem:[#allocation2 + $0x28c] sm:$0xf] %vm5947, %v5598
    %6112 = vst.msk [vmem:[#allocation2 + $0x290] sm:$0xf] %vm5947, %v5599
    %6113 = vst.msk [vmem:[#allocation2 + $0x294] sm:$0xf] %vm5947, %v5600
    %6114 = vst.msk [vmem:[#allocation2 + $0x298] sm:$0xf] %vm5947, %v5601
    %6115 = vst.msk [vmem:[#allocation2 + $0x29c] sm:$0xf] %vm5947, %v5602
    %6116 = vst.msk [vmem:[#allocation2 + $0x2a0] sm:$0xf] %vm5947, %v5603
    %6117 = vst.msk [vmem:[#allocation2 + $0x2a4] sm:$0xf] %vm5947, %v5604
    %6118 = vst.msk [vmem:[#allocation2 + $0x2a8] sm:$0xf] %vm5947, %v5605
    %6119 = vst.msk [vmem:[#allocation2 + $0x2ac] sm:$0xf] %vm5947, %v5606
    %6120 = vst.msk [vmem:[#allocation2 + $0x2b0] sm:$0xf] %vm5947, %v5607
    %6121 = vst.msk [vmem:[#allocation2 + $0x2b4] sm:$0xf] %vm5947, %v5608
    %6122 = vst.msk [vmem:[#allocation2 + $0x2b8] sm:$0xf] %vm5947, %v5609
    %6123 = vst.msk [vmem:[#allocation2 + $0x2bc] sm:$0xf] %vm5947, %v5610
    %6124 = vst.msk [vmem:[#allocation2 + $0x2c0] sm:$0xf] %vm5947, %v5611
    %6125 = vst.msk [vmem:[#allocation2 + $0x2c4] sm:$0xf] %vm5947, %v5612
    %6126 = vst.msk [vmem:[#allocation2 + $0x2c8] sm:$0xf] %vm5947, %v5613
    %6127 = vst.msk [vmem:[#allocation2 + $0x2cc] sm:$0xf] %vm5947, %v5614
    %6128 = vst.msk [vmem:[#allocation2 + $0x2d0] sm:$0xf] %vm5947, %v5615
    %6129 = vst.msk [vmem:[#allocation2 + $0x2d4] sm:$0xf] %vm5947, %v5616
    %6130 = vst.msk [vmem:[#allocation2 + $0x2d8] sm:$0xf] %vm5947, %v5617
    %6131 = vst.msk [vmem:[#allocation2 + $0x2dc] sm:$0xf] %vm5947, %v5618
    %6132 = vst.msk [vmem:[#allocation2 + $0x2e0] sm:$0xf] %vm5947, %v5619
    %6133 = vst.msk [vmem:[#allocation2 + $0x2e4] sm:$0xf] %vm5947, %v5620
    %6134 = vst.msk [vmem:[#allocation2 + $0x2e8] sm:$0xf] %vm5947, %v5621
    %6135 = vst.msk [vmem:[#allocation2 + $0x2ec] sm:$0xf] %vm5947, %v5622
    %6136 = vst.msk [vmem:[#allocation2 + $0x2f0] sm:$0xf] %vm5947, %v5623
    %6137 = vst.msk [vmem:[#allocation2 + $0x2f4] sm:$0xf] %vm5947, %v5624
    %6138 = vst.msk [vmem:[#allocation2 + $0x2f8] sm:$0xf] %vm5947, %v5625
    %6139 = vst.msk [vmem:[#allocation2 + $0x2fc] sm:$0xf] %vm5947, %v5626
    %6140 = vst.msk [vmem:[#allocation2 + $0x300] sm:$0xf] %vm5947, %v5627
    %6141 = vst.msk [vmem:[#allocation2 + $0x304] sm:$0xf] %vm5947, %v5628
    %6142 = vst.msk [vmem:[#allocation2 + $0x308] sm:$0xf] %vm5947, %v5629
    %6143 = vst.msk [vmem:[#allocation2 + $0x30c] sm:$0xf] %vm5947, %v5630
    %6144 = vst.msk [vmem:[#allocation2 + $0x310] sm:$0xf] %vm5947, %v5631
    %6145 = vst.msk [vmem:[#allocation2 + $0x314] sm:$0xf] %vm5947, %v5632
    %6146 = vst.msk [vmem:[#allocation2 + $0x318] sm:$0xf] %vm5947, %v5633
    %6147 = vst.msk [vmem:[#allocation2 + $0x31c] sm:$0xf] %vm5947, %v5634
    %6148 = vst.msk [vmem:[#allocation2 + $0x320] sm:$0xf] %vm5947, %v5635
    %6149 = vst.msk [vmem:[#allocation2 + $0x324] sm:$0xf] %vm5947, %v5636
    %6150 = vst.msk [vmem:[#allocation2 + $0x328] sm:$0xf] %vm5947, %v5637
    %6151 = vst.msk [vmem:[#allocation2 + $0x32c] sm:$0xf] %vm5947, %v5638
    %6152 = vst.msk [vmem:[#allocation2 + $0x330] sm:$0xf] %vm5947, %v5639
    %6153 = vst.msk [vmem:[#allocation2 + $0x334] sm:$0xf] %vm5947, %v5640
    %6154 = vst.msk [vmem:[#allocation2 + $0x338] sm:$0xf] %vm5947, %v5641
    %6155 = vst.msk [vmem:[#allocation2 + $0x33c] sm:$0xf] %vm5947, %v5642
    %6156 = vst.msk [vmem:[#allocation2 + $0x340] sm:$0xf] %vm5947, %v5643
    %6157 = vst.msk [vmem:[#allocation2 + $0x344] sm:$0xf] %vm5947, %v5644
    %6158 = vst.msk [vmem:[#allocation2 + $0x348] sm:$0xf] %vm5947, %v5645
    %6159 = vst.msk [vmem:[#allocation2 + $0x34c] sm:$0xf] %vm5947, %v5646
    %6160 = vst.msk [vmem:[#allocation2 + $0x350] sm:$0xf] %vm5947, %v5647
    %6161 = vst.msk [vmem:[#allocation2 + $0x354] sm:$0xf] %vm5947, %v5648
    %6162 = vst.msk [vmem:[#allocation2 + $0x358] sm:$0xf] %vm5947, %v5649
    %6163 = vst.msk [vmem:[#allocation2 + $0x35c] sm:$0xf] %vm5947, %v5650
    %6164 = vst.msk [vmem:[#allocation2 + $0x360] sm:$0xf] %vm5947, %v5651
    %6165 = vst.msk [vmem:[#allocation2 + $0x364] sm:$0xf] %vm5947, %v5652
    %6166 = vst.msk [vmem:[#allocation2 + $0x368] sm:$0xf] %vm5947, %v5653
    %6167 = vst.msk [vmem:[#allocation2 + $0x36c] sm:$0xf] %vm5947, %v5654
    %6168 = vst.msk [vmem:[#allocation2 + $0x370] sm:$0xf] %vm5947, %v5655
    %6169 = vst.msk [vmem:[#allocation2 + $0x374] sm:$0xf] %vm5947, %v5656
    %6170 = vst.msk [vmem:[#allocation2 + $0x378] sm:$0xf] %vm5947, %v5657
    %6171 = vst.msk [vmem:[#allocation2 + $0x37c] sm:$0xf] %vm5947, %v5658
    %6172 = vst.msk [vmem:[#allocation2 + $0x380] sm:$0xf] %vm5947, %v5659
    %6173 = vst.msk [vmem:[#allocation2 + $0x384] sm:$0xf] %vm5947, %v5660
    %6174 = vst.msk [vmem:[#allocation2 + $0x388] sm:$0xf] %vm5947, %v5661
    %6175 = vst.msk [vmem:[#allocation2 + $0x38c] sm:$0xf] %vm5947, %v5662
    %6176 = vst.msk [vmem:[#allocation2 + $0x390] sm:$0xf] %vm5947, %v5663
    %6177 = vst.msk [vmem:[#allocation2 + $0x394] sm:$0xf] %vm5947, %v5664
    %6178 = vst.msk [vmem:[#allocation2 + $0x398] sm:$0xf] %vm5947, %v5665
    %6179 = vst.msk [vmem:[#allocation2 + $0x39c] sm:$0xf] %vm5947, %v5666
    %6180 = vst.msk [vmem:[#allocation2 + $0x3a0] sm:$0xf] %vm5947, %v5667
    %6181 = vst.msk [vmem:[#allocation2 + $0x3a4] sm:$0xf] %vm5947, %v5668
    %6182 = vst.msk [vmem:[#allocation2 + $0x3a8] sm:$0xf] %vm5947, %v5669
    %6183 = vst.msk [vmem:[#allocation2 + $0x3ac] sm:$0xf] %vm5947, %v5670
    %6184 = vst.msk [vmem:[#allocation2 + $0x3b0] sm:$0xf] %vm5947, %v5671
    %6185 = vst.msk [vmem:[#allocation2 + $0x3b4] sm:$0xf] %vm5947, %v5672
    %6186 = vst.msk [vmem:[#allocation2 + $0x3b8] sm:$0xf] %vm5947, %v5673
    %6187 = vst.msk [vmem:[#allocation2 + $0x3bc] sm:$0xf] %vm5947, %v5674
    %6188 = vst.msk [vmem:[#allocation2 + $0x3c0] sm:$0xf] %vm5947, %v5675
    %6189 = vst.msk [vmem:[#allocation2 + $0x3c4] sm:$0xf] %vm5947, %v5676
    %6190 = vst.msk [vmem:[#allocation2 + $0x3c8] sm:$0xf] %vm5947, %v5677
    %6191 = vst.msk [vmem:[#allocation2 + $0x3cc] sm:$0xf] %vm5947, %v5678
    %6192 = vst.msk [vmem:[#allocation2 + $0x3d0] sm:$0xf] %vm5947, %v5679
    %6193 = vst.msk [vmem:[#allocation2 + $0x3d4] sm:$0xf] %vm5947, %v5680
    %6194 = vst.msk [vmem:[#allocation2 + $0x3d8] sm:$0xf] %vm5947, %v5681
    %6195 = vst.msk [vmem:[#allocation2 + $0x3dc] sm:$0xf] %vm5947, %v5682
    %6196 = vst.msk [vmem:[#allocation2 + $0x3e0] sm:$0xf] %vm5947, %v5683
    %6197 = vst.msk [vmem:[#allocation2 + $0x3e4] sm:$0xf] %vm5947, %v5684
    %6198 = vst.msk [vmem:[#allocation2 + $0x3e8] sm:$0xf] %vm5947, %v5685
    %6199 = vst.msk [vmem:[#allocation2 + $0x3ec] sm:$0xf] %vm5947, %v5686
    %6200 = vst.msk [vmem:[#allocation2 + $0x3f0] sm:$0xf] %vm5947, %v5687
    %6201 = vst.msk [vmem:[#allocation2 + $0x3f4] sm:$0xf] %vm5947, %v5688
    %6202 = vst.msk [vmem:[#allocation2 + $0x3f8] sm:$0xf] %vm5947, %v5689
    %6203 = vst.msk [vmem:[#allocation2 + $0x3fc] sm:$0xf] %vm5947, %v5690
    %6204 = vst.msk [vmem:[#allocation2 + $0x400] sm:$0xf] %vm5947, %v5691
    %6205 = vst.msk [vmem:[#allocation2 + $0x404] sm:$0xf] %vm5947, %v5692
    %6206 = vst.msk [vmem:[#allocation2 + $0x408] sm:$0xf] %vm5947, %v5693
    %6207 = vst.msk [vmem:[#allocation2 + $0x40c] sm:$0xf] %vm5947, %v5694
    %6208 = vst.msk [vmem:[#allocation2 + $0x410] sm:$0xf] %vm5947, %v5695
    %6209 = vst.msk [vmem:[#allocation2 + $0x414] sm:$0xf] %vm5947, %v5696
    %6210 = vst.msk [vmem:[#allocation2 + $0x418] sm:$0xf] %vm5947, %v5697
    %6211 = vst.msk [vmem:[#allocation2 + $0x41c] sm:$0xf] %vm5947, %v5698
    %6212 = vst.msk [vmem:[#allocation2 + $0x420] sm:$0xf] %vm5947, %v5699
    %6213 = vst.msk [vmem:[#allocation2 + $0x424] sm:$0xf] %vm5947, %v5700
    %6214 = vst.msk [vmem:[#allocation2 + $0x428] sm:$0xf] %vm5947, %v5701
    %6215 = vst.msk [vmem:[#allocation2 + $0x42c] sm:$0xf] %vm5947, %v5702
    %6216 = vst.msk [vmem:[#allocation2 + $0x430] sm:$0xf] %vm5947, %v5703
    %6217 = vst.msk [vmem:[#allocation2 + $0x434] sm:$0xf] %vm5947, %v5704
    %6218 = vst.msk [vmem:[#allocation2 + $0x438] sm:$0xf] %vm5947, %v5705
    %6219 = vst.msk [vmem:[#allocation2 + $0x43c] sm:$0xf] %vm5947, %v5706
    %6220 = vst.msk [vmem:[#allocation2 + $0x440] sm:$0xf] %vm5947, %v5707
    %6221 = vst.msk [vmem:[#allocation2 + $0x444] sm:$0xf] %vm5947, %v5708
    %6222 = vst.msk [vmem:[#allocation2 + $0x448] sm:$0xf] %vm5947, %v5709
    %6223 = vst.msk [vmem:[#allocation2 + $0x44c] sm:$0xf] %vm5947, %v5710
    %6224 = vst.msk [vmem:[#allocation2 + $0x450] sm:$0xf] %vm5947, %v5711
    %6225 = vst.msk [vmem:[#allocation2 + $0x454] sm:$0xf] %vm5947, %v5712
    %6226 = vst.msk [vmem:[#allocation2 + $0x458] sm:$0xf] %vm5947, %v5713
    %6227 = vst.msk [vmem:[#allocation2 + $0x45c] sm:$0xf] %vm5947, %v5714
    %6228 = vst.msk [vmem:[#allocation2 + $0x460] sm:$0xf] %vm5947, %v5715
    %6229 = vst.msk [vmem:[#allocation2 + $0x464] sm:$0xf] %vm5947, %v5716
    %6230 = vst.msk [vmem:[#allocation2 + $0x468] sm:$0xf] %vm5947, %v5717
    %6231 = vst.msk [vmem:[#allocation2 + $0x46c] sm:$0xf] %vm5947, %v5718
    %6232 = vst.msk [vmem:[#allocation2 + $0x470] sm:$0xf] %vm5947, %v5719
    %6233 = vst.msk [vmem:[#allocation2 + $0x474] sm:$0xf] %vm5947, %v5720
    %6234 = vst.msk [vmem:[#allocation2 + $0x478] sm:$0xf] %vm5947, %v5721
    %6235 = vst.msk [vmem:[#allocation2 + $0x47c] sm:$0xf] %vm5947, %v5722
    %6236 = vst.msk [vmem:[#allocation2 + $0x480] sm:$0xf] %vm5947, %v5723
    %6237 = vst.msk [vmem:[#allocation2 + $0x484] sm:$0xf] %vm5947, %v5724
    %6238 = vst.msk [vmem:[#allocation2 + $0x488] sm:$0xf] %vm5947, %v5725
    %6239 = vst.msk [vmem:[#allocation2 + $0x48c] sm:$0xf] %vm5947, %v5726
    %6240 = vst.msk [vmem:[#allocation2 + $0x490] sm:$0xf] %vm5947, %v5727
    %6241 = vst.msk [vmem:[#allocation2 + $0x494] sm:$0xf] %vm5947, %v5728
    %6242 = vst.msk [vmem:[#allocation2 + $0x498] sm:$0xf] %vm5947, %v5729
    %6243 = vst.msk [vmem:[#allocation2 + $0x49c] sm:$0xf] %vm5947, %v5730
    %6244 = vst.msk [vmem:[#allocation2 + $0x4a0] sm:$0xf] %vm5947, %v5731
    %6245 = vst.msk [vmem:[#allocation2 + $0x4a4] sm:$0xf] %vm5947, %v5732
    %6246 = vst.msk [vmem:[#allocation2 + $0x4a8] sm:$0xf] %vm5947, %v5733
    %6247 = vst.msk [vmem:[#allocation2 + $0x4ac] sm:$0xf] %vm5947, %v5734
    %6248 = vst.msk [vmem:[#allocation2 + $0x4b0] sm:$0xf] %vm5947, %v5735
    %6249 = vst.msk [vmem:[#allocation2 + $0x4b4] sm:$0xf] %vm5947, %v5736
    %6250 = vst.msk [vmem:[#allocation2 + $0x4b8] sm:$0xf] %vm5947, %v5737
    %6251 = vst.msk [vmem:[#allocation2 + $0x4bc] sm:$0xf] %vm5947, %v5738
    %6252 = vst.msk [vmem:[#allocation2 + $0x4c0] sm:$0xf] %vm5947, %v5739
    %6253 = vst.msk [vmem:[#allocation2 + $0x4c4] sm:$0xf] %vm5947, %v5740
    %6254 = vst.msk [vmem:[#allocation2 + $0x4c8] sm:$0xf] %vm5947, %v5741
    %6255 = vst.msk [vmem:[#allocation2 + $0x4cc] sm:$0xf] %vm5947, %v5742
    %6256 = vst.msk [vmem:[#allocation2 + $0x4d0] sm:$0xf] %vm5947, %v5743
    %6257 = vst.msk [vmem:[#allocation2 + $0x4d4] sm:$0xf] %vm5947, %v5744
    %6258 = vst.msk [vmem:[#allocation2 + $0x4d8] sm:$0xf] %vm5947, %v5745
    %6259 = vst.msk [vmem:[#allocation2 + $0x4dc] sm:$0xf] %vm5947, %v5746
    %6260 = vst.msk [vmem:[#allocation2 + $0x4e0] sm:$0xf] %vm5947, %v5747
    %6261 = vst.msk [vmem:[#allocation2 + $0x4e4] sm:$0xf] %vm5947, %v5748
    %6262 = vst.msk [vmem:[#allocation2 + $0x4e8] sm:$0xf] %vm5947, %v5749
    %6263 = vst.msk [vmem:[#allocation2 + $0x4ec] sm:$0xf] %vm5947, %v5750
    %6264 = vst.msk [vmem:[#allocation2 + $0x4f0] sm:$0xf] %vm5947, %v5751
    %6265 = vst.msk [vmem:[#allocation2 + $0x4f4] sm:$0xf] %vm5947, %v5752
    %6266 = vst.msk [vmem:[#allocation2 + $0x4f8] sm:$0xf] %vm5947, %v5753
    %6267 = vst.msk [vmem:[#allocation2 + $0x4fc] sm:$0xf] %vm5947, %v5754
    %6268 = vst.msk [vmem:[#allocation2 + $0x500] sm:$0xf] %vm5947, %v5755
    %6269 = vst.msk [vmem:[#allocation2 + $0x504] sm:$0xf] %vm5947, %v5756
    %6270 = vst.msk [vmem:[#allocation2 + $0x508] sm:$0xf] %vm5947, %v5757
    %6271 = vst.msk [vmem:[#allocation2 + $0x50c] sm:$0xf] %vm5947, %v5758
    %6272 = vst.msk [vmem:[#allocation2 + $0x510] sm:$0xf] %vm5947, %v5759
    %6273 = vst.msk [vmem:[#allocation2 + $0x514] sm:$0xf] %vm5947, %v5760
    %6274 = vst.msk [vmem:[#allocation2 + $0x518] sm:$0xf] %vm5947, %v5761
    %6275 = vst.msk [vmem:[#allocation2 + $0x51c] sm:$0xf] %vm5947, %v5762
    %6276 = vst.msk [vmem:[#allocation2 + $0x520] sm:$0xf] %vm5947, %v5763
    %6277 = vst.msk [vmem:[#allocation2 + $0x524] sm:$0xf] %vm5947, %v5764
    %6278 = vst.msk [vmem:[#allocation2 + $0x528] sm:$0xf] %vm5947, %v5765
    %6279 = vst.msk [vmem:[#allocation2 + $0x52c] sm:$0xf] %vm5947, %v5766
    %6280 = vst.msk [vmem:[#allocation2 + $0x530] sm:$0xf] %vm5947, %v5767
    %6281 = vst.msk [vmem:[#allocation2 + $0x534] sm:$0xf] %vm5947, %v5768
    %6282 = vst.msk [vmem:[#allocation2 + $0x538] sm:$0xf] %vm5947, %v5769
    %6283 = vst.msk [vmem:[#allocation2 + $0x53c] sm:$0xf] %vm5947, %v5770
    %6284 = vst.msk [vmem:[#allocation2 + $0x540] sm:$0xf] %vm5947, %v5771
    %6285 = vst.msk [vmem:[#allocation2 + $0x544] sm:$0xf] %vm5947, %v5772
    %6286 = vst.msk [vmem:[#allocation2 + $0x548] sm:$0xf] %vm5947, %v5773
    %6287 = vst.msk [vmem:[#allocation2 + $0x54c] sm:$0xf] %vm5947, %v5774
    %6288 = vst.msk [vmem:[#allocation2 + $0x550] sm:$0xf] %vm5947, %v5775
    %6289 = vst.msk [vmem:[#allocation2 + $0x554] sm:$0xf] %vm5947, %v5776
    %6290 = vst.msk [vmem:[#allocation2 + $0x558] sm:$0xf] %vm5947, %v5777
    %6291 = vst.msk [vmem:[#allocation2 + $0x55c] sm:$0xf] %vm5947, %v5778
    %6292 = vst.msk [vmem:[#allocation2 + $0x560] sm:$0xf] %vm5947, %v5779
    %6293 = vst.msk [vmem:[#allocation2 + $0x564] sm:$0xf] %vm5947, %v5780
    %6294 = vst.msk [vmem:[#allocation2 + $0x568] sm:$0xf] %vm5947, %v5781
    %6295 = vst.msk [vmem:[#allocation2 + $0x56c] sm:$0xf] %vm5947, %v5782
    %6296 = vst.msk [vmem:[#allocation2 + $0x570] sm:$0xf] %vm5947, %v5783
    %6297 = vst.msk [vmem:[#allocation2 + $0x574] sm:$0xf] %vm5947, %v5784
    %6298 = vst.msk [vmem:[#allocation2 + $0x578] sm:$0xf] %vm5947, %v5785
    %6299 = vst.msk [vmem:[#allocation2 + $0x57c] sm:$0xf] %vm5947, %v5786
    %6300 = vst.msk [vmem:[#allocation2 + $0x580] sm:$0xf] %vm5947, %v5787
    %6301 = vst.msk [vmem:[#allocation2 + $0x584] sm:$0xf] %vm5947, %v5788
    %6302 = vst.msk [vmem:[#allocation2 + $0x588] sm:$0xf] %vm5947, %v5789
    %6303 = vst.msk [vmem:[#allocation2 + $0x58c] sm:$0xf] %vm5947, %v5790
    %6304 = vst.msk [vmem:[#allocation2 + $0x590] sm:$0xf] %vm5947, %v5791
    %6305 = vst.msk [vmem:[#allocation2 + $0x594] sm:$0xf] %vm5947, %v5792
    %6306 = vst.msk [vmem:[#allocation2 + $0x598] sm:$0xf] %vm5947, %v5793
    %6307 = vst.msk [vmem:[#allocation2 + $0x59c] sm:$0xf] %vm5947, %v5794
    %6308 = vst.msk [vmem:[#allocation2 + $0x5a0] sm:$0xf] %vm5947, %v5795
    %6309 = vst.msk [vmem:[#allocation2 + $0x5a4] sm:$0xf] %vm5947, %v5796
    %6310 = vst.msk [vmem:[#allocation2 + $0x5a8] sm:$0xf] %vm5947, %v5797
    %6311 = vst.msk [vmem:[#allocation2 + $0x5ac] sm:$0xf] %vm5947, %v5798
    %6312 = vst.msk [vmem:[#allocation2 + $0x5b0] sm:$0xf] %vm5947, %v5799
    %6313 = vst.msk [vmem:[#allocation2 + $0x5b4] sm:$0xf] %vm5947, %v5800
    %6314 = vst.msk [vmem:[#allocation2 + $0x5b8] sm:$0xf] %vm5947, %v5801
    %6315 = vst.msk [vmem:[#allocation2 + $0x5bc] sm:$0xf] %vm5947, %v5802
    %6316 = vst.msk [vmem:[#allocation2 + $0x5c0] sm:$0xf] %vm5947, %v5803
    %6317 = vst.msk [vmem:[#allocation2 + $0x5c4] sm:$0xf] %vm5947, %v5804
    %6318 = vst.msk [vmem:[#allocation2 + $0x5c8] sm:$0xf] %vm5947, %v5805
    %6319 = vst.msk [vmem:[#allocation2 + $0x5cc] sm:$0xf] %vm5947, %v5806
    %6320 = vst.msk [vmem:[#allocation2 + $0x5d0] sm:$0xf] %vm5947, %v5807
    %6321 = vst.msk [vmem:[#allocation2 + $0x5d4] sm:$0xf] %vm5947, %v5808
    %6322 = vst.msk [vmem:[#allocation2 + $0x5d8] sm:$0xf] %vm5947, %v5809
    %6323 = vst.msk [vmem:[#allocation2 + $0x5dc] sm:$0xf] %vm5947, %v5810
    %6324 = vst.msk [vmem:[#allocation2 + $0x5e0] sm:$0xf] %vm5947, %v5811
    %6325 = vst.msk [vmem:[#allocation2 + $0x5e4] sm:$0xf] %vm5947, %v5812
    %6326 = vst.msk [vmem:[#allocation2 + $0x5e8] sm:$0xf] %vm5947, %v5813
    %6327 = vst.msk [vmem:[#allocation2 + $0x5ec] sm:$0xf] %vm5947, %v5814
    %6328 = vst.msk [vmem:[#allocation2 + $0x5f0] sm:$0xf] %vm5947, %v5815
    %6329 = vst.msk [vmem:[#allocation2 + $0x5f4] sm:$0xf] %vm5947, %v5816
    %6330 = vst.msk [vmem:[#allocation2 + $0x5f8] sm:$0xf] %vm5947, %v5817
    %6331 = vst.msk [vmem:[#allocation2 + $0x5fc] sm:$0xf] %vm5947, %v5818
    %6332 = vst.msk [vmem:[#allocation2 + $0x600] sm:$0xf] %vm5947, %v5819
    %6333 = vst.msk [vmem:[#allocation2 + $0x604] sm:$0xf] %vm5947, %v5820
    %6334 = vst.msk [vmem:[#allocation2 + $0x608] sm:$0xf] %vm5947, %v5821
    %6335 = vst.msk [vmem:[#allocation2 + $0x60c] sm:$0xf] %vm5947, %v5822
    %6336 = vst.msk [vmem:[#allocation2 + $0x610] sm:$0xf] %vm5947, %v5823
    %6337 = vst.msk [vmem:[#allocation2 + $0x614] sm:$0xf] %vm5947, %v5824
    %6338 = vst.msk [vmem:[#allocation2 + $0x618] sm:$0xf] %vm5947, %v5825
    %6339 = vst.msk [vmem:[#allocation2 + $0x61c] sm:$0xf] %vm5947, %v5826
    %6340 = vst.msk [vmem:[#allocation2 + $0x620] sm:$0xf] %vm5947, %v5827
    %6341 = vst.msk [vmem:[#allocation2 + $0x624] sm:$0xf] %vm5947, %v5828
    %6342 = vst.msk [vmem:[#allocation2 + $0x628] sm:$0xf] %vm5947, %v5829
    %6343 = vst.msk [vmem:[#allocation2 + $0x62c] sm:$0xf] %vm5947, %v5830
    %6344 = vst.msk [vmem:[#allocation2 + $0x630] sm:$0xf] %vm5947, %v5831
    %6345 = vst.msk [vmem:[#allocation2 + $0x634] sm:$0xf] %vm5947, %v5832
    %6346 = vst.msk [vmem:[#allocation2 + $0x638] sm:$0xf] %vm5947, %v5833
    %6347 = vst.msk [vmem:[#allocation2 + $0x63c] sm:$0xf] %vm5947, %v5834
    %6348 = vst.msk [vmem:[#allocation2 + $0x640] sm:$0xf] %vm5947, %v5835
    %6349 = vst.msk [vmem:[#allocation2 + $0x644] sm:$0xf] %vm5947, %v5836
    %6350 = vst.msk [vmem:[#allocation2 + $0x648] sm:$0xf] %vm5947, %v5837
    %6351 = vst.msk [vmem:[#allocation2 + $0x64c] sm:$0xf] %vm5947, %v5838
    %6352 = vst.msk [vmem:[#allocation2 + $0x650] sm:$0xf] %vm5947, %v5839
    %6353 = vst.msk [vmem:[#allocation2 + $0x654] sm:$0xf] %vm5947, %v5840
    %6354 = vst.msk [vmem:[#allocation2 + $0x658] sm:$0xf] %vm5947, %v5841
    %6355 = vst.msk [vmem:[#allocation2 + $0x65c] sm:$0xf] %vm5947, %v5842
    %6356 = vst.msk [vmem:[#allocation2 + $0x660] sm:$0xf] %vm5947, %v5843
    %6357 = vst.msk [vmem:[#allocation2 + $0x664] sm:$0xf] %vm5947, %v5844
    %6358 = vst.msk [vmem:[#allocation2 + $0x668] sm:$0xf] %vm5947, %v5845
    %6359 = vst.msk [vmem:[#allocation2 + $0x66c] sm:$0xf] %vm5947, %v5846
    %6360 = vst.msk [vmem:[#allocation2 + $0x670] sm:$0xf] %vm5947, %v5847
    %6361 = vst.msk [vmem:[#allocation2 + $0x674] sm:$0xf] %vm5947, %v5848
    %6362 = vst.msk [vmem:[#allocation2 + $0x678] sm:$0xf] %vm5947, %v5849
    %6363 = vst.msk [vmem:[#allocation2 + $0x67c] sm:$0xf] %vm5947, %v5850
    %6364 = vst.msk [vmem:[#allocation2 + $0x680] sm:$0xf] %vm5947, %v5851
    %6365 = vst.msk [vmem:[#allocation2 + $0x684] sm:$0xf] %vm5947, %v5852
    %6366 = vst.msk [vmem:[#allocation2 + $0x688] sm:$0xf] %vm5947, %v5853
    %6367 = vst.msk [vmem:[#allocation2 + $0x68c] sm:$0xf] %vm5947, %v5854
    %6368 = vst.msk [vmem:[#allocation2 + $0x690] sm:$0xf] %vm5947, %v5855
    %6369 = vst.msk [vmem:[#allocation2 + $0x694] sm:$0xf] %vm5947, %v5856
    %6370 = vst.msk [vmem:[#allocation2 + $0x698] sm:$0xf] %vm5947, %v5857
    %6371 = vst.msk [vmem:[#allocation2 + $0x69c] sm:$0xf] %vm5947, %v5858
    %6372 = vst.msk [vmem:[#allocation2 + $0x6a0] sm:$0xf] %vm5947, %v5859
    %6373 = vst.msk [vmem:[#allocation2 + $0x6a4] sm:$0xf] %vm5947, %v5860
    %6374 = vst.msk [vmem:[#allocation2 + $0x6a8] sm:$0xf] %vm5947, %v5861
    %6375 = vst.msk [vmem:[#allocation2 + $0x6ac] sm:$0xf] %vm5947, %v5862
    %6376 = vst.msk [vmem:[#allocation2 + $0x6b0] sm:$0xf] %vm5947, %v5863
    %6377 = vst.msk [vmem:[#allocation2 + $0x6b4] sm:$0xf] %vm5947, %v5864
    %6378 = vst.msk [vmem:[#allocation2 + $0x6b8] sm:$0xf] %vm5947, %v5865
    %6379 = vst.msk [vmem:[#allocation2 + $0x6bc] sm:$0xf] %vm5947, %v5866
    %6380 = vst.msk [vmem:[#allocation2 + $0x6c0] sm:$0xf] %vm5947, %v5867
    %6381 = vst.msk [vmem:[#allocation2 + $0x6c4] sm:$0xf] %vm5947, %v5868
    %6382 = vst.msk [vmem:[#allocation2 + $0x6c8] sm:$0xf] %vm5947, %v5869
    %6383 = vst.msk [vmem:[#allocation2 + $0x6cc] sm:$0xf] %vm5947, %v5870
    %6384 = vst.msk [vmem:[#allocation2 + $0x6d0] sm:$0xf] %vm5947, %v5871
    %6385 = vst.msk [vmem:[#allocation2 + $0x6d4] sm:$0xf] %vm5947, %v5872
    %6386 = vst.msk [vmem:[#allocation2 + $0x6d8] sm:$0xf] %vm5947, %v5873
    %6387 = vst.msk [vmem:[#allocation2 + $0x6dc] sm:$0xf] %vm5947, %v5874
    %6388 = vst.msk [vmem:[#allocation2 + $0x6e0] sm:$0xf] %vm5947, %v5875
    %6389 = vst.msk [vmem:[#allocation2 + $0x6e4] sm:$0xf] %vm5947, %v5876
    %6390 = vst.msk [vmem:[#allocation2 + $0x6e8] sm:$0xf] %vm5947, %v5877
    %6391 = vst.msk [vmem:[#allocation2 + $0x6ec] sm:$0xf] %vm5947, %v5878
    %6392 = vst.msk [vmem:[#allocation2 + $0x6f0] sm:$0xf] %vm5947, %v5879
    %6393 = vst.msk [vmem:[#allocation2 + $0x6f4] sm:$0xf] %vm5947, %v5880
    %6394 = vst.msk [vmem:[#allocation2 + $0x6f8] sm:$0xf] %vm5947, %v5881
    %6395 = vst.msk [vmem:[#allocation2 + $0x6fc] sm:$0xf] %vm5947, %v5882
    %6396 = vst.msk [vmem:[#allocation2 + $0x700] sm:$0xf] %vm5947, %v5883
    %6397 = vst.msk [vmem:[#allocation2 + $0x704] sm:$0xf] %vm5947, %v5884
    %6398 = vst.msk [vmem:[#allocation2 + $0x708] sm:$0xf] %vm5947, %v5885
    %6399 = vst.msk [vmem:[#allocation2 + $0x70c] sm:$0xf] %vm5947, %v5886
    %6400 = vst.msk [vmem:[#allocation2 + $0x710] sm:$0xf] %vm5947, %v5887
    %6401 = vst.msk [vmem:[#allocation2 + $0x714] sm:$0xf] %vm5947, %v5888
    %6402 = vst.msk [vmem:[#allocation2 + $0x718] sm:$0xf] %vm5947, %v5889
    %6403 = vst.msk [vmem:[#allocation2 + $0x71c] sm:$0xf] %vm5947, %v5890
    %6404 = vst.msk [vmem:[#allocation2 + $0x720] sm:$0xf] %vm5947, %v5891
    %6405 = vst.msk [vmem:[#allocation2 + $0x724] sm:$0xf] %vm5947, %v5892
    %6406 = vst.msk [vmem:[#allocation2 + $0x728] sm:$0xf] %vm5947, %v5893
    %6407 = vst.msk [vmem:[#allocation2 + $0x72c] sm:$0xf] %vm5947, %v5894
    %6408 = vst.msk [vmem:[#allocation2 + $0x730] sm:$0xf] %vm5947, %v5895
    %6409 = vst.msk [vmem:[#allocation2 + $0x734] sm:$0xf] %vm5947, %v5896
    %6410 = vst.msk [vmem:[#allocation2 + $0x738] sm:$0xf] %vm5947, %v5897
    %6411 = vst.msk [vmem:[#allocation2 + $0x73c] sm:$0xf] %vm5947, %v5898
    %6412 = vst.msk [vmem:[#allocation2 + $0x740] sm:$0xf] %vm5947, %v5899
    %6413 = vst.msk [vmem:[#allocation2 + $0x744] sm:$0xf] %vm5947, %v5900
    %6414 = vst.msk [vmem:[#allocation2 + $0x748] sm:$0xf] %vm5947, %v5901
    %6415 = vst.msk [vmem:[#allocation2 + $0x74c] sm:$0xf] %vm5947, %v5902
    %6416 = vst.msk [vmem:[#allocation2 + $0x750] sm:$0xf] %vm5947, %v5903
    %6417 = vst.msk [vmem:[#allocation2 + $0x754] sm:$0xf] %vm5947, %v5904
    %6418 = vst.msk [vmem:[#allocation2 + $0x758] sm:$0xf] %vm5947, %v5905
    %6419 = vst.msk [vmem:[#allocation2 + $0x75c] sm:$0xf] %vm5947, %v5906
    %6420 = vst.msk [vmem:[#allocation2 + $0x760] sm:$0xf] %vm5947, %v5907
    %6421 = vst.msk [vmem:[#allocation2 + $0x764] sm:$0xf] %vm5947, %v5908
    %6422 = vst.msk [vmem:[#allocation2 + $0x768] sm:$0xf] %vm5947, %v5909
    %6423 = vst.msk [vmem:[#allocation2 + $0x76c] sm:$0xf] %vm5947, %v5910
    %6424 = vst.msk [vmem:[#allocation2 + $0x770] sm:$0xf] %vm5947, %v5911
    %6425 = vst.msk [vmem:[#allocation2 + $0x774] sm:$0xf] %vm5947, %v5912
    %6426 = vst.msk [vmem:[#allocation2 + $0x778] sm:$0xf] %vm5947, %v5913
    %6427 = vst.msk [vmem:[#allocation2 + $0x77c] sm:$0xf] %vm5947, %v5914
    %6428 = vst.msk [vmem:[#allocation2 + $0x780] sm:$0xf] %vm5947, %v5915
    %6429 = vst.msk [vmem:[#allocation2 + $0x784] sm:$0xf] %vm5947, %v5916
    %6430 = vst.msk [vmem:[#allocation2 + $0x788] sm:$0xf] %vm5947, %v5917
    %6431 = vst.msk [vmem:[#allocation2 + $0x78c] sm:$0xf] %vm5947, %v5918
    %6432 = vst.msk [vmem:[#allocation2 + $0x790] sm:$0xf] %vm5947, %v5919
    %6433 = vst.msk [vmem:[#allocation2 + $0x794] sm:$0xf] %vm5947, %v5920
    %6434 = vst.msk [vmem:[#allocation2 + $0x798] sm:$0xf] %vm5947, %v5921
    %6435 = vst.msk [vmem:[#allocation2 + $0x79c] sm:$0xf] %vm5947, %v5922
    %6436 = vst.msk [vmem:[#allocation2 + $0x7a0] sm:$0xf] %vm5947, %v5923
    %6437 = vst.msk [vmem:[#allocation2 + $0x7a4] sm:$0xf] %vm5947, %v5924
    %6438 = vst.msk [vmem:[#allocation2 + $0x7a8] sm:$0xf] %vm5947, %v5925
    %6439 = vst.msk [vmem:[#allocation2 + $0x7ac] sm:$0xf] %vm5947, %v5926
    %6440 = vst.msk [vmem:[#allocation2 + $0x7b0] sm:$0xf] %vm5947, %v5927
    %6441 = vst.msk [vmem:[#allocation2 + $0x7b4] sm:$0xf] %vm5947, %v5928
    %6442 = vst.msk [vmem:[#allocation2 + $0x7b8] sm:$0xf] %vm5947, %v5929
    %6443 = vst.msk [vmem:[#allocation2 + $0x7bc] sm:$0xf] %vm5947, %v5930
    %6444 = vst.msk [vmem:[#allocation2 + $0x7c0] sm:$0xf] %vm5947, %v5931
    %6445 = vst.msk [vmem:[#allocation2 + $0x7c4] sm:$0xf] %vm5947, %v5932
    %6446 = vst.msk [vmem:[#allocation2 + $0x7c8] sm:$0xf] %vm5947, %v5933
    %6447 = vst.msk [vmem:[#allocation2 + $0x7cc] sm:$0xf] %vm5947, %v5934
    %6448 = vst.msk [vmem:[#allocation2 + $0x7d0] sm:$0xf] %vm5947, %v5935
    %6449 = vst.msk [vmem:[#allocation2 + $0x7d4] sm:$0xf] %vm5947, %v5936
    %6450 = vst.msk [vmem:[#allocation2 + $0x7d8] sm:$0xf] %vm5947, %v5937
    %6451 = vst.msk [vmem:[#allocation2 + $0x7dc] sm:$0xf] %vm5947, %v5938
    %6452 = vst.msk [vmem:[#allocation2 + $0x7e0] sm:$0xf] %vm5947, %v5939
    %6453 = vst.msk [vmem:[#allocation2 + $0x7e4] sm:$0xf] %vm5947, %v5940
    %6454 = vst.msk [vmem:[#allocation2 + $0x7e8] sm:$0xf] %vm5947, %v5941
    %6455 = vst.msk [vmem:[#allocation2 + $0x7ec] sm:$0xf] %vm5947, %v5942
    %6456 = vst.msk [vmem:[#allocation2 + $0x7f0] sm:$0xf] %vm5947, %v5943
    %6457 = vst.msk [vmem:[#allocation2 + $0x7f4] sm:$0xf] %vm5947, %v5944
    %6458 = vst.msk [vmem:[#allocation2 + $0x7f8] sm:$0xf] %vm5947, %v5945
    %6459 = vst.msk [vmem:[#allocation2 + $0x7fc] sm:$0xf] %vm5947, %v5946
    // Predicated region
    $region18: #{tpu_custom_call.1} parent=1 // pred_check
      _
    $region19: #{tpu_custom_call.1} parent=1 // pred_check_branch
      %6461 = sbr.rel (0) target = $region21
    $region20: #{tpu_custom_call.1} parent=1 // pred_region
      %6463 = vsyncadd [#allocation3], 0
      %s6464 = sshll.u32 [#allocation2], 4
      %s6465 = int_to_ptr.vmem [resolvable:$true] %s6464
      %s6466 = sshll.u32 %s4, 4
      %s6467 = int_to_ptr.hbm [resolvable:$true] %s6466
      %6472 = dma.vmem_to_hbm [thread:$0]  %s6465, 32768, %s6467, [#allocation3], 64, 64, 4
    $region21: #{tpu_custom_call.1} parent=1 // pred_fallthru
      _
    // Predicated region
    $region22: #{tpu_custom_call.1} parent=1 // pred_check
      _
    $region23: #{tpu_custom_call.1} parent=1 // pred_check_branch
      %6474 = sbr.rel (0) target = $region25
    $region24: #{tpu_custom_call.1} parent=1 // pred_region
      %6476 = dma.done [#allocation3], 32768
    $region25: #{tpu_custom_call.1} parent=1 // pred_fallthru
      _
    %6477 = vsyncpa [#allocation3], 1

</llo_original>
